<compile_context>
chip_gen: v7x
topology: tpu7x:2x2x1
jax: 0.10.0
libtpu: 0.0.40
codegen_flags: <defaults>
</compile_context>

<pallas_src>
import functools

import numpy as np
import jax
import jax.numpy as jnp
from jax import lax
from jax.experimental import pallas as pl
from jax.experimental.pallas import tpu as pltpu


# conv hyper-parameters of the assumed submodules
K1_V, S1_V = 5, 2   # visual conv1
K2_V, S2_V = 3, 2   # visual conv2
K1_T, S1_T = 3, 1   # tactile conv1


def _derived_dims(cfg):
    d1 = (cfg["v_dim"] - K1_V) // S1_V + 1
    h1 = (cfg["img_xv"] - K1_V) // S1_V + 1
    w1 = (cfg["img_yv"] - K1_V) // S1_V + 1
    d2 = (d1 - K2_V) // S2_V + 1
    h2 = (h1 - K2_V) // S2_V + 1
    w2 = (w1 - K2_V) // S2_V + 1
    td = (cfg["t_dim"] - K1_T) // S1_T + 1
    th = (cfg["img_xt"] - K1_T) // S1_T + 1
    tw = (cfg["img_yt"] - K1_T) // S1_T + 1
    return dict(d1=d1, h1=h1, w1=w1, d2=d2, h2=h2, w2=w2, td=td, th=th, tw=tw,
                n_pos_v=d2 * h2 * w2, n_pos_t=td * th * tw)


# ----------------------------- single fused Pallas kernel -----------------------------

def _c3d_fused_kernel(a1v_ref, a1t_ref, w1v_ref, sh1v_ref, sel2_ref, w2v_ref,
                      sh2v_ref, wfcv_ref, bfcv_ref, w1t_ref, sh1t_ref,
                      wfct_ref, bfct_ref, wa_ref, wb_ref, b1_ref, w2f_ref,
                      b2f_ref, o_ref, *, batch, c1v, c2v, c1t, taps2, npv, npt):
    f32 = jnp.float32

    # ---- visual conv1 + BN + ReLU (BN scale pre-folded into w1v columns) ----
    y1v = jnp.maximum(
        jnp.dot(a1v_ref[...], w1v_ref[...], preferred_element_type=f32) + sh1v_ref[...],
        0.0)                                                    # (B*d1*h1*w1, c1v)

    # ---- visual conv2 + BN + ReLU ----
    # im2col done in VMEM with a constant one-hot row-selection matmul, then an
    # unrolled per-tap accumulation on the MXU (no gathers, no strided slices).
    a2 = jnp.dot(sel2_ref[...], y1v, preferred_element_type=f32)  # (taps2*npv*B, c1v)
    grp = npv * batch
    acc2 = jnp.zeros((grp, c2v), f32)
    for t in range(taps2):
        acc2 = acc2 + jnp.dot(a2[t * grp:(t + 1) * grp, :],
                              w2v_ref[t * c1v:(t + 1) * c1v, :],
                              preferred_element_type=f32)
    y2v = jnp.maximum(acc2 + sh2v_ref[...], 0.0)                  # (npv*B, c2v), rows (pos, b)

    # ---- visual FC + ReLU (flatten folded into per-position weight blocks) ----
    hv = wfcv_ref.shape[1]
    xv = jnp.zeros((batch, hv), f32)
    for m in range(npv):
        xv = xv + jnp.dot(y2v[m * batch:(m + 1) * batch, :],
                          wfcv_ref[m * c2v:(m + 1) * c2v, :],
                          preferred_element_type=f32)
    xv = jnp.maximum(xv + bfcv_ref[...], 0.0)                     # (B, fc_hidden_v)

    # ---- tactile conv1 + BN + ReLU ----
    y1t = jnp.maximum(
        jnp.dot(a1t_ref[...], w1t_ref[...], preferred_element_type=f32) + sh1t_ref[...],
        0.0)                                                      # (npt*B, c1t), rows (pos, b)

    # ---- tactile FC + ReLU ----
    ht = wfct_ref.shape[1]
    xt = jnp.zeros((batch, ht), f32)
    for m in range(npt):
        xt = xt + jnp.dot(y1t[m * batch:(m + 1) * batch, :],
                          wfct_ref[m * c1t:(m + 1) * c1t, :],
                          preferred_element_type=f32)
    xt = jnp.maximum(xt + bfct_ref[...], 0.0)                     # (B, fc_hidden_t)

    # ---- fusion head (concat folded into split fc1 weights; dropout = identity in eval) ----
    h = jnp.maximum(
        jnp.dot(xv, wa_ref[...], preferred_element_type=f32)
        + jnp.dot(xt, wb_ref[...], preferred_element_type=f32)
        + b1_ref[...], 0.0)
    o_ref[...] = (jnp.dot(h, w2f_ref[...], preferred_element_type=f32)
                  + b2f_ref[...]).astype(o_ref.dtype)


# ----------------------------- one-time parameter packing -----------------------------

def _build_sel2(batch, dd):
    """One-hot (taps * npos_v * B, B*d1*h1*w1) row-selection matrix for conv2's in-kernel im2col."""
    d1, h1, w1 = dd["d1"], dd["h1"], dd["w1"]
    d2, h2, w2 = dd["d2"], dd["h2"], dd["w2"]
    npos = d2 * h2 * w2
    m1 = batch * d1 * h1 * w1
    sel = np.zeros((K2_V ** 3 * npos * batch, m1), np.float32)
    t = 0
    for dz in range(K2_V):
        for dy in range(K2_V):
            for dx in range(K2_V):
                for pos in range(npos):
                    od, rem = divmod(pos, h2 * w2)
                    oh, ow = divmod(rem, w2)
                    for b in range(batch):
                        row = t * (npos * batch) + pos * batch + b
                        src = ((b * d1 + od * S2_V + dz) * h1 + oh * S2_V + dy) * w1 \
                              + ow * S2_V + dx
                        sel[row, src] = 1.0
                t += 1
    return jnp.asarray(sel)


def pack_params(p, cfg, batch):
    """Fold eval-mode BN into weights, pre-transpose everything to GEMM-ready (K, N) layout."""
    dd = _derived_dims(cfg)
    c1v, c2v, c1t = cfg["ch1_v"], cfg["ch2_v"], cfg["ch1_t"]
    hv, ht, h1 = cfg["fc_hidden_v"], cfg["fc_hidden_t"], cfg["fc_hidden_1"]
    npv, npt = dd["n_pos_v"], dd["n_pos_t"]

    def bn_fold(bn, bias):
        g, be, m, v, eps = bn
        s = g / jnp.sqrt(v + eps)
        return s, (bias - m) * s + be

    s1, shift1 = bn_fold(p["v_bn1"], p["v_conv1_b"])
    s2, shift2 = bn_fold(p["v_bn2"], p["v_conv2_b"])
    st, shiftt = bn_fold(p["t_bn1"], p["t_conv1_b"])

    ops = {}
    # visual conv1: (c1v,1,5,5,5) -> (125, c1v), BN scale folded into columns
    ops["w1v"] = p["v_conv1_w"].reshape(c1v, -1).T * s1[None, :]
    ops["sh1v"] = shift1.reshape(1, c1v)
    # visual conv2: (c2v,c1v,3,3,3) -> (27*c1v, c2v), row = tap*c1v + c_in
    ops["w2v"] = (jnp.transpose(p["v_conv2_w"], (2, 3, 4, 1, 0))
                  .reshape(K2_V ** 3 * c1v, c2v) * s2[None, :])
    ops["sh2v"] = shift2.reshape(1, c2v)
    # visual FC: (hv, c2v*npv) -> (npv*c2v, hv), row = pos*c2v + c
    ops["wfcv"] = jnp.transpose(p["v_fc1_w"].reshape(hv, c2v, npv), (2, 1, 0)).reshape(npv * c2v, hv)
    ops["bfcv"] = p["v_fc1_b"].reshape(1, hv)
    # tactile conv1: (c1t,1,3,3,3) -> (27, c1t)
    ops["w1t"] = p["t_conv1_w"].reshape(c1t, -1).T * st[None, :]
    ops["sh1t"] = shiftt.reshape(1, c1t)
    # tactile FC: (ht, c1t*npt) -> (npt*c1t, ht), row = pos*c1t + c
    ops["wfct"] = jnp.transpose(p["t_fc1_w"].reshape(ht, c1t, npt), (2, 1, 0)).reshape(npt * c1t, ht)
    ops["bfct"] = p["t_fc1_b"].reshape(1, ht)
    # fusion head: concat folded into split fc1 weight blocks
    ops["wa"] = p["fc1_w"][:, :hv].T
    ops["wb"] = p["fc1_w"][:, hv:].T
    ops["b1"] = p["fc1_b"].reshape(1, h1)
    ops["w2f"] = p["fc2_w"].T
    ops["b2f"] = p["fc2_b"].reshape(1, cfg["num_classes"])
    # conv2 in-kernel im2col selection matrix
    ops["sel2"] = _build_sel2(batch, dd)
    return ops


# ----------------------------- forward (eval mode), single pallas_call -----------------------------

def c3d_forward(cfg, ops, x_v, x_t):
    dd = _derived_dims(cfg)
    B = x_v.shape[0]

    # First-layer im2col: one fused XLA patches op per HBM input.
    # Feature ordering (C_in=1) is flat (dz,dy,dx), matching the packed conv weights.
    pv = lax.conv_general_dilated_patches(
        x_v, (K1_V,) * 3, (S1_V,) * 3, "VALID",
        dimension_numbers=("NCDHW", "OIDHW", "NDHWC"),
        precision=lax.Precision.HIGHEST)                       # (B, d1, h1, w1, 125)
    a1v = pv.reshape(B * dd["d1"] * dd["h1"] * dd["w1"], K1_V ** 3)   # rows (b, pos)

    pt = lax.conv_general_dilated_patches(
        x_t, (K1_T,) * 3, (S1_T,) * 3, "VALID",
        dimension_numbers=("NCDHW", "OIDHW", "NDHWC"),
        precision=lax.Precision.HIGHEST)                       # (B, td, th, tw, 27)
    a1t = jnp.moveaxis(pt, 0, 3).reshape(dd["n_pos_t"] * B, K1_T ** 3)  # rows (pos, b)

    operands = (a1v, a1t, ops["w1v"], ops["sh1v"], ops["sel2"], ops["w2v"], ops["sh2v"],
                ops["wfcv"], ops["bfcv"], ops["w1t"], ops["sh1t"], ops["wfct"], ops["bfct"],
                ops["wa"], ops["wb"], ops["b1"], ops["w2f"], ops["b2f"])

    nc = cfg["num_classes"]
    kern = functools.partial(
        _c3d_fused_kernel, batch=B, c1v=cfg["ch1_v"], c2v=cfg["ch2_v"], c1t=cfg["ch1_t"],
        taps2=K2_V ** 3, npv=dd["n_pos_v"], npt=dd["n_pos_t"])

    return pl.pallas_call(
        kern,
        out_shape=jax.ShapeDtypeStruct((B, nc), jnp.float32),
        grid=(1,),
        in_specs=[pl.BlockSpec(op.shape, lambda i: (0, 0)) for op in operands],
        out_specs=pl.BlockSpec((B, nc), lambda i: (0, 0)),
        compiler_params=pltpu.CompilerParams(dimension_semantics=("arbitrary",)),
    )(*operands)


# ----------------------------- pure-XLA ground-truth reference -----------------------------

def c3d_forward_ref(p, x_v, x_t):
    def conv_bn_relu(x, w, b, bn, s):
        y = lax.conv_general_dilated(
            x, w, (s, s, s), "VALID",
            dimension_numbers=("NCDHW", "OIDHW", "NCDHW"),
            precision=lax.Precision.HIGHEST)
        g, be, m, v, eps = bn
        sc = g / jnp.sqrt(v + eps)
        y = y * sc.reshape(1, -1, 1, 1, 1) + ((b - m) * sc + be).reshape(1, -1, 1, 1, 1)
        return jnp.maximum(y, 0.0)

    B = x_v.shape[0]
    xv = conv_bn_relu(x_v, p["v_conv1_w"], p["v_conv1_b"], p["v_bn1"], S1_V)
    xv = conv_bn_relu(xv, p["v_conv2_w"], p["v_conv2_b"], p["v_bn2"], S2_V)
    xv = jnp.maximum(xv.reshape(B, -1) @ p["v_fc1_w"].T + p["v_fc1_b"], 0.0)
    xt = conv_bn_relu(x_t, p["t_conv1_w"], p["t_conv1_b"], p["t_bn1"], S1_T)
    xt = jnp.maximum(xt.reshape(B, -1) @ p["t_fc1_w"].T + p["t_fc1_b"], 0.0)
    x = jnp.concatenate([xv, xt], axis=-1)
    x = jnp.maximum(x @ p["fc1_w"].T + p["fc1_b"], 0.0)
    return x @ p["fc2_w"].T + p["fc2_b"]


# ----------------------------- deterministic parameter init (PyTorch layout) -----------------------------

def _w(key, shape, scale=0.05):
    return scale * jax.random.normal(key, shape, dtype=jnp.float32)


def _bn_params(key, c):
    k1, k2 = jax.random.split(key)
    gamma = 1.0 + 0.1 * jax.random.normal(k1, (c,), dtype=jnp.float32)
    beta = 0.1 * jax.random.normal(k2, (c,), dtype=jnp.float32)
    return (gamma, beta, jnp.zeros((c,), jnp.float32), jnp.ones((c,), jnp.float32), 1e-5)


def init_c3d_params(key, cfg):
    dd = _derived_dims(cfg)
    keys = jax.random.split(key, 16)
    p = {}
    p["v_conv1_w"] = _w(keys[0], (cfg["ch1_v"], 1, K1_V, K1_V, K1_V))
    p["v_conv1_b"] = _w(keys[1], (cfg["ch1_v"],))
    p["v_bn1"] = _bn_params(keys[2], cfg["ch1_v"])
    p["v_conv2_w"] = _w(keys[3], (cfg["ch2_v"], cfg["ch1_v"], K2_V, K2_V, K2_V))
    p["v_conv2_b"] = _w(keys[4], (cfg["ch2_v"],))
    p["v_bn2"] = _bn_params(keys[5], cfg["ch2_v"])
    v_flat = cfg["ch2_v"] * dd["n_pos_v"]
    p["v_fc1_w"] = _w(keys[6], (cfg["fc_hidden_v"], v_flat))
    p["v_fc1_b"] = _w(keys[7], (cfg["fc_hidden_v"],))
    p["t_conv1_w"] = _w(keys[8], (cfg["ch1_t"], 1, K1_T, K1_T, K1_T))
    p["t_conv1_b"] = _w(keys[9], (cfg["ch1_t"],))
    p["t_bn1"] = _bn_params(keys[10], cfg["ch1_t"])
    t_flat = cfg["ch1_t"] * dd["n_pos_t"]
    p["t_fc1_w"] = _w(keys[11], (cfg["fc_hidden_t"], t_flat))
    p["t_fc1_b"] = _w(keys[12], (cfg["fc_hidden_t"],))
    p["fc1_w"] = _w(keys[13], (cfg["fc_hidden_1"], cfg["fc_hidden_v"] + cfg["fc_hidden_t"]))
    p["fc1_b"] = _w(keys[14], (cfg["fc_hidden_1"],))
    k_a, k_b = jax.random.split(keys[15])
    p["fc2_w"] = _w(k_a, (cfg["num_classes"], cfg["fc_hidden_1"]))
    p["fc2_b"] = _w(k_b, (cfg["num_classes"],))
    return p


if __name__ == "__main__":
    cfg = dict(
        v_dim=9, img_xv=16, img_yv=16, fc_hidden_v=32, ch1_v=8, ch2_v=12,
        t_dim=8, img_xt=4, img_yt=4, fc_hidden_t=16, ch1_t=4,
        fc_hidden_1=32, num_classes=2,
    )
    B = 2
    key = jax.random.PRNGKey(0)
    k_p, k_v, k_t = jax.random.split(key, 3)
    params = init_c3d_params(k_p, cfg)
    x_v = jax.random.normal(k_v, (B, 1, cfg["v_dim"], cfg["img_xv"], cfg["img_yv"]), dtype=jnp.float32)
    x_t = jax.random.normal(k_t, (B, 1, cfg["t_dim"], cfg["img_xt"], cfg["img_yt"]), dtype=jnp.float32)

    # One-time packing: BN folded, weights pre-transposed to (K, N), selection matrix built.
    ops = pack_params(params, cfg, B)

    fwd = jax.jit(functools.partial(c3d_forward, cfg))
    out = jax.block_until_ready(fwd(ops, x_v, x_t))

    ref = jax.block_until_ready(jax.jit(c3d_forward_ref)(params, x_v, x_t))
    assert out.shape == (B, cfg["num_classes"])
    assert jnp.allclose(out, ref, atol=1e-3, rtol=1e-3), (out, ref)
    print("KERNEL_OK")
</pallas_src>

<mosaic_0001>
module attributes {stable_mosaic.version = 11 : i64} {
  func.func @_c3d_fused_kernel(%arg0: i32, %arg1: memref<216x125xf32, #tpu.memory_space<vmem>>, %arg2: memref<48x27xf32, #tpu.memory_space<vmem>>, %arg3: memref<125x8xf32, #tpu.memory_space<vmem>>, %arg4: memref<1x8xf32, #tpu.memory_space<vmem>>, %arg5: memref<216x216xf32, #tpu.memory_space<vmem>>, %arg6: memref<216x12xf32, #tpu.memory_space<vmem>>, %arg7: memref<1x12xf32, #tpu.memory_space<vmem>>, %arg8: memref<48x32xf32, #tpu.memory_space<vmem>>, %arg9: memref<1x32xf32, #tpu.memory_space<vmem>>, %arg10: memref<27x4xf32, #tpu.memory_space<vmem>>, %arg11: memref<1x4xf32, #tpu.memory_space<vmem>>, %arg12: memref<96x16xf32, #tpu.memory_space<vmem>>, %arg13: memref<1x16xf32, #tpu.memory_space<vmem>>, %arg14: memref<32x32xf32, #tpu.memory_space<vmem>>, %arg15: memref<16x32xf32, #tpu.memory_space<vmem>>, %arg16: memref<1x32xf32, #tpu.memory_space<vmem>>, %arg17: memref<32x2xf32, #tpu.memory_space<vmem>>, %arg18: memref<1x2xf32, #tpu.memory_space<vmem>>, %arg19: memref<2x2xf32, #tpu.memory_space<vmem>>) attributes {dimension_semantics = [#tpu.dimension_semantics<arbitrary>], iteration_bounds = array<i64: 1>, scalar_prefetch = 0 : i64, scratch_operands = 0 : i64, tpu.core_type = #tpu.core_type<tc>, window_params = [{pipeline_mode = #tpu.pipeline_mode<synchronous>, transform_indices = @transform_0, window_bounds = array<i64: 216, 125>}, {pipeline_mode = #tpu.pipeline_mode<synchronous>, transform_indices = @transform_1, window_bounds = array<i64: 48, 27>}, {pipeline_mode = #tpu.pipeline_mode<synchronous>, transform_indices = @transform_2, window_bounds = array<i64: 125, 8>}, {pipeline_mode = #tpu.pipeline_mode<synchronous>, transform_indices = @transform_3, window_bounds = array<i64: 1, 8>}, {pipeline_mode = #tpu.pipeline_mode<synchronous>, transform_indices = @transform_4, window_bounds = array<i64: 216, 216>}, {pipeline_mode = #tpu.pipeline_mode<synchronous>, transform_indices = @transform_5, window_bounds = array<i64: 216, 12>}, {pipeline_mode = #tpu.pipeline_mode<synchronous>, transform_indices = @transform_6, window_bounds = array<i64: 1, 12>}, {pipeline_mode = #tpu.pipeline_mode<synchronous>, transform_indices = @transform_7, window_bounds = array<i64: 48, 32>}, {pipeline_mode = #tpu.pipeline_mode<synchronous>, transform_indices = @transform_8, window_bounds = array<i64: 1, 32>}, {pipeline_mode = #tpu.pipeline_mode<synchronous>, transform_indices = @transform_9, window_bounds = array<i64: 27, 4>}, {pipeline_mode = #tpu.pipeline_mode<synchronous>, transform_indices = @transform_10, window_bounds = array<i64: 1, 4>}, {pipeline_mode = #tpu.pipeline_mode<synchronous>, transform_indices = @transform_11, window_bounds = array<i64: 96, 16>}, {pipeline_mode = #tpu.pipeline_mode<synchronous>, transform_indices = @transform_12, window_bounds = array<i64: 1, 16>}, {pipeline_mode = #tpu.pipeline_mode<synchronous>, transform_indices = @transform_13, window_bounds = array<i64: 32, 32>}, {pipeline_mode = #tpu.pipeline_mode<synchronous>, transform_indices = @transform_14, window_bounds = array<i64: 16, 32>}, {pipeline_mode = #tpu.pipeline_mode<synchronous>, transform_indices = @transform_15, window_bounds = array<i64: 1, 32>}, {pipeline_mode = #tpu.pipeline_mode<synchronous>, transform_indices = @transform_16, window_bounds = array<i64: 32, 2>}, {pipeline_mode = #tpu.pipeline_mode<synchronous>, transform_indices = @transform_17, window_bounds = array<i64: 1, 2>}, {pipeline_mode = #tpu.pipeline_mode<synchronous>, transform_indices = @transform_18, window_bounds = array<i64: 2, 2>}]} {
    %c0 = arith.constant 0 : index
    %c0_0 = arith.constant 0 : index
    %0 = vector.load %arg1[%c0, %c0_0] : memref<216x125xf32, #tpu.memory_space<vmem>>, vector<216x125xf32>
    %c0_1 = arith.constant 0 : index
    %c0_2 = arith.constant 0 : index
    %1 = vector.load %arg3[%c0_1, %c0_2] : memref<125x8xf32, #tpu.memory_space<vmem>>, vector<125x8xf32>
    %cst = arith.constant dense<0.000000e+00> : vector<216x8xf32>
    %2 = tpu.matmul %0, %1, %cst {dimension_numbers = #tpu.dot_dimension_numbers<[1], [0], [0], [1], [0, 0, 1, 1], [], []>} : vector<216x125xf32>, vector<125x8xf32>, vector<216x8xf32> -> vector<216x8xf32>
    %c0_3 = arith.constant 0 : index
    %c0_4 = arith.constant 0 : index
    %3 = vector.load %arg4[%c0_3, %c0_4] : memref<1x8xf32, #tpu.memory_space<vmem>>, vector<1x8xf32>
    %4 = vector.broadcast %3 : vector<1x8xf32> to vector<216x8xf32>
    %5 = arith.addf %2, %4 : vector<216x8xf32>
    %cst_5 = arith.constant 0.000000e+00 : f32
    %6 = vector.broadcast %cst_5 : f32 to vector<216x8xf32>
    %7 = arith.maximumf %5, %6 : vector<216x8xf32>
    %c0_6 = arith.constant 0 : index
    %c0_7 = arith.constant 0 : index
    %8 = vector.load %arg5[%c0_6, %c0_7] : memref<216x216xf32, #tpu.memory_space<vmem>>, vector<216x216xf32>
    %cst_8 = arith.constant dense<0.000000e+00> : vector<216x8xf32>
    %9 = tpu.matmul %8, %7, %cst_8 {dimension_numbers = #tpu.dot_dimension_numbers<[1], [0], [0], [1], [0, 0, 1, 1], [], []>} : vector<216x216xf32>, vector<216x8xf32>, vector<216x8xf32> -> vector<216x8xf32>
    %cst_9 = arith.constant 0.000000e+00 : f32
    %10 = vector.broadcast %cst_9 : f32 to vector<8x12xf32>
    %11 = vector.extract_strided_slice %9 {offsets = [0, 0], sizes = [8, 8], strides = [1, 1]} : vector<216x8xf32> to vector<8x8xf32>
    %c0_10 = arith.constant 0 : index
    %c0_11 = arith.constant 0 : index
    %12 = vector.load %arg6[%c0_10, %c0_11] : memref<216x12xf32, #tpu.memory_space<vmem>>, vector<8x12xf32>
    %cst_12 = arith.constant dense<0.000000e+00> : vector<8x12xf32>
    %13 = tpu.matmul %11, %12, %cst_12 {dimension_numbers = #tpu.dot_dimension_numbers<[1], [0], [0], [1], [0, 0, 1, 1], [], []>} : vector<8x8xf32>, vector<8x12xf32>, vector<8x12xf32> -> vector<8x12xf32>
    %14 = arith.addf %10, %13 : vector<8x12xf32>
    %15 = vector.extract_strided_slice %9 {offsets = [8, 0], sizes = [8, 8], strides = [1, 1]} : vector<216x8xf32> to vector<8x8xf32>
    %c8 = arith.constant 8 : index
    %c0_13 = arith.constant 0 : index
    %16 = vector.load %arg6[%c8, %c0_13] : memref<216x12xf32, #tpu.memory_space<vmem>>, vector<8x12xf32>
    %cst_14 = arith.constant dense<0.000000e+00> : vector<8x12xf32>
    %17 = tpu.matmul %15, %16, %cst_14 {dimension_numbers = #tpu.dot_dimension_numbers<[1], [0], [0], [1], [0, 0, 1, 1], [], []>} : vector<8x8xf32>, vector<8x12xf32>, vector<8x12xf32> -> vector<8x12xf32>
    %18 = arith.addf %14, %17 : vector<8x12xf32>
    %19 = vector.extract_strided_slice %9 {offsets = [16, 0], sizes = [8, 8], strides = [1, 1]} : vector<216x8xf32> to vector<8x8xf32>
    %c16 = arith.constant 16 : index
    %c0_15 = arith.constant 0 : index
    %20 = vector.load %arg6[%c16, %c0_15] : memref<216x12xf32, #tpu.memory_space<vmem>>, vector<8x12xf32>
    %cst_16 = arith.constant dense<0.000000e+00> : vector<8x12xf32>
    %21 = tpu.matmul %19, %20, %cst_16 {dimension_numbers = #tpu.dot_dimension_numbers<[1], [0], [0], [1], [0, 0, 1, 1], [], []>} : vector<8x8xf32>, vector<8x12xf32>, vector<8x12xf32> -> vector<8x12xf32>
    %22 = arith.addf %18, %21 : vector<8x12xf32>
    %23 = vector.extract_strided_slice %9 {offsets = [24, 0], sizes = [8, 8], strides = [1, 1]} : vector<216x8xf32> to vector<8x8xf32>
    %c24 = arith.constant 24 : index
    %c0_17 = arith.constant 0 : index
    %24 = vector.load %arg6[%c24, %c0_17] : memref<216x12xf32, #tpu.memory_space<vmem>>, vector<8x12xf32>
    %cst_18 = arith.constant dense<0.000000e+00> : vector<8x12xf32>
    %25 = tpu.matmul %23, %24, %cst_18 {dimension_numbers = #tpu.dot_dimension_numbers<[1], [0], [0], [1], [0, 0, 1, 1], [], []>} : vector<8x8xf32>, vector<8x12xf32>, vector<8x12xf32> -> vector<8x12xf32>
    %26 = arith.addf %22, %25 : vector<8x12xf32>
    %27 = vector.extract_strided_slice %9 {offsets = [32, 0], sizes = [8, 8], strides = [1, 1]} : vector<216x8xf32> to vector<8x8xf32>
    %c32 = arith.constant 32 : index
    %c0_19 = arith.constant 0 : index
    %28 = vector.load %arg6[%c32, %c0_19] : memref<216x12xf32, #tpu.memory_space<vmem>>, vector<8x12xf32>
    %cst_20 = arith.constant dense<0.000000e+00> : vector<8x12xf32>
    %29 = tpu.matmul %27, %28, %cst_20 {dimension_numbers = #tpu.dot_dimension_numbers<[1], [0], [0], [1], [0, 0, 1, 1], [], []>} : vector<8x8xf32>, vector<8x12xf32>, vector<8x12xf32> -> vector<8x12xf32>
    %30 = arith.addf %26, %29 : vector<8x12xf32>
    %31 = vector.extract_strided_slice %9 {offsets = [40, 0], sizes = [8, 8], strides = [1, 1]} : vector<216x8xf32> to vector<8x8xf32>
    %c40 = arith.constant 40 : index
    %c0_21 = arith.constant 0 : index
    %32 = vector.load %arg6[%c40, %c0_21] : memref<216x12xf32, #tpu.memory_space<vmem>>, vector<8x12xf32>
    %cst_22 = arith.constant dense<0.000000e+00> : vector<8x12xf32>
    %33 = tpu.matmul %31, %32, %cst_22 {dimension_numbers = #tpu.dot_dimension_numbers<[1], [0], [0], [1], [0, 0, 1, 1], [], []>} : vector<8x8xf32>, vector<8x12xf32>, vector<8x12xf32> -> vector<8x12xf32>
    %34 = arith.addf %30, %33 : vector<8x12xf32>
    %35 = vector.extract_strided_slice %9 {offsets = [48, 0], sizes = [8, 8], strides = [1, 1]} : vector<216x8xf32> to vector<8x8xf32>
    %c48 = arith.constant 48 : index
    %c0_23 = arith.constant 0 : index
    %36 = vector.load %arg6[%c48, %c0_23] : memref<216x12xf32, #tpu.memory_space<vmem>>, vector<8x12xf32>
    %cst_24 = arith.constant dense<0.000000e+00> : vector<8x12xf32>
    %37 = tpu.matmul %35, %36, %cst_24 {dimension_numbers = #tpu.dot_dimension_numbers<[1], [0], [0], [1], [0, 0, 1, 1], [], []>} : vector<8x8xf32>, vector<8x12xf32>, vector<8x12xf32> -> vector<8x12xf32>
    %38 = arith.addf %34, %37 : vector<8x12xf32>
    %39 = vector.extract_strided_slice %9 {offsets = [56, 0], sizes = [8, 8], strides = [1, 1]} : vector<216x8xf32> to vector<8x8xf32>
    %c56 = arith.constant 56 : index
    %c0_25 = arith.constant 0 : index
    %40 = vector.load %arg6[%c56, %c0_25] : memref<216x12xf32, #tpu.memory_space<vmem>>, vector<8x12xf32>
    %cst_26 = arith.constant dense<0.000000e+00> : vector<8x12xf32>
    %41 = tpu.matmul %39, %40, %cst_26 {dimension_numbers = #tpu.dot_dimension_numbers<[1], [0], [0], [1], [0, 0, 1, 1], [], []>} : vector<8x8xf32>, vector<8x12xf32>, vector<8x12xf32> -> vector<8x12xf32>
    %42 = arith.addf %38, %41 : vector<8x12xf32>
    %43 = vector.extract_strided_slice %9 {offsets = [64, 0], sizes = [8, 8], strides = [1, 1]} : vector<216x8xf32> to vector<8x8xf32>
    %c64 = arith.constant 64 : index
    %c0_27 = arith.constant 0 : index
    %44 = vector.load %arg6[%c64, %c0_27] : memref<216x12xf32, #tpu.memory_space<vmem>>, vector<8x12xf32>
    %cst_28 = arith.constant dense<0.000000e+00> : vector<8x12xf32>
    %45 = tpu.matmul %43, %44, %cst_28 {dimension_numbers = #tpu.dot_dimension_numbers<[1], [0], [0], [1], [0, 0, 1, 1], [], []>} : vector<8x8xf32>, vector<8x12xf32>, vector<8x12xf32> -> vector<8x12xf32>
    %46 = arith.addf %42, %45 : vector<8x12xf32>
    %47 = vector.extract_strided_slice %9 {offsets = [72, 0], sizes = [8, 8], strides = [1, 1]} : vector<216x8xf32> to vector<8x8xf32>
    %c72 = arith.constant 72 : index
    %c0_29 = arith.constant 0 : index
    %48 = vector.load %arg6[%c72, %c0_29] : memref<216x12xf32, #tpu.memory_space<vmem>>, vector<8x12xf32>
    %cst_30 = arith.constant dense<0.000000e+00> : vector<8x12xf32>
    %49 = tpu.matmul %47, %48, %cst_30 {dimension_numbers = #tpu.dot_dimension_numbers<[1], [0], [0], [1], [0, 0, 1, 1], [], []>} : vector<8x8xf32>, vector<8x12xf32>, vector<8x12xf32> -> vector<8x12xf32>
    %50 = arith.addf %46, %49 : vector<8x12xf32>
    %51 = vector.extract_strided_slice %9 {offsets = [80, 0], sizes = [8, 8], strides = [1, 1]} : vector<216x8xf32> to vector<8x8xf32>
    %c80 = arith.constant 80 : index
    %c0_31 = arith.constant 0 : index
    %52 = vector.load %arg6[%c80, %c0_31] : memref<216x12xf32, #tpu.memory_space<vmem>>, vector<8x12xf32>
    %cst_32 = arith.constant dense<0.000000e+00> : vector<8x12xf32>
    %53 = tpu.matmul %51, %52, %cst_32 {dimension_numbers = #tpu.dot_dimension_numbers<[1], [0], [0], [1], [0, 0, 1, 1], [], []>} : vector<8x8xf32>, vector<8x12xf32>, vector<8x12xf32> -> vector<8x12xf32>
    %54 = arith.addf %50, %53 : vector<8x12xf32>
    %55 = vector.extract_strided_slice %9 {offsets = [88, 0], sizes = [8, 8], strides = [1, 1]} : vector<216x8xf32> to vector<8x8xf32>
    %c88 = arith.constant 88 : index
    %c0_33 = arith.constant 0 : index
    %56 = vector.load %arg6[%c88, %c0_33] : memref<216x12xf32, #tpu.memory_space<vmem>>, vector<8x12xf32>
    %cst_34 = arith.constant dense<0.000000e+00> : vector<8x12xf32>
    %57 = tpu.matmul %55, %56, %cst_34 {dimension_numbers = #tpu.dot_dimension_numbers<[1], [0], [0], [1], [0, 0, 1, 1], [], []>} : vector<8x8xf32>, vector<8x12xf32>, vector<8x12xf32> -> vector<8x12xf32>
    %58 = arith.addf %54, %57 : vector<8x12xf32>
    %59 = vector.extract_strided_slice %9 {offsets = [96, 0], sizes = [8, 8], strides = [1, 1]} : vector<216x8xf32> to vector<8x8xf32>
    %c96 = arith.constant 96 : index
    %c0_35 = arith.constant 0 : index
    %60 = vector.load %arg6[%c96, %c0_35] : memref<216x12xf32, #tpu.memory_space<vmem>>, vector<8x12xf32>
    %cst_36 = arith.constant dense<0.000000e+00> : vector<8x12xf32>
    %61 = tpu.matmul %59, %60, %cst_36 {dimension_numbers = #tpu.dot_dimension_numbers<[1], [0], [0], [1], [0, 0, 1, 1], [], []>} : vector<8x8xf32>, vector<8x12xf32>, vector<8x12xf32> -> vector<8x12xf32>
    %62 = arith.addf %58, %61 : vector<8x12xf32>
    %63 = vector.extract_strided_slice %9 {offsets = [104, 0], sizes = [8, 8], strides = [1, 1]} : vector<216x8xf32> to vector<8x8xf32>
    %c104 = arith.constant 104 : index
    %c0_37 = arith.constant 0 : index
    %64 = vector.load %arg6[%c104, %c0_37] : memref<216x12xf32, #tpu.memory_space<vmem>>, vector<8x12xf32>
    %cst_38 = arith.constant dense<0.000000e+00> : vector<8x12xf32>
    %65 = tpu.matmul %63, %64, %cst_38 {dimension_numbers = #tpu.dot_dimension_numbers<[1], [0], [0], [1], [0, 0, 1, 1], [], []>} : vector<8x8xf32>, vector<8x12xf32>, vector<8x12xf32> -> vector<8x12xf32>
    %66 = arith.addf %62, %65 : vector<8x12xf32>
    %67 = vector.extract_strided_slice %9 {offsets = [112, 0], sizes = [8, 8], strides = [1, 1]} : vector<216x8xf32> to vector<8x8xf32>
    %c112 = arith.constant 112 : index
    %c0_39 = arith.constant 0 : index
    %68 = vector.load %arg6[%c112, %c0_39] : memref<216x12xf32, #tpu.memory_space<vmem>>, vector<8x12xf32>
    %cst_40 = arith.constant dense<0.000000e+00> : vector<8x12xf32>
    %69 = tpu.matmul %67, %68, %cst_40 {dimension_numbers = #tpu.dot_dimension_numbers<[1], [0], [0], [1], [0, 0, 1, 1], [], []>} : vector<8x8xf32>, vector<8x12xf32>, vector<8x12xf32> -> vector<8x12xf32>
    %70 = arith.addf %66, %69 : vector<8x12xf32>
    %71 = vector.extract_strided_slice %9 {offsets = [120, 0], sizes = [8, 8], strides = [1, 1]} : vector<216x8xf32> to vector<8x8xf32>
    %c120 = arith.constant 120 : index
    %c0_41 = arith.constant 0 : index
    %72 = vector.load %arg6[%c120, %c0_41] : memref<216x12xf32, #tpu.memory_space<vmem>>, vector<8x12xf32>
    %cst_42 = arith.constant dense<0.000000e+00> : vector<8x12xf32>
    %73 = tpu.matmul %71, %72, %cst_42 {dimension_numbers = #tpu.dot_dimension_numbers<[1], [0], [0], [1], [0, 0, 1, 1], [], []>} : vector<8x8xf32>, vector<8x12xf32>, vector<8x12xf32> -> vector<8x12xf32>
    %74 = arith.addf %70, %73 : vector<8x12xf32>
    %75 = vector.extract_strided_slice %9 {offsets = [128, 0], sizes = [8, 8], strides = [1, 1]} : vector<216x8xf32> to vector<8x8xf32>
    %c128 = arith.constant 128 : index
    %c0_43 = arith.constant 0 : index
    %76 = vector.load %arg6[%c128, %c0_43] : memref<216x12xf32, #tpu.memory_space<vmem>>, vector<8x12xf32>
    %cst_44 = arith.constant dense<0.000000e+00> : vector<8x12xf32>
    %77 = tpu.matmul %75, %76, %cst_44 {dimension_numbers = #tpu.dot_dimension_numbers<[1], [0], [0], [1], [0, 0, 1, 1], [], []>} : vector<8x8xf32>, vector<8x12xf32>, vector<8x12xf32> -> vector<8x12xf32>
    %78 = arith.addf %74, %77 : vector<8x12xf32>
    %79 = vector.extract_strided_slice %9 {offsets = [136, 0], sizes = [8, 8], strides = [1, 1]} : vector<216x8xf32> to vector<8x8xf32>
    %c136 = arith.constant 136 : index
    %c0_45 = arith.constant 0 : index
    %80 = vector.load %arg6[%c136, %c0_45] : memref<216x12xf32, #tpu.memory_space<vmem>>, vector<8x12xf32>
    %cst_46 = arith.constant dense<0.000000e+00> : vector<8x12xf32>
    %81 = tpu.matmul %79, %80, %cst_46 {dimension_numbers = #tpu.dot_dimension_numbers<[1], [0], [0], [1], [0, 0, 1, 1], [], []>} : vector<8x8xf32>, vector<8x12xf32>, vector<8x12xf32> -> vector<8x12xf32>
    %82 = arith.addf %78, %81 : vector<8x12xf32>
    %83 = vector.extract_strided_slice %9 {offsets = [144, 0], sizes = [8, 8], strides = [1, 1]} : vector<216x8xf32> to vector<8x8xf32>
    %c144 = arith.constant 144 : index
    %c0_47 = arith.constant 0 : index
    %84 = vector.load %arg6[%c144, %c0_47] : memref<216x12xf32, #tpu.memory_space<vmem>>, vector<8x12xf32>
    %cst_48 = arith.constant dense<0.000000e+00> : vector<8x12xf32>
    %85 = tpu.matmul %83, %84, %cst_48 {dimension_numbers = #tpu.dot_dimension_numbers<[1], [0], [0], [1], [0, 0, 1, 1], [], []>} : vector<8x8xf32>, vector<8x12xf32>, vector<8x12xf32> -> vector<8x12xf32>
    %86 = arith.addf %82, %85 : vector<8x12xf32>
    %87 = vector.extract_strided_slice %9 {offsets = [152, 0], sizes = [8, 8], strides = [1, 1]} : vector<216x8xf32> to vector<8x8xf32>
    %c152 = arith.constant 152 : index
    %c0_49 = arith.constant 0 : index
    %88 = vector.load %arg6[%c152, %c0_49] : memref<216x12xf32, #tpu.memory_space<vmem>>, vector<8x12xf32>
    %cst_50 = arith.constant dense<0.000000e+00> : vector<8x12xf32>
    %89 = tpu.matmul %87, %88, %cst_50 {dimension_numbers = #tpu.dot_dimension_numbers<[1], [0], [0], [1], [0, 0, 1, 1], [], []>} : vector<8x8xf32>, vector<8x12xf32>, vector<8x12xf32> -> vector<8x12xf32>
    %90 = arith.addf %86, %89 : vector<8x12xf32>
    %91 = vector.extract_strided_slice %9 {offsets = [160, 0], sizes = [8, 8], strides = [1, 1]} : vector<216x8xf32> to vector<8x8xf32>
    %c160 = arith.constant 160 : index
    %c0_51 = arith.constant 0 : index
    %92 = vector.load %arg6[%c160, %c0_51] : memref<216x12xf32, #tpu.memory_space<vmem>>, vector<8x12xf32>
    %cst_52 = arith.constant dense<0.000000e+00> : vector<8x12xf32>
    %93 = tpu.matmul %91, %92, %cst_52 {dimension_numbers = #tpu.dot_dimension_numbers<[1], [0], [0], [1], [0, 0, 1, 1], [], []>} : vector<8x8xf32>, vector<8x12xf32>, vector<8x12xf32> -> vector<8x12xf32>
    %94 = arith.addf %90, %93 : vector<8x12xf32>
    %95 = vector.extract_strided_slice %9 {offsets = [168, 0], sizes = [8, 8], strides = [1, 1]} : vector<216x8xf32> to vector<8x8xf32>
    %c168 = arith.constant 168 : index
    %c0_53 = arith.constant 0 : index
    %96 = vector.load %arg6[%c168, %c0_53] : memref<216x12xf32, #tpu.memory_space<vmem>>, vector<8x12xf32>
    %cst_54 = arith.constant dense<0.000000e+00> : vector<8x12xf32>
    %97 = tpu.matmul %95, %96, %cst_54 {dimension_numbers = #tpu.dot_dimension_numbers<[1], [0], [0], [1], [0, 0, 1, 1], [], []>} : vector<8x8xf32>, vector<8x12xf32>, vector<8x12xf32> -> vector<8x12xf32>
    %98 = arith.addf %94, %97 : vector<8x12xf32>
    %99 = vector.extract_strided_slice %9 {offsets = [176, 0], sizes = [8, 8], strides = [1, 1]} : vector<216x8xf32> to vector<8x8xf32>
    %c176 = arith.constant 176 : index
    %c0_55 = arith.constant 0 : index
    %100 = vector.load %arg6[%c176, %c0_55] : memref<216x12xf32, #tpu.memory_space<vmem>>, vector<8x12xf32>
    %cst_56 = arith.constant dense<0.000000e+00> : vector<8x12xf32>
    %101 = tpu.matmul %99, %100, %cst_56 {dimension_numbers = #tpu.dot_dimension_numbers<[1], [0], [0], [1], [0, 0, 1, 1], [], []>} : vector<8x8xf32>, vector<8x12xf32>, vector<8x12xf32> -> vector<8x12xf32>
    %102 = arith.addf %98, %101 : vector<8x12xf32>
    %103 = vector.extract_strided_slice %9 {offsets = [184, 0], sizes = [8, 8], strides = [1, 1]} : vector<216x8xf32> to vector<8x8xf32>
    %c184 = arith.constant 184 : index
    %c0_57 = arith.constant 0 : index
    %104 = vector.load %arg6[%c184, %c0_57] : memref<216x12xf32, #tpu.memory_space<vmem>>, vector<8x12xf32>
    %cst_58 = arith.constant dense<0.000000e+00> : vector<8x12xf32>
    %105 = tpu.matmul %103, %104, %cst_58 {dimension_numbers = #tpu.dot_dimension_numbers<[1], [0], [0], [1], [0, 0, 1, 1], [], []>} : vector<8x8xf32>, vector<8x12xf32>, vector<8x12xf32> -> vector<8x12xf32>
    %106 = arith.addf %102, %105 : vector<8x12xf32>
    %107 = vector.extract_strided_slice %9 {offsets = [192, 0], sizes = [8, 8], strides = [1, 1]} : vector<216x8xf32> to vector<8x8xf32>
    %c192 = arith.constant 192 : index
    %c0_59 = arith.constant 0 : index
    %108 = vector.load %arg6[%c192, %c0_59] : memref<216x12xf32, #tpu.memory_space<vmem>>, vector<8x12xf32>
    %cst_60 = arith.constant dense<0.000000e+00> : vector<8x12xf32>
    %109 = tpu.matmul %107, %108, %cst_60 {dimension_numbers = #tpu.dot_dimension_numbers<[1], [0], [0], [1], [0, 0, 1, 1], [], []>} : vector<8x8xf32>, vector<8x12xf32>, vector<8x12xf32> -> vector<8x12xf32>
    %110 = arith.addf %106, %109 : vector<8x12xf32>
    %111 = vector.extract_strided_slice %9 {offsets = [200, 0], sizes = [8, 8], strides = [1, 1]} : vector<216x8xf32> to vector<8x8xf32>
    %c200 = arith.constant 200 : index
    %c0_61 = arith.constant 0 : index
    %112 = vector.load %arg6[%c200, %c0_61] : memref<216x12xf32, #tpu.memory_space<vmem>>, vector<8x12xf32>
    %cst_62 = arith.constant dense<0.000000e+00> : vector<8x12xf32>
    %113 = tpu.matmul %111, %112, %cst_62 {dimension_numbers = #tpu.dot_dimension_numbers<[1], [0], [0], [1], [0, 0, 1, 1], [], []>} : vector<8x8xf32>, vector<8x12xf32>, vector<8x12xf32> -> vector<8x12xf32>
    %114 = arith.addf %110, %113 : vector<8x12xf32>
    %115 = vector.extract_strided_slice %9 {offsets = [208, 0], sizes = [8, 8], strides = [1, 1]} : vector<216x8xf32> to vector<8x8xf32>
    %c208 = arith.constant 208 : index
    %c0_63 = arith.constant 0 : index
    %116 = vector.load %arg6[%c208, %c0_63] : memref<216x12xf32, #tpu.memory_space<vmem>>, vector<8x12xf32>
    %cst_64 = arith.constant dense<0.000000e+00> : vector<8x12xf32>
    %117 = tpu.matmul %115, %116, %cst_64 {dimension_numbers = #tpu.dot_dimension_numbers<[1], [0], [0], [1], [0, 0, 1, 1], [], []>} : vector<8x8xf32>, vector<8x12xf32>, vector<8x12xf32> -> vector<8x12xf32>
    %118 = arith.addf %114, %117 : vector<8x12xf32>
    %c0_65 = arith.constant 0 : index
    %c0_66 = arith.constant 0 : index
    %119 = vector.load %arg7[%c0_65, %c0_66] : memref<1x12xf32, #tpu.memory_space<vmem>>, vector<1x12xf32>
    %120 = vector.broadcast %119 : vector<1x12xf32> to vector<8x12xf32>
    %121 = arith.addf %118, %120 : vector<8x12xf32>
    %cst_67 = arith.constant 0.000000e+00 : f32
    %122 = vector.broadcast %cst_67 : f32 to vector<8x12xf32>
    %123 = arith.maximumf %121, %122 : vector<8x12xf32>
    %cst_68 = arith.constant 0.000000e+00 : f32
    %124 = vector.broadcast %cst_68 : f32 to vector<2x32xf32>
    %125 = vector.extract_strided_slice %123 {offsets = [0, 0], sizes = [2, 12], strides = [1, 1]} : vector<8x12xf32> to vector<2x12xf32>
    %c0_69 = arith.constant 0 : index
    %c0_70 = arith.constant 0 : index
    %126 = vector.load %arg8[%c0_69, %c0_70] : memref<48x32xf32, #tpu.memory_space<vmem>>, vector<12x32xf32>
    %cst_71 = arith.constant dense<0.000000e+00> : vector<2x32xf32>
    %127 = tpu.matmul %125, %126, %cst_71 {dimension_numbers = #tpu.dot_dimension_numbers<[1], [0], [0], [1], [0, 0, 1, 1], [], []>} : vector<2x12xf32>, vector<12x32xf32>, vector<2x32xf32> -> vector<2x32xf32>
    %128 = arith.addf %124, %127 : vector<2x32xf32>
    %129 = vector.extract_strided_slice %123 {offsets = [2, 0], sizes = [2, 12], strides = [1, 1]} : vector<8x12xf32> to vector<2x12xf32>
    %c12 = arith.constant 12 : index
    %c0_72 = arith.constant 0 : index
    %130 = vector.load %arg8[%c12, %c0_72] : memref<48x32xf32, #tpu.memory_space<vmem>>, vector<12x32xf32>
    %cst_73 = arith.constant dense<0.000000e+00> : vector<2x32xf32>
    %131 = tpu.matmul %129, %130, %cst_73 {dimension_numbers = #tpu.dot_dimension_numbers<[1], [0], [0], [1], [0, 0, 1, 1], [], []>} : vector<2x12xf32>, vector<12x32xf32>, vector<2x32xf32> -> vector<2x32xf32>
    %132 = arith.addf %128, %131 : vector<2x32xf32>
    %133 = vector.extract_strided_slice %123 {offsets = [4, 0], sizes = [2, 12], strides = [1, 1]} : vector<8x12xf32> to vector<2x12xf32>
    %c24_74 = arith.constant 24 : index
    %c0_75 = arith.constant 0 : index
    %134 = vector.load %arg8[%c24_74, %c0_75] : memref<48x32xf32, #tpu.memory_space<vmem>>, vector<12x32xf32>
    %cst_76 = arith.constant dense<0.000000e+00> : vector<2x32xf32>
    %135 = tpu.matmul %133, %134, %cst_76 {dimension_numbers = #tpu.dot_dimension_numbers<[1], [0], [0], [1], [0, 0, 1, 1], [], []>} : vector<2x12xf32>, vector<12x32xf32>, vector<2x32xf32> -> vector<2x32xf32>
    %136 = arith.addf %132, %135 : vector<2x32xf32>
    %137 = vector.extract_strided_slice %123 {offsets = [6, 0], sizes = [2, 12], strides = [1, 1]} : vector<8x12xf32> to vector<2x12xf32>
    %c36 = arith.constant 36 : index
    %c0_77 = arith.constant 0 : index
    %138 = vector.load %arg8[%c36, %c0_77] : memref<48x32xf32, #tpu.memory_space<vmem>>, vector<12x32xf32>
    %cst_78 = arith.constant dense<0.000000e+00> : vector<2x32xf32>
    %139 = tpu.matmul %137, %138, %cst_78 {dimension_numbers = #tpu.dot_dimension_numbers<[1], [0], [0], [1], [0, 0, 1, 1], [], []>} : vector<2x12xf32>, vector<12x32xf32>, vector<2x32xf32> -> vector<2x32xf32>
    %140 = arith.addf %136, %139 : vector<2x32xf32>
    %c0_79 = arith.constant 0 : index
    %c0_80 = arith.constant 0 : index
    %141 = vector.load %arg9[%c0_79, %c0_80] : memref<1x32xf32, #tpu.memory_space<vmem>>, vector<1x32xf32>
    %142 = vector.broadcast %141 : vector<1x32xf32> to vector<2x32xf32>
    %143 = arith.addf %140, %142 : vector<2x32xf32>
    %cst_81 = arith.constant 0.000000e+00 : f32
    %144 = vector.broadcast %cst_81 : f32 to vector<2x32xf32>
    %145 = arith.maximumf %143, %144 : vector<2x32xf32>
    %c0_82 = arith.constant 0 : index
    %c0_83 = arith.constant 0 : index
    %146 = vector.load %arg2[%c0_82, %c0_83] : memref<48x27xf32, #tpu.memory_space<vmem>>, vector<48x27xf32>
    %c0_84 = arith.constant 0 : index
    %c0_85 = arith.constant 0 : index
    %147 = vector.load %arg10[%c0_84, %c0_85] : memref<27x4xf32, #tpu.memory_space<vmem>>, vector<27x4xf32>
    %cst_86 = arith.constant dense<0.000000e+00> : vector<48x4xf32>
    %148 = tpu.matmul %146, %147, %cst_86 {dimension_numbers = #tpu.dot_dimension_numbers<[1], [0], [0], [1], [0, 0, 1, 1], [], []>} : vector<48x27xf32>, vector<27x4xf32>, vector<48x4xf32> -> vector<48x4xf32>
    %c0_87 = arith.constant 0 : index
    %c0_88 = arith.constant 0 : index
    %149 = vector.load %arg11[%c0_87, %c0_88] : memref<1x4xf32, #tpu.memory_space<vmem>>, vector<1x4xf32>
    %150 = vector.broadcast %149 : vector<1x4xf32> to vector<48x4xf32>
    %151 = arith.addf %148, %150 : vector<48x4xf32>
    %cst_89 = arith.constant 0.000000e+00 : f32
    %152 = vector.broadcast %cst_89 : f32 to vector<48x4xf32>
    %153 = arith.maximumf %151, %152 : vector<48x4xf32>
    %cst_90 = arith.constant 0.000000e+00 : f32
    %154 = vector.broadcast %cst_90 : f32 to vector<2x16xf32>
    %155 = vector.extract_strided_slice %153 {offsets = [0, 0], sizes = [2, 4], strides = [1, 1]} : vector<48x4xf32> to vector<2x4xf32>
    %c0_91 = arith.constant 0 : index
    %c0_92 = arith.constant 0 : index
    %156 = vector.load %arg12[%c0_91, %c0_92] : memref<96x16xf32, #tpu.memory_space<vmem>>, vector<4x16xf32>
    %cst_93 = arith.constant dense<0.000000e+00> : vector<2x16xf32>
    %157 = tpu.matmul %155, %156, %cst_93 {dimension_numbers = #tpu.dot_dimension_numbers<[1], [0], [0], [1], [0, 0, 1, 1], [], []>} : vector<2x4xf32>, vector<4x16xf32>, vector<2x16xf32> -> vector<2x16xf32>
    %158 = arith.addf %154, %157 : vector<2x16xf32>
    %159 = vector.extract_strided_slice %153 {offsets = [2, 0], sizes = [2, 4], strides = [1, 1]} : vector<48x4xf32> to vector<2x4xf32>
    %c4 = arith.constant 4 : index
    %c0_94 = arith.constant 0 : index
    %160 = vector.load %arg12[%c4, %c0_94] : memref<96x16xf32, #tpu.memory_space<vmem>>, vector<4x16xf32>
    %cst_95 = arith.constant dense<0.000000e+00> : vector<2x16xf32>
    %161 = tpu.matmul %159, %160, %cst_95 {dimension_numbers = #tpu.dot_dimension_numbers<[1], [0], [0], [1], [0, 0, 1, 1], [], []>} : vector<2x4xf32>, vector<4x16xf32>, vector<2x16xf32> -> vector<2x16xf32>
    %162 = arith.addf %158, %161 : vector<2x16xf32>
    %163 = vector.extract_strided_slice %153 {offsets = [4, 0], sizes = [2, 4], strides = [1, 1]} : vector<48x4xf32> to vector<2x4xf32>
    %c8_96 = arith.constant 8 : index
    %c0_97 = arith.constant 0 : index
    %164 = vector.load %arg12[%c8_96, %c0_97] : memref<96x16xf32, #tpu.memory_space<vmem>>, vector<4x16xf32>
    %cst_98 = arith.constant dense<0.000000e+00> : vector<2x16xf32>
    %165 = tpu.matmul %163, %164, %cst_98 {dimension_numbers = #tpu.dot_dimension_numbers<[1], [0], [0], [1], [0, 0, 1, 1], [], []>} : vector<2x4xf32>, vector<4x16xf32>, vector<2x16xf32> -> vector<2x16xf32>
    %166 = arith.addf %162, %165 : vector<2x16xf32>
    %167 = vector.extract_strided_slice %153 {offsets = [6, 0], sizes = [2, 4], strides = [1, 1]} : vector<48x4xf32> to vector<2x4xf32>
    %c12_99 = arith.constant 12 : index
    %c0_100 = arith.constant 0 : index
    %168 = vector.load %arg12[%c12_99, %c0_100] : memref<96x16xf32, #tpu.memory_space<vmem>>, vector<4x16xf32>
    %cst_101 = arith.constant dense<0.000000e+00> : vector<2x16xf32>
    %169 = tpu.matmul %167, %168, %cst_101 {dimension_numbers = #tpu.dot_dimension_numbers<[1], [0], [0], [1], [0, 0, 1, 1], [], []>} : vector<2x4xf32>, vector<4x16xf32>, vector<2x16xf32> -> vector<2x16xf32>
    %170 = arith.addf %166, %169 : vector<2x16xf32>
    %171 = vector.extract_strided_slice %153 {offsets = [8, 0], sizes = [2, 4], strides = [1, 1]} : vector<48x4xf32> to vector<2x4xf32>
    %c16_102 = arith.constant 16 : index
    %c0_103 = arith.constant 0 : index
    %172 = vector.load %arg12[%c16_102, %c0_103] : memref<96x16xf32, #tpu.memory_space<vmem>>, vector<4x16xf32>
    %cst_104 = arith.constant dense<0.000000e+00> : vector<2x16xf32>
    %173 = tpu.matmul %171, %172, %cst_104 {dimension_numbers = #tpu.dot_dimension_numbers<[1], [0], [0], [1], [0, 0, 1, 1], [], []>} : vector<2x4xf32>, vector<4x16xf32>, vector<2x16xf32> -> vector<2x16xf32>
    %174 = arith.addf %170, %173 : vector<2x16xf32>
    %175 = vector.extract_strided_slice %153 {offsets = [10, 0], sizes = [2, 4], strides = [1, 1]} : vector<48x4xf32> to vector<2x4xf32>
    %c20 = arith.constant 20 : index
    %c0_105 = arith.constant 0 : index
    %176 = vector.load %arg12[%c20, %c0_105] : memref<96x16xf32, #tpu.memory_space<vmem>>, vector<4x16xf32>
    %cst_106 = arith.constant dense<0.000000e+00> : vector<2x16xf32>
    %177 = tpu.matmul %175, %176, %cst_106 {dimension_numbers = #tpu.dot_dimension_numbers<[1], [0], [0], [1], [0, 0, 1, 1], [], []>} : vector<2x4xf32>, vector<4x16xf32>, vector<2x16xf32> -> vector<2x16xf32>
    %178 = arith.addf %174, %177 : vector<2x16xf32>
    %179 = vector.extract_strided_slice %153 {offsets = [12, 0], sizes = [2, 4], strides = [1, 1]} : vector<48x4xf32> to vector<2x4xf32>
    %c24_107 = arith.constant 24 : index
    %c0_108 = arith.constant 0 : index
    %180 = vector.load %arg12[%c24_107, %c0_108] : memref<96x16xf32, #tpu.memory_space<vmem>>, vector<4x16xf32>
    %cst_109 = arith.constant dense<0.000000e+00> : vector<2x16xf32>
    %181 = tpu.matmul %179, %180, %cst_109 {dimension_numbers = #tpu.dot_dimension_numbers<[1], [0], [0], [1], [0, 0, 1, 1], [], []>} : vector<2x4xf32>, vector<4x16xf32>, vector<2x16xf32> -> vector<2x16xf32>
    %182 = arith.addf %178, %181 : vector<2x16xf32>
    %183 = vector.extract_strided_slice %153 {offsets = [14, 0], sizes = [2, 4], strides = [1, 1]} : vector<48x4xf32> to vector<2x4xf32>
    %c28 = arith.constant 28 : index
    %c0_110 = arith.constant 0 : index
    %184 = vector.load %arg12[%c28, %c0_110] : memref<96x16xf32, #tpu.memory_space<vmem>>, vector<4x16xf32>
    %cst_111 = arith.constant dense<0.000000e+00> : vector<2x16xf32>
    %185 = tpu.matmul %183, %184, %cst_111 {dimension_numbers = #tpu.dot_dimension_numbers<[1], [0], [0], [1], [0, 0, 1, 1], [], []>} : vector<2x4xf32>, vector<4x16xf32>, vector<2x16xf32> -> vector<2x16xf32>
    %186 = arith.addf %182, %185 : vector<2x16xf32>
    %187 = vector.extract_strided_slice %153 {offsets = [16, 0], sizes = [2, 4], strides = [1, 1]} : vector<48x4xf32> to vector<2x4xf32>
    %c32_112 = arith.constant 32 : index
    %c0_113 = arith.constant 0 : index
    %188 = vector.load %arg12[%c32_112, %c0_113] : memref<96x16xf32, #tpu.memory_space<vmem>>, vector<4x16xf32>
    %cst_114 = arith.constant dense<0.000000e+00> : vector<2x16xf32>
    %189 = tpu.matmul %187, %188, %cst_114 {dimension_numbers = #tpu.dot_dimension_numbers<[1], [0], [0], [1], [0, 0, 1, 1], [], []>} : vector<2x4xf32>, vector<4x16xf32>, vector<2x16xf32> -> vector<2x16xf32>
    %190 = arith.addf %186, %189 : vector<2x16xf32>
    %191 = vector.extract_strided_slice %153 {offsets = [18, 0], sizes = [2, 4], strides = [1, 1]} : vector<48x4xf32> to vector<2x4xf32>
    %c36_115 = arith.constant 36 : index
    %c0_116 = arith.constant 0 : index
    %192 = vector.load %arg12[%c36_115, %c0_116] : memref<96x16xf32, #tpu.memory_space<vmem>>, vector<4x16xf32>
    %cst_117 = arith.constant dense<0.000000e+00> : vector<2x16xf32>
    %193 = tpu.matmul %191, %192, %cst_117 {dimension_numbers = #tpu.dot_dimension_numbers<[1], [0], [0], [1], [0, 0, 1, 1], [], []>} : vector<2x4xf32>, vector<4x16xf32>, vector<2x16xf32> -> vector<2x16xf32>
    %194 = arith.addf %190, %193 : vector<2x16xf32>
    %195 = vector.extract_strided_slice %153 {offsets = [20, 0], sizes = [2, 4], strides = [1, 1]} : vector<48x4xf32> to vector<2x4xf32>
    %c40_118 = arith.constant 40 : index
    %c0_119 = arith.constant 0 : index
    %196 = vector.load %arg12[%c40_118, %c0_119] : memref<96x16xf32, #tpu.memory_space<vmem>>, vector<4x16xf32>
    %cst_120 = arith.constant dense<0.000000e+00> : vector<2x16xf32>
    %197 = tpu.matmul %195, %196, %cst_120 {dimension_numbers = #tpu.dot_dimension_numbers<[1], [0], [0], [1], [0, 0, 1, 1], [], []>} : vector<2x4xf32>, vector<4x16xf32>, vector<2x16xf32> -> vector<2x16xf32>
    %198 = arith.addf %194, %197 : vector<2x16xf32>
    %199 = vector.extract_strided_slice %153 {offsets = [22, 0], sizes = [2, 4], strides = [1, 1]} : vector<48x4xf32> to vector<2x4xf32>
    %c44 = arith.constant 44 : index
    %c0_121 = arith.constant 0 : index
    %200 = vector.load %arg12[%c44, %c0_121] : memref<96x16xf32, #tpu.memory_space<vmem>>, vector<4x16xf32>
    %cst_122 = arith.constant dense<0.000000e+00> : vector<2x16xf32>
    %201 = tpu.matmul %199, %200, %cst_122 {dimension_numbers = #tpu.dot_dimension_numbers<[1], [0], [0], [1], [0, 0, 1, 1], [], []>} : vector<2x4xf32>, vector<4x16xf32>, vector<2x16xf32> -> vector<2x16xf32>
    %202 = arith.addf %198, %201 : vector<2x16xf32>
    %203 = vector.extract_strided_slice %153 {offsets = [24, 0], sizes = [2, 4], strides = [1, 1]} : vector<48x4xf32> to vector<2x4xf32>
    %c48_123 = arith.constant 48 : index
    %c0_124 = arith.constant 0 : index
    %204 = vector.load %arg12[%c48_123, %c0_124] : memref<96x16xf32, #tpu.memory_space<vmem>>, vector<4x16xf32>
    %cst_125 = arith.constant dense<0.000000e+00> : vector<2x16xf32>
    %205 = tpu.matmul %203, %204, %cst_125 {dimension_numbers = #tpu.dot_dimension_numbers<[1], [0], [0], [1], [0, 0, 1, 1], [], []>} : vector<2x4xf32>, vector<4x16xf32>, vector<2x16xf32> -> vector<2x16xf32>
    %206 = arith.addf %202, %205 : vector<2x16xf32>
    %207 = vector.extract_strided_slice %153 {offsets = [26, 0], sizes = [2, 4], strides = [1, 1]} : vector<48x4xf32> to vector<2x4xf32>
    %c52 = arith.constant 52 : index
    %c0_126 = arith.constant 0 : index
    %208 = vector.load %arg12[%c52, %c0_126] : memref<96x16xf32, #tpu.memory_space<vmem>>, vector<4x16xf32>
    %cst_127 = arith.constant dense<0.000000e+00> : vector<2x16xf32>
    %209 = tpu.matmul %207, %208, %cst_127 {dimension_numbers = #tpu.dot_dimension_numbers<[1], [0], [0], [1], [0, 0, 1, 1], [], []>} : vector<2x4xf32>, vector<4x16xf32>, vector<2x16xf32> -> vector<2x16xf32>
    %210 = arith.addf %206, %209 : vector<2x16xf32>
    %211 = vector.extract_strided_slice %153 {offsets = [28, 0], sizes = [2, 4], strides = [1, 1]} : vector<48x4xf32> to vector<2x4xf32>
    %c56_128 = arith.constant 56 : index
    %c0_129 = arith.constant 0 : index
    %212 = vector.load %arg12[%c56_128, %c0_129] : memref<96x16xf32, #tpu.memory_space<vmem>>, vector<4x16xf32>
    %cst_130 = arith.constant dense<0.000000e+00> : vector<2x16xf32>
    %213 = tpu.matmul %211, %212, %cst_130 {dimension_numbers = #tpu.dot_dimension_numbers<[1], [0], [0], [1], [0, 0, 1, 1], [], []>} : vector<2x4xf32>, vector<4x16xf32>, vector<2x16xf32> -> vector<2x16xf32>
    %214 = arith.addf %210, %213 : vector<2x16xf32>
    %215 = vector.extract_strided_slice %153 {offsets = [30, 0], sizes = [2, 4], strides = [1, 1]} : vector<48x4xf32> to vector<2x4xf32>
    %c60 = arith.constant 60 : index
    %c0_131 = arith.constant 0 : index
    %216 = vector.load %arg12[%c60, %c0_131] : memref<96x16xf32, #tpu.memory_space<vmem>>, vector<4x16xf32>
    %cst_132 = arith.constant dense<0.000000e+00> : vector<2x16xf32>
    %217 = tpu.matmul %215, %216, %cst_132 {dimension_numbers = #tpu.dot_dimension_numbers<[1], [0], [0], [1], [0, 0, 1, 1], [], []>} : vector<2x4xf32>, vector<4x16xf32>, vector<2x16xf32> -> vector<2x16xf32>
    %218 = arith.addf %214, %217 : vector<2x16xf32>
    %219 = vector.extract_strided_slice %153 {offsets = [32, 0], sizes = [2, 4], strides = [1, 1]} : vector<48x4xf32> to vector<2x4xf32>
    %c64_133 = arith.constant 64 : index
    %c0_134 = arith.constant 0 : index
    %220 = vector.load %arg12[%c64_133, %c0_134] : memref<96x16xf32, #tpu.memory_space<vmem>>, vector<4x16xf32>
    %cst_135 = arith.constant dense<0.000000e+00> : vector<2x16xf32>
    %221 = tpu.matmul %219, %220, %cst_135 {dimension_numbers = #tpu.dot_dimension_numbers<[1], [0], [0], [1], [0, 0, 1, 1], [], []>} : vector<2x4xf32>, vector<4x16xf32>, vector<2x16xf32> -> vector<2x16xf32>
    %222 = arith.addf %218, %221 : vector<2x16xf32>
    %223 = vector.extract_strided_slice %153 {offsets = [34, 0], sizes = [2, 4], strides = [1, 1]} : vector<48x4xf32> to vector<2x4xf32>
    %c68 = arith.constant 68 : index
    %c0_136 = arith.constant 0 : index
    %224 = vector.load %arg12[%c68, %c0_136] : memref<96x16xf32, #tpu.memory_space<vmem>>, vector<4x16xf32>
    %cst_137 = arith.constant dense<0.000000e+00> : vector<2x16xf32>
    %225 = tpu.matmul %223, %224, %cst_137 {dimension_numbers = #tpu.dot_dimension_numbers<[1], [0], [0], [1], [0, 0, 1, 1], [], []>} : vector<2x4xf32>, vector<4x16xf32>, vector<2x16xf32> -> vector<2x16xf32>
    %226 = arith.addf %222, %225 : vector<2x16xf32>
    %227 = vector.extract_strided_slice %153 {offsets = [36, 0], sizes = [2, 4], strides = [1, 1]} : vector<48x4xf32> to vector<2x4xf32>
    %c72_138 = arith.constant 72 : index
    %c0_139 = arith.constant 0 : index
    %228 = vector.load %arg12[%c72_138, %c0_139] : memref<96x16xf32, #tpu.memory_space<vmem>>, vector<4x16xf32>
    %cst_140 = arith.constant dense<0.000000e+00> : vector<2x16xf32>
    %229 = tpu.matmul %227, %228, %cst_140 {dimension_numbers = #tpu.dot_dimension_numbers<[1], [0], [0], [1], [0, 0, 1, 1], [], []>} : vector<2x4xf32>, vector<4x16xf32>, vector<2x16xf32> -> vector<2x16xf32>
    %230 = arith.addf %226, %229 : vector<2x16xf32>
    %231 = vector.extract_strided_slice %153 {offsets = [38, 0], sizes = [2, 4], strides = [1, 1]} : vector<48x4xf32> to vector<2x4xf32>
    %c76 = arith.constant 76 : index
    %c0_141 = arith.constant 0 : index
    %232 = vector.load %arg12[%c76, %c0_141] : memref<96x16xf32, #tpu.memory_space<vmem>>, vector<4x16xf32>
    %cst_142 = arith.constant dense<0.000000e+00> : vector<2x16xf32>
    %233 = tpu.matmul %231, %232, %cst_142 {dimension_numbers = #tpu.dot_dimension_numbers<[1], [0], [0], [1], [0, 0, 1, 1], [], []>} : vector<2x4xf32>, vector<4x16xf32>, vector<2x16xf32> -> vector<2x16xf32>
    %234 = arith.addf %230, %233 : vector<2x16xf32>
    %235 = vector.extract_strided_slice %153 {offsets = [40, 0], sizes = [2, 4], strides = [1, 1]} : vector<48x4xf32> to vector<2x4xf32>
    %c80_143 = arith.constant 80 : index
    %c0_144 = arith.constant 0 : index
    %236 = vector.load %arg12[%c80_143, %c0_144] : memref<96x16xf32, #tpu.memory_space<vmem>>, vector<4x16xf32>
    %cst_145 = arith.constant dense<0.000000e+00> : vector<2x16xf32>
    %237 = tpu.matmul %235, %236, %cst_145 {dimension_numbers = #tpu.dot_dimension_numbers<[1], [0], [0], [1], [0, 0, 1, 1], [], []>} : vector<2x4xf32>, vector<4x16xf32>, vector<2x16xf32> -> vector<2x16xf32>
    %238 = arith.addf %234, %237 : vector<2x16xf32>
    %239 = vector.extract_strided_slice %153 {offsets = [42, 0], sizes = [2, 4], strides = [1, 1]} : vector<48x4xf32> to vector<2x4xf32>
    %c84 = arith.constant 84 : index
    %c0_146 = arith.constant 0 : index
    %240 = vector.load %arg12[%c84, %c0_146] : memref<96x16xf32, #tpu.memory_space<vmem>>, vector<4x16xf32>
    %cst_147 = arith.constant dense<0.000000e+00> : vector<2x16xf32>
    %241 = tpu.matmul %239, %240, %cst_147 {dimension_numbers = #tpu.dot_dimension_numbers<[1], [0], [0], [1], [0, 0, 1, 1], [], []>} : vector<2x4xf32>, vector<4x16xf32>, vector<2x16xf32> -> vector<2x16xf32>
    %242 = arith.addf %238, %241 : vector<2x16xf32>
    %243 = vector.extract_strided_slice %153 {offsets = [44, 0], sizes = [2, 4], strides = [1, 1]} : vector<48x4xf32> to vector<2x4xf32>
    %c88_148 = arith.constant 88 : index
    %c0_149 = arith.constant 0 : index
    %244 = vector.load %arg12[%c88_148, %c0_149] : memref<96x16xf32, #tpu.memory_space<vmem>>, vector<4x16xf32>
    %cst_150 = arith.constant dense<0.000000e+00> : vector<2x16xf32>
    %245 = tpu.matmul %243, %244, %cst_150 {dimension_numbers = #tpu.dot_dimension_numbers<[1], [0], [0], [1], [0, 0, 1, 1], [], []>} : vector<2x4xf32>, vector<4x16xf32>, vector<2x16xf32> -> vector<2x16xf32>
    %246 = arith.addf %242, %245 : vector<2x16xf32>
    %247 = vector.extract_strided_slice %153 {offsets = [46, 0], sizes = [2, 4], strides = [1, 1]} : vector<48x4xf32> to vector<2x4xf32>
    %c92 = arith.constant 92 : index
    %c0_151 = arith.constant 0 : index
    %248 = vector.load %arg12[%c92, %c0_151] : memref<96x16xf32, #tpu.memory_space<vmem>>, vector<4x16xf32>
    %cst_152 = arith.constant dense<0.000000e+00> : vector<2x16xf32>
    %249 = tpu.matmul %247, %248, %cst_152 {dimension_numbers = #tpu.dot_dimension_numbers<[1], [0], [0], [1], [0, 0, 1, 1], [], []>} : vector<2x4xf32>, vector<4x16xf32>, vector<2x16xf32> -> vector<2x16xf32>
    %250 = arith.addf %246, %249 : vector<2x16xf32>
    %c0_153 = arith.constant 0 : index
    %c0_154 = arith.constant 0 : index
    %251 = vector.load %arg13[%c0_153, %c0_154] : memref<1x16xf32, #tpu.memory_space<vmem>>, vector<1x16xf32>
    %252 = vector.broadcast %251 : vector<1x16xf32> to vector<2x16xf32>
    %253 = arith.addf %250, %252 : vector<2x16xf32>
    %cst_155 = arith.constant 0.000000e+00 : f32
    %254 = vector.broadcast %cst_155 : f32 to vector<2x16xf32>
    %255 = arith.maximumf %253, %254 : vector<2x16xf32>
    %c0_156 = arith.constant 0 : index
    %c0_157 = arith.constant 0 : index
    %256 = vector.load %arg14[%c0_156, %c0_157] : memref<32x32xf32, #tpu.memory_space<vmem>>, vector<32x32xf32>
    %cst_158 = arith.constant dense<0.000000e+00> : vector<2x32xf32>
    %257 = tpu.matmul %145, %256, %cst_158 {dimension_numbers = #tpu.dot_dimension_numbers<[1], [0], [0], [1], [0, 0, 1, 1], [], []>} : vector<2x32xf32>, vector<32x32xf32>, vector<2x32xf32> -> vector<2x32xf32>
    %c0_159 = arith.constant 0 : index
    %c0_160 = arith.constant 0 : index
    %258 = vector.load %arg15[%c0_159, %c0_160] : memref<16x32xf32, #tpu.memory_space<vmem>>, vector<16x32xf32>
    %cst_161 = arith.constant dense<0.000000e+00> : vector<2x32xf32>
    %259 = tpu.matmul %255, %258, %cst_161 {dimension_numbers = #tpu.dot_dimension_numbers<[1], [0], [0], [1], [0, 0, 1, 1], [], []>} : vector<2x16xf32>, vector<16x32xf32>, vector<2x32xf32> -> vector<2x32xf32>
    %260 = arith.addf %257, %259 : vector<2x32xf32>
    %c0_162 = arith.constant 0 : index
    %c0_163 = arith.constant 0 : index
    %261 = vector.load %arg16[%c0_162, %c0_163] : memref<1x32xf32, #tpu.memory_space<vmem>>, vector<1x32xf32>
    %262 = vector.broadcast %261 : vector<1x32xf32> to vector<2x32xf32>
    %263 = arith.addf %260, %262 : vector<2x32xf32>
    %cst_164 = arith.constant 0.000000e+00 : f32
    %264 = vector.broadcast %cst_164 : f32 to vector<2x32xf32>
    %265 = arith.maximumf %263, %264 : vector<2x32xf32>
    %c0_165 = arith.constant 0 : index
    %c0_166 = arith.constant 0 : index
    %266 = vector.load %arg17[%c0_165, %c0_166] : memref<32x2xf32, #tpu.memory_space<vmem>>, vector<32x2xf32>
    %cst_167 = arith.constant dense<0.000000e+00> : vector<2x2xf32>
    %267 = tpu.matmul %265, %266, %cst_167 {dimension_numbers = #tpu.dot_dimension_numbers<[1], [0], [0], [1], [0, 0, 1, 1], [], []>} : vector<2x32xf32>, vector<32x2xf32>, vector<2x2xf32> -> vector<2x2xf32>
    %c0_168 = arith.constant 0 : index
    %c0_169 = arith.constant 0 : index
    %268 = vector.load %arg18[%c0_168, %c0_169] : memref<1x2xf32, #tpu.memory_space<vmem>>, vector<1x2xf32>
    %269 = vector.broadcast %268 : vector<1x2xf32> to vector<2x2xf32>
    %270 = arith.addf %267, %269 : vector<2x2xf32>
    %c0_170 = arith.constant 0 : index
    %c0_171 = arith.constant 0 : index
    %271 = vector.load %arg19[%c0_170, %c0_171] : memref<2x2xf32, #tpu.memory_space<vmem>>, vector<2x2xf32>
    tpu.vector_store %arg19[%c0_170, %c0_171], %270 {strides = array<i32>} : memref<2x2xf32, #tpu.memory_space<vmem>>, vector<2x2xf32>,
    return
  }
  func.func @transform_0(%arg0: i32) -> (i32, i32) {
    %c0_i32 = arith.constant 0 : i32
    %c0_i32_0 = arith.constant 0 : i32
    %c0_i32_1 = arith.constant 0 : i32
    return %c0_i32, %c0_i32_0 : i32, i32
  }
  func.func @transform_1(%arg0: i32) -> (i32, i32) {
    %c0_i32 = arith.constant 0 : i32
    %c0_i32_0 = arith.constant 0 : i32
    %c0_i32_1 = arith.constant 0 : i32
    return %c0_i32, %c0_i32_0 : i32, i32
  }
  func.func @transform_2(%arg0: i32) -> (i32, i32) {
    %c0_i32 = arith.constant 0 : i32
    %c0_i32_0 = arith.constant 0 : i32
    %c0_i32_1 = arith.constant 0 : i32
    return %c0_i32, %c0_i32_0 : i32, i32
  }
  func.func @transform_3(%arg0: i32) -> (i32, i32) {
    %c0_i32 = arith.constant 0 : i32
    %c0_i32_0 = arith.constant 0 : i32
    %c0_i32_1 = arith.constant 0 : i32
    return %c0_i32, %c0_i32_0 : i32, i32
  }
  func.func @transform_4(%arg0: i32) -> (i32, i32) {
    %c0_i32 = arith.constant 0 : i32
    %c0_i32_0 = arith.constant 0 : i32
    %c0_i32_1 = arith.constant 0 : i32
    return %c0_i32, %c0_i32_0 : i32, i32
  }
  func.func @transform_5(%arg0: i32) -> (i32, i32) {
    %c0_i32 = arith.constant 0 : i32
    %c0_i32_0 = arith.constant 0 : i32
    %c0_i32_1 = arith.constant 0 : i32
    return %c0_i32, %c0_i32_0 : i32, i32
  }
  func.func @transform_6(%arg0: i32) -> (i32, i32) {
    %c0_i32 = arith.constant 0 : i32
    %c0_i32_0 = arith.constant 0 : i32
    %c0_i32_1 = arith.constant 0 : i32
    return %c0_i32, %c0_i32_0 : i32, i32
  }
  func.func @transform_7(%arg0: i32) -> (i32, i32) {
    %c0_i32 = arith.constant 0 : i32
    %c0_i32_0 = arith.constant 0 : i32
    %c0_i32_1 = arith.constant 0 : i32
    return %c0_i32, %c0_i32_0 : i32, i32
  }
  func.func @transform_8(%arg0: i32) -> (i32, i32) {
    %c0_i32 = arith.constant 0 : i32
    %c0_i32_0 = arith.constant 0 : i32
    %c0_i32_1 = arith.constant 0 : i32
    return %c0_i32, %c0_i32_0 : i32, i32
  }
  func.func @transform_9(%arg0: i32) -> (i32, i32) {
    %c0_i32 = arith.constant 0 : i32
    %c0_i32_0 = arith.constant 0 : i32
    %c0_i32_1 = arith.constant 0 : i32
    return %c0_i32, %c0_i32_0 : i32, i32
  }
  func.func @transform_10(%arg0: i32) -> (i32, i32) {
    %c0_i32 = arith.constant 0 : i32
    %c0_i32_0 = arith.constant 0 : i32
    %c0_i32_1 = arith.constant 0 : i32
    return %c0_i32, %c0_i32_0 : i32, i32
  }
  func.func @transform_11(%arg0: i32) -> (i32, i32) {
    %c0_i32 = arith.constant 0 : i32
    %c0_i32_0 = arith.constant 0 : i32
    %c0_i32_1 = arith.constant 0 : i32
    return %c0_i32, %c0_i32_0 : i32, i32
  }
  func.func @transform_12(%arg0: i32) -> (i32, i32) {
    %c0_i32 = arith.constant 0 : i32
    %c0_i32_0 = arith.constant 0 : i32
    %c0_i32_1 = arith.constant 0 : i32
    return %c0_i32, %c0_i32_0 : i32, i32
  }
  func.func @transform_13(%arg0: i32) -> (i32, i32) {
    %c0_i32 = arith.constant 0 : i32
    %c0_i32_0 = arith.constant 0 : i32
    %c0_i32_1 = arith.constant 0 : i32
    return %c0_i32, %c0_i32_0 : i32, i32
  }
  func.func @transform_14(%arg0: i32) -> (i32, i32) {
    %c0_i32 = arith.constant 0 : i32
    %c0_i32_0 = arith.constant 0 : i32
    %c0_i32_1 = arith.constant 0 : i32
    return %c0_i32, %c0_i32_0 : i32, i32
  }
  func.func @transform_15(%arg0: i32) -> (i32, i32) {
    %c0_i32 = arith.constant 0 : i32
    %c0_i32_0 = arith.constant 0 : i32
    %c0_i32_1 = arith.constant 0 : i32
    return %c0_i32, %c0_i32_0 : i32, i32
  }
  func.func @transform_16(%arg0: i32) -> (i32, i32) {
    %c0_i32 = arith.constant 0 : i32
    %c0_i32_0 = arith.constant 0 : i32
    %c0_i32_1 = arith.constant 0 : i32
    return %c0_i32, %c0_i32_0 : i32, i32
  }
  func.func @transform_17(%arg0: i32) -> (i32, i32) {
    %c0_i32 = arith.constant 0 : i32
    %c0_i32_0 = arith.constant 0 : i32
    %c0_i32_1 = arith.constant 0 : i32
    return %c0_i32, %c0_i32_0 : i32, i32
  }
  func.func @transform_18(%arg0: i32) -> (i32, i32) {
    %c0_i32 = arith.constant 0 : i32
    %c0_i32_0 = arith.constant 0 : i32
    %c0_i32_1 = arith.constant 0 : i32
    return %c0_i32, %c0_i32_0 : i32, i32
  }
}

</mosaic_0001>

<llo_original>
// kernel: c3d_forward.1
$region0: #{c3d_forward.1}
  #allocation0 [shape = 'u32[]', space=smem, size = 0x4, offset = 0x4, fixed_abs, tag = 'smem constant byte address 0x4 - core index']
  #allocation1 [shape = 'u32[144,128]{1,0:T(1,128)}', space=vmem, size = 0x12000, scoped, tag = 'internal scratch']
  %s0 = inlined_call_operand.vmem [shape: f32[216,125], index: 0, kind: input, shape index: {}]
  %s1 = inlined_call_operand.vmem [shape: f32[48,27], index: 1, kind: input, shape index: {}]
  %s2 = inlined_call_operand.vmem [shape: f32[125,8], index: 2, kind: input, shape index: {}]
  %s3 = inlined_call_operand.vmem [shape: f32[1,8], index: 3, kind: input, shape index: {}]
  %s4 = inlined_call_operand.vmem [shape: f32[216,216], index: 4, kind: input, shape index: {}]
  %s5 = inlined_call_operand.vmem [shape: f32[216,12], index: 5, kind: input, shape index: {}]
  %s6 = inlined_call_operand.vmem [shape: f32[1,12], index: 6, kind: input, shape index: {}]
  %s7 = inlined_call_operand.vmem [shape: f32[48,32], index: 7, kind: input, shape index: {}]
  %s8 = inlined_call_operand.vmem [shape: f32[1,32], index: 8, kind: input, shape index: {}]
  %s9 = inlined_call_operand.vmem [shape: f32[27,4], index: 9, kind: input, shape index: {}]
  %s10 = inlined_call_operand.vmem [shape: f32[1,4], index: 10, kind: input, shape index: {}]
  %s11 = inlined_call_operand.vmem [shape: f32[96,16], index: 11, kind: input, shape index: {}]
  %s12 = inlined_call_operand.vmem [shape: f32[1,16], index: 12, kind: input, shape index: {}]
  %s13 = inlined_call_operand.vmem [shape: f32[32,32], index: 13, kind: input, shape index: {}]
  %s14 = inlined_call_operand.vmem [shape: f32[16,32], index: 14, kind: input, shape index: {}]
  %s15 = inlined_call_operand.vmem [shape: f32[1,32], index: 15, kind: input, shape index: {}]
  %s16 = inlined_call_operand.vmem [shape: f32[32,2], index: 16, kind: input, shape index: {}]
  %s17 = inlined_call_operand.vmem [shape: f32[1,2], index: 17, kind: input, shape index: {}]
  %s18 = inlined_call_operand.hbm [shape: f32[2,2], index: 18, kind: output, shape index: {}]
  %s19 = sld [smem:[#allocation0]]
  $region82: #{c3d_forward.1} parent=0
    _
  %s21 = ssub.s32 1, %s19
  %s22 = scalar_select 0, %s21, %s19
  $region1: #{c3d_forward.1} parent=0
    #allocation2 [shape = 'u8[1024]{0}', space=vmem, size = 0x400, scoped, tag = 'output window, operand 0, single buffered']
    #allocation3 [shape = 's32[1]{0}', space=sflag, size = 0x4, scoped, tag = 'scoped memory for c3d_forward.1']
    %23 = vsyncpa [#allocation3], 0
    // Predicated region
    $region2: #{c3d_forward.1} parent=1 // pred_check
      _
    $region3: #{c3d_forward.1} parent=1 // pred_check_branch
      %25 = sbr.rel (0) target = $region5
    $region4: #{c3d_forward.1} parent=1 // pred_region
      _
    $region5: #{c3d_forward.1} parent=1 // pred_fallthru
      _
    // Predicated region
    $region6: #{c3d_forward.1} parent=1 // pred_check
      _
    $region7: #{c3d_forward.1} parent=1 // pred_check_branch
      %27 = sbr.rel (0) target = $region9
    $region8: #{c3d_forward.1} parent=1 // pred_region
      _
    $region9: #{c3d_forward.1} parent=1 // pred_fallthru
      _
    // Predicated region
    $region10: #{c3d_forward.1} parent=1 // pred_check
      _
    $region11: #{c3d_forward.1} parent=1 // pred_check_branch
      %29 = sbr.rel (0) target = $region13
    $region12: #{c3d_forward.1} parent=1 // pred_region
      _
    $region13: #{c3d_forward.1} parent=1 // pred_fallthru
      _
    // Predicated region
    $region14: #{c3d_forward.1} parent=1 // pred_check
      _
    $region15: #{c3d_forward.1} parent=1 // pred_check_branch
      %31 = sbr.rel (0) target = $region17
    $region16: #{c3d_forward.1} parent=1 // pred_region
      _
    $region17: #{c3d_forward.1} parent=1 // pred_fallthru
      _
    // Predicated region
    $region18: #{c3d_forward.1} parent=1 // pred_check
      _
    $region19: #{c3d_forward.1} parent=1 // pred_check_branch
      %33 = sbr.rel (0) target = $region21
    $region20: #{c3d_forward.1} parent=1 // pred_region
      _
    $region21: #{c3d_forward.1} parent=1 // pred_fallthru
      _
    // Predicated region
    $region22: #{c3d_forward.1} parent=1 // pred_check
      _
    $region23: #{c3d_forward.1} parent=1 // pred_check_branch
      %35 = sbr.rel (0) target = $region25
    $region24: #{c3d_forward.1} parent=1 // pred_region
      _
    $region25: #{c3d_forward.1} parent=1 // pred_fallthru
      _
    // Predicated region
    $region26: #{c3d_forward.1} parent=1 // pred_check
      _
    $region27: #{c3d_forward.1} parent=1 // pred_check_branch
      %37 = sbr.rel (0) target = $region29
    $region28: #{c3d_forward.1} parent=1 // pred_region
      _
    $region29: #{c3d_forward.1} parent=1 // pred_fallthru
      _
    // Predicated region
    $region30: #{c3d_forward.1} parent=1 // pred_check
      _
    $region31: #{c3d_forward.1} parent=1 // pred_check_branch
      %39 = sbr.rel (0) target = $region33
    $region32: #{c3d_forward.1} parent=1 // pred_region
      _
    $region33: #{c3d_forward.1} parent=1 // pred_fallthru
      _
    // Predicated region
    $region34: #{c3d_forward.1} parent=1 // pred_check
      _
    $region35: #{c3d_forward.1} parent=1 // pred_check_branch
      %41 = sbr.rel (0) target = $region37
    $region36: #{c3d_forward.1} parent=1 // pred_region
      _
    $region37: #{c3d_forward.1} parent=1 // pred_fallthru
      _
    // Predicated region
    $region38: #{c3d_forward.1} parent=1 // pred_check
      _
    $region39: #{c3d_forward.1} parent=1 // pred_check_branch
      %43 = sbr.rel (0) target = $region41
    $region40: #{c3d_forward.1} parent=1 // pred_region
      _
    $region41: #{c3d_forward.1} parent=1 // pred_fallthru
      _
    // Predicated region
    $region42: #{c3d_forward.1} parent=1 // pred_check
      _
    $region43: #{c3d_forward.1} parent=1 // pred_check_branch
      %45 = sbr.rel (0) target = $region45
    $region44: #{c3d_forward.1} parent=1 // pred_region
      _
    $region45: #{c3d_forward.1} parent=1 // pred_fallthru
      _
    // Predicated region
    $region46: #{c3d_forward.1} parent=1 // pred_check
      _
    $region47: #{c3d_forward.1} parent=1 // pred_check_branch
      %47 = sbr.rel (0) target = $region49
    $region48: #{c3d_forward.1} parent=1 // pred_region
      _
    $region49: #{c3d_forward.1} parent=1 // pred_fallthru
      _
    // Predicated region
    $region50: #{c3d_forward.1} parent=1 // pred_check
      _
    $region51: #{c3d_forward.1} parent=1 // pred_check_branch
      %49 = sbr.rel (0) target = $region53
    $region52: #{c3d_forward.1} parent=1 // pred_region
      _
    $region53: #{c3d_forward.1} parent=1 // pred_fallthru
      _
    // Predicated region
    $region54: #{c3d_forward.1} parent=1 // pred_check
      _
    $region55: #{c3d_forward.1} parent=1 // pred_check_branch
      %51 = sbr.rel (0) target = $region57
    $region56: #{c3d_forward.1} parent=1 // pred_region
      _
    $region57: #{c3d_forward.1} parent=1 // pred_fallthru
      _
    // Predicated region
    $region58: #{c3d_forward.1} parent=1 // pred_check
      _
    $region59: #{c3d_forward.1} parent=1 // pred_check_branch
      %53 = sbr.rel (0) target = $region61
    $region60: #{c3d_forward.1} parent=1 // pred_region
      _
    $region61: #{c3d_forward.1} parent=1 // pred_fallthru
      _
    // Predicated region
    $region62: #{c3d_forward.1} parent=1 // pred_check
      _
    $region63: #{c3d_forward.1} parent=1 // pred_check_branch
      %55 = sbr.rel (0) target = $region65
    $region64: #{c3d_forward.1} parent=1 // pred_region
      _
    $region65: #{c3d_forward.1} parent=1 // pred_fallthru
      _
    // Predicated region
    $region66: #{c3d_forward.1} parent=1 // pred_check
      _
    $region67: #{c3d_forward.1} parent=1 // pred_check_branch
      %57 = sbr.rel (0) target = $region69
    $region68: #{c3d_forward.1} parent=1 // pred_region
      _
    $region69: #{c3d_forward.1} parent=1 // pred_fallthru
      _
    // Predicated region
    $region70: #{c3d_forward.1} parent=1 // pred_check
      _
    $region71: #{c3d_forward.1} parent=1 // pred_check_branch
      %59 = sbr.rel (0) target = $region73
    $region72: #{c3d_forward.1} parent=1 // pred_region
      _
    $region73: #{c3d_forward.1} parent=1 // pred_fallthru
      _
    %v60 = vld [vmem:[%s0] sm:$0xff]
    %v61 = vld [vmem:[%s0 + $0x8] sm:$0xff]
    %v62 = vld [vmem:[%s0 + $0x10] sm:$0xff]
    %v63 = vld [vmem:[%s0 + $0x18] sm:$0xff]
    %v64 = vld [vmem:[%s0 + $0x20] sm:$0xff]
    %v65 = vld [vmem:[%s0 + $0x28] sm:$0xff]
    %v66 = vld [vmem:[%s0 + $0x30] sm:$0xff]
    %v67 = vld [vmem:[%s0 + $0x38] sm:$0xff]
    %v68 = vld [vmem:[%s0 + $0x40] sm:$0xff]
    %v69 = vld [vmem:[%s0 + $0x48] sm:$0xff]
    %v70 = vld [vmem:[%s0 + $0x50] sm:$0xff]
    %v71 = vld [vmem:[%s0 + $0x58] sm:$0xff]
    %v72 = vld [vmem:[%s0 + $0x60] sm:$0xff]
    %v73 = vld [vmem:[%s0 + $0x68] sm:$0xff]
    %v74 = vld [vmem:[%s0 + $0x70] sm:$0xff]
    %v75 = vld [vmem:[%s0 + $0x78] sm:$0xff]
    %v76 = vld [vmem:[%s0 + $0x80] sm:$0xff]
    %v77 = vld [vmem:[%s0 + $0x88] sm:$0xff]
    %v78 = vld [vmem:[%s0 + $0x90] sm:$0xff]
    %v79 = vld [vmem:[%s0 + $0x98] sm:$0xff]
    %v80 = vld [vmem:[%s0 + $0xa0] sm:$0xff]
    %v81 = vld [vmem:[%s0 + $0xa8] sm:$0xff]
    %v82 = vld [vmem:[%s0 + $0xb0] sm:$0xff]
    %v83 = vld [vmem:[%s0 + $0xb8] sm:$0xff]
    %v84 = vld [vmem:[%s0 + $0xc0] sm:$0xff]
    %v85 = vld [vmem:[%s0 + $0xc8] sm:$0xff]
    %v86 = vld [vmem:[%s0 + $0xd0] sm:$0xff]
    %v87 = vld [vmem:[%s2] sm:$0xff]
    %v88 = vld [vmem:[%s2 + $0x8] sm:$0xff]
    %v89 = vld [vmem:[%s2 + $0x10] sm:$0xff]
    %v90 = vld [vmem:[%s2 + $0x18] sm:$0xff]
    %v91 = vld [vmem:[%s2 + $0x20] sm:$0xff]
    %v92 = vld [vmem:[%s2 + $0x28] sm:$0xff]
    %v93 = vld [vmem:[%s2 + $0x30] sm:$0xff]
    %v94 = vld [vmem:[%s2 + $0x38] sm:$0xff]
    %v95 = vld [vmem:[%s2 + $0x40] sm:$0xff]
    %v96 = vld [vmem:[%s2 + $0x48] sm:$0xff]
    %v97 = vld [vmem:[%s2 + $0x50] sm:$0xff]
    %v98 = vld [vmem:[%s2 + $0x58] sm:$0xff]
    %v99 = vld [vmem:[%s2 + $0x60] sm:$0xff]
    %v100 = vld [vmem:[%s2 + $0x68] sm:$0xff]
    %v101 = vld [vmem:[%s2 + $0x70] sm:$0xff]
    %v102 = vld [vmem:[%s2 + $0x78] sm:$0x1f]
    %v103 = vld [vmem:[%s3] sm:$0x1]
    %v105 = vlaneseq
    %v106 = vshrl.u32 %v105, 7
    %v107 = vsub.s32 0, %v106
    %v108 = vrot.slane %v103, %v107
    %vm110 = vcmask 1022976
    %v112 = vsel %vm110, %v60, 0
    %v115 = vsel %vm110, %v61, 0
    %v118 = vsel %vm110, %v62, 0
    %v121 = vsel %vm110, %v63, 0
    %v124 = vsel %vm110, %v64, 0
    %v127 = vsel %vm110, %v65, 0
    %v130 = vsel %vm110, %v66, 0
    %v133 = vsel %vm110, %v67, 0
    %v136 = vsel %vm110, %v68, 0
    %v139 = vsel %vm110, %v69, 0
    %v142 = vsel %vm110, %v70, 0
    %v145 = vsel %vm110, %v71, 0
    %v148 = vsel %vm110, %v72, 0
    %v151 = vsel %vm110, %v73, 0
    %v154 = vsel %vm110, %v74, 0
    %v157 = vsel %vm110, %v75, 0
    %v160 = vsel %vm110, %v76, 0
    %v163 = vsel %vm110, %v77, 0
    %v166 = vsel %vm110, %v78, 0
    %v169 = vsel %vm110, %v79, 0
    %v172 = vsel %vm110, %v80, 0
    %v175 = vsel %vm110, %v81, 0
    %v178 = vsel %vm110, %v82, 0
    %v181 = vsel %vm110, %v83, 0
    %v184 = vsel %vm110, %v84, 0
    %v187 = vsel %vm110, %v85, 0
    %v190 = vsel %vm110, %v86, 0
    %vm192 = vcmask 1044480
    %v194 = vsel %vm192, %v102, 0
    %196 = vmatprep.subr.mxu0 0.0
    %197 = vmatpush1.msra.mxu0 %v87
    %198 = vmatprep.subr.mxu0 0.0
    %199 = vmatpush1.msra.mxu0 %v88
    %200 = vmatprep.subr.mxu0 0.0
    %201 = vmatpush1.msra.mxu0 %v89
    %202 = vmatprep.subr.mxu0 0.0
    %203 = vmatpush1.msra.mxu0 %v90
    %204 = vmatprep.subr.mxu0 0.0
    %205 = vmatpush1.msra.mxu0 %v91
    %206 = vmatprep.subr.mxu0 0.0
    %207 = vmatpush1.msra.mxu0 %v92
    %208 = vmatprep.subr.mxu0 0.0
    %209 = vmatpush1.msra.mxu0 %v93
    %210 = vmatprep.subr.mxu0 0.0
    %211 = vmatpush1.msra.mxu0 %v94
    %212 = vmatprep.subr.mxu0 0.0
    %213 = vmatpush1.msra.mxu0 %v95
    %214 = vmatprep.subr.mxu0 0.0
    %215 = vmatpush1.msra.mxu0 %v96
    %216 = vmatprep.subr.mxu0 0.0
    %217 = vmatpush1.msra.mxu0 %v97
    %218 = vmatprep.subr.mxu0 0.0
    %219 = vmatpush1.msra.mxu0 %v98
    %220 = vmatprep.subr.mxu0 0.0
    %221 = vmatpush1.msra.mxu0 %v99
    %222 = vmatprep.subr.mxu0 0.0
    %223 = vmatpush1.msra.mxu0 %v100
    %224 = vmatprep.subr.mxu0 0.0
    %225 = vmatpush1.msra.mxu0 %v101
    %226 = vmatprep.subr.mxu0 0.0
    %227 = vmatpush1.msra.mxu0 %v194
    %228 = vmatprep.subr.mxu0 0.0
    %229 = vmatpush1.msra.mxu0 0.0
    %230 = vmatprep.subr.mxu0 0.0
    %231 = vmatpush1.msra.mxu0 0.0
    %232 = vmatprep.subr.mxu0 0.0
    %233 = vmatpush1.msra.mxu0 0.0
    %234 = vmatprep.subr.mxu0 0.0
    %235 = vmatpush1.msra.mxu0 0.0
    %236 = vmatprep.subr.mxu0 0.0
    %237 = vmatpush1.msra.mxu0 0.0
    %238 = vmatprep.subr.mxu0 0.0
    %239 = vmatpush1.msra.mxu0 0.0
    %240 = vmatprep.subr.mxu0 0.0
    %241 = vmatpush1.msra.mxu0 0.0
    %242 = vmatprep.subr.mxu0 0.0
    %243 = vmatpush1.msra.mxu0 0.0
    %244 = vmatprep.subr.mxu0 0.0
    %245 = vmatpush1.msra.mxu0 0.0
    %246 = vmatprep.subr.mxu0 0.0
    %247 = vmatpush1.msra.mxu0 0.0
    %248 = vmatprep.subr.mxu0 0.0
    %249 = vmatpush1.msra.mxu0 0.0
    %250 = vmatprep.subr.mxu0 0.0
    %251 = vmatpush1.msra.mxu0 0.0
    %252 = vmatprep.subr.mxu0 0.0
    %253 = vmatpush1.msra.mxu0 0.0
    %254 = vmatprep.subr.mxu0 0.0
    %255 = vmatpush1.msra.mxu0 0.0
    %256 = vmatprep.subr.mxu0 0.0
    %257 = vmatpush1.msra.mxu0 0.0
    %258 = vmatprep.subr.mxu0 0.0
    %259 = vmatpush1.msra.mxu0 0.0
    %260 = vmatprep.mubr.f32.mxu0 0.0
    %261 = vmatmul.mubr.f32.gmra.mrb[0].mxu0 %v112
    %v262 = vpop.f32.mrb[0].mxu0
    %v263 = vadd.f32 %v108, %v262
    %v264 = vpop.f32.mrb[0].mxu0
    %265 = vmatprep.mubr.f32.mxu0 0.0
    %266 = vmatmul.mubr.f32.gmra.mrb[0].mxu0 %v115
    %v267 = vpop.f32.mrb[0].mxu0
    %v268 = vadd.f32 %v108, %v267
    %v269 = vpop.f32.mrb[0].mxu0
    %270 = vmatprep.mubr.f32.mxu0 0.0
    %271 = vmatmul.mubr.f32.gmra.mrb[0].mxu0 %v118
    %v272 = vpop.f32.mrb[0].mxu0
    %v273 = vadd.f32 %v108, %v272
    %v274 = vpop.f32.mrb[0].mxu0
    %275 = vmatprep.mubr.f32.mxu0 0.0
    %276 = vmatmul.mubr.f32.gmra.mrb[0].mxu0 %v121
    %v277 = vpop.f32.mrb[0].mxu0
    %v278 = vadd.f32 %v108, %v277
    %v279 = vpop.f32.mrb[0].mxu0
    %280 = vmatprep.mubr.f32.mxu0 0.0
    %281 = vmatmul.mubr.f32.gmra.mrb[0].mxu0 %v124
    %v282 = vpop.f32.mrb[0].mxu0
    %v283 = vadd.f32 %v108, %v282
    %v284 = vpop.f32.mrb[0].mxu0
    %285 = vmatprep.mubr.f32.mxu0 0.0
    %286 = vmatmul.mubr.f32.gmra.mrb[0].mxu0 %v127
    %v287 = vpop.f32.mrb[0].mxu0
    %v288 = vadd.f32 %v108, %v287
    %v289 = vpop.f32.mrb[0].mxu0
    %290 = vmatprep.mubr.f32.mxu0 0.0
    %291 = vmatmul.mubr.f32.gmra.mrb[0].mxu0 %v130
    %v292 = vpop.f32.mrb[0].mxu0
    %v293 = vadd.f32 %v108, %v292
    %v294 = vpop.f32.mrb[0].mxu0
    %295 = vmatprep.mubr.f32.mxu0 0.0
    %296 = vmatmul.mubr.f32.gmra.mrb[0].mxu0 %v133
    %v297 = vpop.f32.mrb[0].mxu0
    %v298 = vadd.f32 %v108, %v297
    %v299 = vpop.f32.mrb[0].mxu0
    %300 = vmatprep.mubr.f32.mxu0 0.0
    %301 = vmatmul.mubr.f32.gmra.mrb[0].mxu0 %v136
    %v302 = vpop.f32.mrb[0].mxu0
    %v303 = vadd.f32 %v108, %v302
    %v304 = vpop.f32.mrb[0].mxu0
    %305 = vmatprep.mubr.f32.mxu0 0.0
    %306 = vmatmul.mubr.f32.gmra.mrb[0].mxu0 %v139
    %v307 = vpop.f32.mrb[0].mxu0
    %v308 = vadd.f32 %v108, %v307
    %v309 = vpop.f32.mrb[0].mxu0
    %310 = vmatprep.mubr.f32.mxu0 0.0
    %311 = vmatmul.mubr.f32.gmra.mrb[0].mxu0 %v142
    %v312 = vpop.f32.mrb[0].mxu0
    %v313 = vadd.f32 %v108, %v312
    %v314 = vpop.f32.mrb[0].mxu0
    %315 = vmatprep.mubr.f32.mxu0 0.0
    %316 = vmatmul.mubr.f32.gmra.mrb[0].mxu0 %v145
    %v317 = vpop.f32.mrb[0].mxu0
    %v318 = vadd.f32 %v108, %v317
    %v319 = vpop.f32.mrb[0].mxu0
    %320 = vmatprep.mubr.f32.mxu0 0.0
    %321 = vmatmul.mubr.f32.gmra.mrb[0].mxu0 %v148
    %v322 = vpop.f32.mrb[0].mxu0
    %v323 = vadd.f32 %v108, %v322
    %v324 = vpop.f32.mrb[0].mxu0
    %325 = vmatprep.mubr.f32.mxu0 0.0
    %326 = vmatmul.mubr.f32.gmra.mrb[0].mxu0 %v151
    %v327 = vpop.f32.mrb[0].mxu0
    %v328 = vadd.f32 %v108, %v327
    %v329 = vpop.f32.mrb[0].mxu0
    %330 = vmatprep.mubr.f32.mxu0 0.0
    %331 = vmatmul.mubr.f32.gmra.mrb[0].mxu0 %v154
    %v332 = vpop.f32.mrb[0].mxu0
    %v333 = vadd.f32 %v108, %v332
    %v334 = vpop.f32.mrb[0].mxu0
    %335 = vmatprep.mubr.f32.mxu0 0.0
    %336 = vmatmul.mubr.f32.gmra.mrb[0].mxu0 %v157
    %v337 = vpop.f32.mrb[0].mxu0
    %v338 = vadd.f32 %v108, %v337
    %v339 = vpop.f32.mrb[0].mxu0
    %340 = vmatprep.mubr.f32.mxu0 0.0
    %341 = vmatmul.mubr.f32.gmra.mrb[0].mxu0 %v160
    %v342 = vpop.f32.mrb[0].mxu0
    %v343 = vadd.f32 %v108, %v342
    %v344 = vpop.f32.mrb[0].mxu0
    %345 = vmatprep.mubr.f32.mxu0 0.0
    %346 = vmatmul.mubr.f32.gmra.mrb[0].mxu0 %v163
    %v347 = vpop.f32.mrb[0].mxu0
    %v348 = vadd.f32 %v108, %v347
    %v349 = vpop.f32.mrb[0].mxu0
    %350 = vmatprep.mubr.f32.mxu0 0.0
    %351 = vmatmul.mubr.f32.gmra.mrb[0].mxu0 %v166
    %v352 = vpop.f32.mrb[0].mxu0
    %v353 = vadd.f32 %v108, %v352
    %v354 = vpop.f32.mrb[0].mxu0
    %355 = vmatprep.mubr.f32.mxu0 0.0
    %356 = vmatmul.mubr.f32.gmra.mrb[0].mxu0 %v169
    %v357 = vpop.f32.mrb[0].mxu0
    %v358 = vadd.f32 %v108, %v357
    %v359 = vpop.f32.mrb[0].mxu0
    %360 = vmatprep.mubr.f32.mxu0 0.0
    %361 = vmatmul.mubr.f32.gmra.mrb[0].mxu0 %v172
    %v362 = vpop.f32.mrb[0].mxu0
    %v363 = vadd.f32 %v108, %v362
    %v364 = vpop.f32.mrb[0].mxu0
    %365 = vmatprep.mubr.f32.mxu0 0.0
    %366 = vmatmul.mubr.f32.gmra.mrb[0].mxu0 %v175
    %v367 = vpop.f32.mrb[0].mxu0
    %v368 = vadd.f32 %v108, %v367
    %v369 = vpop.f32.mrb[0].mxu0
    %370 = vmatprep.mubr.f32.mxu0 0.0
    %371 = vmatmul.mubr.f32.gmra.mrb[0].mxu0 %v178
    %v372 = vpop.f32.mrb[0].mxu0
    %v373 = vadd.f32 %v108, %v372
    %v374 = vpop.f32.mrb[0].mxu0
    %375 = vmatprep.mubr.f32.mxu0 0.0
    %376 = vmatmul.mubr.f32.gmra.mrb[0].mxu0 %v181
    %v377 = vpop.f32.mrb[0].mxu0
    %v378 = vadd.f32 %v108, %v377
    %v379 = vpop.f32.mrb[0].mxu0
    %380 = vmatprep.mubr.f32.mxu0 0.0
    %381 = vmatmul.mubr.f32.gmra.mrb[0].mxu0 %v184
    %v382 = vpop.f32.mrb[0].mxu0
    %v383 = vadd.f32 %v108, %v382
    %v384 = vpop.f32.mrb[0].mxu0
    %385 = vmatprep.mubr.f32.mxu0 0.0
    %386 = vmatmul.mubr.f32.gmra.mrb[0].mxu0 %v187
    %v387 = vpop.f32.mrb[0].mxu0
    %v388 = vadd.f32 %v108, %v387
    %v389 = vpop.f32.mrb[0].mxu0
    %390 = vmatprep.mubr.f32.mxu0 0.0
    %391 = vmatmul.mubr.f32.gmra.mrb[0].mxu0 %v190
    %v392 = vpop.f32.mrb[0].mxu0
    %v393 = vadd.f32 %v108, %v392
    %v394 = vpop.f32.mrb[0].mxu0
    %395 = vdwg.mxu0
    %v396 = vmax.f32 %v263, 0.0
    %v397 = vmax.f32 %v268, 0.0
    %v398 = vmax.f32 %v273, 0.0
    %v399 = vmax.f32 %v278, 0.0
    %v400 = vmax.f32 %v283, 0.0
    %v401 = vmax.f32 %v288, 0.0
    %v402 = vmax.f32 %v293, 0.0
    %v403 = vmax.f32 %v298, 0.0
    %v404 = vmax.f32 %v303, 0.0
    %v405 = vmax.f32 %v308, 0.0
    %v406 = vmax.f32 %v313, 0.0
    %v407 = vmax.f32 %v318, 0.0
    %v408 = vmax.f32 %v323, 0.0
    %v409 = vmax.f32 %v328, 0.0
    %v410 = vmax.f32 %v333, 0.0
    %v411 = vmax.f32 %v338, 0.0
    %v412 = vmax.f32 %v343, 0.0
    %v413 = vmax.f32 %v348, 0.0
    %v414 = vmax.f32 %v353, 0.0
    %v415 = vmax.f32 %v358, 0.0
    %v416 = vmax.f32 %v363, 0.0
    %v417 = vmax.f32 %v368, 0.0
    %v418 = vmax.f32 %v373, 0.0
    %v419 = vmax.f32 %v378, 0.0
    %v420 = vmax.f32 %v383, 0.0
    %v421 = vmax.f32 %v388, 0.0
    %v422 = vmax.f32 %v393, 0.0
    %v423 = vld [vmem:[%s4] sm:$0xff]
    %v424 = vld [vmem:[%s4 + $0x8] sm:$0xff]
    %v425 = vld [vmem:[%s4 + $0x10] sm:$0xff]
    %v426 = vld [vmem:[%s4 + $0x18] sm:$0xff]
    %v427 = vld [vmem:[%s4 + $0x20] sm:$0xff]
    %v428 = vld [vmem:[%s4 + $0x28] sm:$0xff]
    %v429 = vld [vmem:[%s4 + $0x30] sm:$0xff]
    %v430 = vld [vmem:[%s4 + $0x38] sm:$0xff]
    %v431 = vld [vmem:[%s4 + $0x40] sm:$0xff]
    %v432 = vld [vmem:[%s4 + $0x48] sm:$0xff]
    %v433 = vld [vmem:[%s4 + $0x50] sm:$0xff]
    %v434 = vld [vmem:[%s4 + $0x58] sm:$0xff]
    %v435 = vld [vmem:[%s4 + $0x60] sm:$0xff]
    %v436 = vld [vmem:[%s4 + $0x68] sm:$0xff]
    %v437 = vld [vmem:[%s4 + $0x70] sm:$0xff]
    %v438 = vld [vmem:[%s4 + $0x78] sm:$0xff]
    %v439 = vld [vmem:[%s4 + $0x80] sm:$0xff]
    %v440 = vld [vmem:[%s4 + $0x88] sm:$0xff]
    %v441 = vld [vmem:[%s4 + $0x90] sm:$0xff]
    %v442 = vld [vmem:[%s4 + $0x98] sm:$0xff]
    %v443 = vld [vmem:[%s4 + $0xa0] sm:$0xff]
    %v444 = vld [vmem:[%s4 + $0xa8] sm:$0xff]
    %v445 = vld [vmem:[%s4 + $0xb0] sm:$0xff]
    %v446 = vld [vmem:[%s4 + $0xb8] sm:$0xff]
    %v447 = vld [vmem:[%s4 + $0xc0] sm:$0xff]
    %v448 = vld [vmem:[%s4 + $0xc8] sm:$0xff]
    %v449 = vld [vmem:[%s4 + $0xd0] sm:$0xff]
    %v450 = vld [vmem:[%s4 + $0xd8] sm:$0xff]
    %v451 = vld [vmem:[%s4 + $0xe0] sm:$0xff]
    %v452 = vld [vmem:[%s4 + $0xe8] sm:$0xff]
    %v453 = vld [vmem:[%s4 + $0xf0] sm:$0xff]
    %v454 = vld [vmem:[%s4 + $0xf8] sm:$0xff]
    %v455 = vld [vmem:[%s4 + $0x100] sm:$0xff]
    %v456 = vld [vmem:[%s4 + $0x108] sm:$0xff]
    %v457 = vld [vmem:[%s4 + $0x110] sm:$0xff]
    %v458 = vld [vmem:[%s4 + $0x118] sm:$0xff]
    %v459 = vld [vmem:[%s4 + $0x120] sm:$0xff]
    %v460 = vld [vmem:[%s4 + $0x128] sm:$0xff]
    %v461 = vld [vmem:[%s4 + $0x130] sm:$0xff]
    %v462 = vld [vmem:[%s4 + $0x138] sm:$0xff]
    %v463 = vld [vmem:[%s4 + $0x140] sm:$0xff]
    %v464 = vld [vmem:[%s4 + $0x148] sm:$0xff]
    %v465 = vld [vmem:[%s4 + $0x150] sm:$0xff]
    %v466 = vld [vmem:[%s4 + $0x158] sm:$0xff]
    %v467 = vld [vmem:[%s4 + $0x160] sm:$0xff]
    %v468 = vld [vmem:[%s4 + $0x168] sm:$0xff]
    %v469 = vld [vmem:[%s4 + $0x170] sm:$0xff]
    %v470 = vld [vmem:[%s4 + $0x178] sm:$0xff]
    %v471 = vld [vmem:[%s4 + $0x180] sm:$0xff]
    %v472 = vld [vmem:[%s4 + $0x188] sm:$0xff]
    %v473 = vld [vmem:[%s4 + $0x190] sm:$0xff]
    %v474 = vld [vmem:[%s4 + $0x198] sm:$0xff]
    %v475 = vld [vmem:[%s4 + $0x1a0] sm:$0xff]
    %v476 = vld [vmem:[%s4 + $0x1a8] sm:$0xff]
    %vm477 = vcmask 719872
    %v479 = vsel %vm477, %v424, 0
    %v482 = vsel %vm477, %v426, 0
    %v485 = vsel %vm477, %v428, 0
    %v488 = vsel %vm477, %v430, 0
    %v491 = vsel %vm477, %v432, 0
    %v494 = vsel %vm477, %v434, 0
    %v497 = vsel %vm477, %v436, 0
    %v500 = vsel %vm477, %v438, 0
    %v503 = vsel %vm477, %v440, 0
    %v506 = vsel %vm477, %v442, 0
    %v509 = vsel %vm477, %v444, 0
    %v512 = vsel %vm477, %v446, 0
    %v515 = vsel %vm477, %v448, 0
    %v518 = vsel %vm477, %v450, 0
    %v521 = vsel %vm477, %v452, 0
    %v524 = vsel %vm477, %v454, 0
    %v527 = vsel %vm477, %v456, 0
    %v530 = vsel %vm477, %v458, 0
    %v533 = vsel %vm477, %v460, 0
    %v536 = vsel %vm477, %v462, 0
    %v539 = vsel %vm477, %v464, 0
    %v542 = vsel %vm477, %v466, 0
    %v545 = vsel %vm477, %v468, 0
    %v548 = vsel %vm477, %v470, 0
    %v551 = vsel %vm477, %v472, 0
    %v554 = vsel %vm477, %v474, 0
    %v557 = vsel %vm477, %v476, 0
    %559 = vmatprep.subr.mxu0 0.0
    %560 = vmatpush1.msra.mxu0 %v396
    %561 = vmatprep.subr.mxu0 0.0
    %562 = vmatpush1.msra.mxu0 %v397
    %563 = vmatprep.subr.mxu0 0.0
    %564 = vmatpush1.msra.mxu0 %v398
    %565 = vmatprep.subr.mxu0 0.0
    %566 = vmatpush1.msra.mxu0 %v399
    %567 = vmatprep.subr.mxu0 0.0
    %568 = vmatpush1.msra.mxu0 %v400
    %569 = vmatprep.subr.mxu0 0.0
    %570 = vmatpush1.msra.mxu0 %v401
    %571 = vmatprep.subr.mxu0 0.0
    %572 = vmatpush1.msra.mxu0 %v402
    %573 = vmatprep.subr.mxu0 0.0
    %574 = vmatpush1.msra.mxu0 %v403
    %575 = vmatprep.subr.mxu0 0.0
    %576 = vmatpush1.msra.mxu0 %v404
    %577 = vmatprep.subr.mxu0 0.0
    %578 = vmatpush1.msra.mxu0 %v405
    %579 = vmatprep.subr.mxu0 0.0
    %580 = vmatpush1.msra.mxu0 %v406
    %581 = vmatprep.subr.mxu0 0.0
    %582 = vmatpush1.msra.mxu0 %v407
    %583 = vmatprep.subr.mxu0 0.0
    %584 = vmatpush1.msra.mxu0 %v408
    %585 = vmatprep.subr.mxu0 0.0
    %586 = vmatpush1.msra.mxu0 %v409
    %587 = vmatprep.subr.mxu0 0.0
    %588 = vmatpush1.msra.mxu0 %v410
    %589 = vmatprep.subr.mxu0 0.0
    %590 = vmatpush1.msra.mxu0 %v411
    %591 = vmatprep.subr.mxu0 0.0
    %592 = vmatpush1.msra.mxu0 %v412
    %593 = vmatprep.subr.mxu0 0.0
    %594 = vmatpush1.msra.mxu0 %v413
    %595 = vmatprep.subr.mxu0 0.0
    %596 = vmatpush1.msra.mxu0 %v414
    %597 = vmatprep.subr.mxu0 0.0
    %598 = vmatpush1.msra.mxu0 %v415
    %599 = vmatprep.subr.mxu0 0.0
    %600 = vmatpush1.msra.mxu0 %v416
    %601 = vmatprep.subr.mxu0 0.0
    %602 = vmatpush1.msra.mxu0 %v417
    %603 = vmatprep.subr.mxu0 0.0
    %604 = vmatpush1.msra.mxu0 %v418
    %605 = vmatprep.subr.mxu0 0.0
    %606 = vmatpush1.msra.mxu0 %v419
    %607 = vmatprep.subr.mxu0 0.0
    %608 = vmatpush1.msra.mxu0 %v420
    %609 = vmatprep.subr.mxu0 0.0
    %610 = vmatpush1.msra.mxu0 %v421
    %611 = vmatprep.subr.mxu0 0.0
    %612 = vmatpush1.msra.mxu0 %v422
    %613 = vmatprep.subr.mxu0 0.0
    %614 = vmatpush1.msra.mxu0 0.0
    %615 = vmatprep.subr.mxu0 0.0
    %616 = vmatpush1.msra.mxu0 0.0
    %617 = vmatprep.subr.mxu0 0.0
    %618 = vmatpush1.msra.mxu0 0.0
    %619 = vmatprep.subr.mxu0 0.0
    %620 = vmatpush1.msra.mxu0 0.0
    %621 = vmatprep.subr.mxu0 0.0
    %622 = vmatpush1.msra.mxu0 0.0
    %623 = vmatprep.mubr.f32.mxu0 %v479
    %624 = vmatmul.mubr.f32.gmra.mrb[0].mxu0 %v423
    %v625 = vpop.f32.mrb[0].mxu0
    %v626 = vadd.f32 0.0, %v625
    %v627 = vpop.f32.mrb[0].mxu0
    %628 = vmatprep.mubr.f32.mxu0 %v482
    %629 = vmatmul.mubr.f32.gmra.mrb[0].mxu0 %v425
    %v630 = vpop.f32.mrb[0].mxu0
    %v631 = vadd.f32 0.0, %v630
    %v632 = vpop.f32.mrb[0].mxu0
    %633 = vmatprep.mubr.f32.mxu0 %v485
    %634 = vmatmul.mubr.f32.gmra.mrb[0].mxu0 %v427
    %v635 = vpop.f32.mrb[0].mxu0
    %v636 = vadd.f32 0.0, %v635
    %v637 = vpop.f32.mrb[0].mxu0
    %638 = vmatprep.mubr.f32.mxu0 %v488
    %639 = vmatmul.mubr.f32.gmra.mrb[0].mxu0 %v429
    %v640 = vpop.f32.mrb[0].mxu0
    %v641 = vadd.f32 0.0, %v640
    %v642 = vpop.f32.mrb[0].mxu0
    %643 = vmatprep.mubr.f32.mxu0 %v491
    %644 = vmatmul.mubr.f32.gmra.mrb[0].mxu0 %v431
    %v645 = vpop.f32.mrb[0].mxu0
    %v646 = vadd.f32 0.0, %v645
    %v647 = vpop.f32.mrb[0].mxu0
    %648 = vmatprep.mubr.f32.mxu0 %v494
    %649 = vmatmul.mubr.f32.gmra.mrb[0].mxu0 %v433
    %v650 = vpop.f32.mrb[0].mxu0
    %v651 = vadd.f32 0.0, %v650
    %v652 = vpop.f32.mrb[0].mxu0
    %653 = vmatprep.mubr.f32.mxu0 %v497
    %654 = vmatmul.mubr.f32.gmra.mrb[0].mxu0 %v435
    %v655 = vpop.f32.mrb[0].mxu0
    %v656 = vadd.f32 0.0, %v655
    %v657 = vpop.f32.mrb[0].mxu0
    %658 = vmatprep.mubr.f32.mxu0 %v500
    %659 = vmatmul.mubr.f32.gmra.mrb[0].mxu0 %v437
    %v660 = vpop.f32.mrb[0].mxu0
    %v661 = vadd.f32 0.0, %v660
    %v662 = vpop.f32.mrb[0].mxu0
    %663 = vmatprep.mubr.f32.mxu0 %v503
    %664 = vmatmul.mubr.f32.gmra.mrb[0].mxu0 %v439
    %v665 = vpop.f32.mrb[0].mxu0
    %v666 = vadd.f32 0.0, %v665
    %v667 = vpop.f32.mrb[0].mxu0
    %668 = vmatprep.mubr.f32.mxu0 %v506
    %669 = vmatmul.mubr.f32.gmra.mrb[0].mxu0 %v441
    %v670 = vpop.f32.mrb[0].mxu0
    %v671 = vadd.f32 0.0, %v670
    %v672 = vpop.f32.mrb[0].mxu0
    %673 = vmatprep.mubr.f32.mxu0 %v509
    %674 = vmatmul.mubr.f32.gmra.mrb[0].mxu0 %v443
    %v675 = vpop.f32.mrb[0].mxu0
    %v676 = vadd.f32 0.0, %v675
    %v677 = vpop.f32.mrb[0].mxu0
    %678 = vmatprep.mubr.f32.mxu0 %v512
    %679 = vmatmul.mubr.f32.gmra.mrb[0].mxu0 %v445
    %v680 = vpop.f32.mrb[0].mxu0
    %v681 = vadd.f32 0.0, %v680
    %v682 = vpop.f32.mrb[0].mxu0
    %683 = vmatprep.mubr.f32.mxu0 %v515
    %684 = vmatmul.mubr.f32.gmra.mrb[0].mxu0 %v447
    %v685 = vpop.f32.mrb[0].mxu0
    %v686 = vadd.f32 0.0, %v685
    %v687 = vpop.f32.mrb[0].mxu0
    %688 = vmatprep.mubr.f32.mxu0 %v518
    %689 = vmatmul.mubr.f32.gmra.mrb[0].mxu0 %v449
    %v690 = vpop.f32.mrb[0].mxu0
    %v691 = vadd.f32 0.0, %v690
    %v692 = vpop.f32.mrb[0].mxu0
    %693 = vmatprep.mubr.f32.mxu0 %v521
    %694 = vmatmul.mubr.f32.gmra.mrb[0].mxu0 %v451
    %v695 = vpop.f32.mrb[0].mxu0
    %v696 = vadd.f32 0.0, %v695
    %v697 = vpop.f32.mrb[0].mxu0
    %698 = vmatprep.mubr.f32.mxu0 %v524
    %699 = vmatmul.mubr.f32.gmra.mrb[0].mxu0 %v453
    %v700 = vpop.f32.mrb[0].mxu0
    %v701 = vadd.f32 0.0, %v700
    %v702 = vpop.f32.mrb[0].mxu0
    %703 = vmatprep.mubr.f32.mxu0 %v527
    %704 = vmatmul.mubr.f32.gmra.mrb[0].mxu0 %v455
    %v705 = vpop.f32.mrb[0].mxu0
    %v706 = vadd.f32 0.0, %v705
    %v707 = vpop.f32.mrb[0].mxu0
    %708 = vmatprep.mubr.f32.mxu0 %v530
    %709 = vmatmul.mubr.f32.gmra.mrb[0].mxu0 %v457
    %v710 = vpop.f32.mrb[0].mxu0
    %v711 = vadd.f32 0.0, %v710
    %v712 = vpop.f32.mrb[0].mxu0
    %713 = vmatprep.mubr.f32.mxu0 %v533
    %714 = vmatmul.mubr.f32.gmra.mrb[0].mxu0 %v459
    %v715 = vpop.f32.mrb[0].mxu0
    %v716 = vadd.f32 0.0, %v715
    %v717 = vpop.f32.mrb[0].mxu0
    %718 = vmatprep.mubr.f32.mxu0 %v536
    %719 = vmatmul.mubr.f32.gmra.mrb[0].mxu0 %v461
    %v720 = vpop.f32.mrb[0].mxu0
    %v721 = vadd.f32 0.0, %v720
    %v722 = vpop.f32.mrb[0].mxu0
    %723 = vmatprep.mubr.f32.mxu0 %v539
    %724 = vmatmul.mubr.f32.gmra.mrb[0].mxu0 %v463
    %v725 = vpop.f32.mrb[0].mxu0
    %v726 = vadd.f32 0.0, %v725
    %v727 = vpop.f32.mrb[0].mxu0
    %728 = vmatprep.mubr.f32.mxu0 %v542
    %729 = vmatmul.mubr.f32.gmra.mrb[0].mxu0 %v465
    %v730 = vpop.f32.mrb[0].mxu0
    %v731 = vadd.f32 0.0, %v730
    %v732 = vpop.f32.mrb[0].mxu0
    %733 = vmatprep.mubr.f32.mxu0 %v545
    %734 = vmatmul.mubr.f32.gmra.mrb[0].mxu0 %v467
    %v735 = vpop.f32.mrb[0].mxu0
    %v736 = vadd.f32 0.0, %v735
    %v737 = vpop.f32.mrb[0].mxu0
    %738 = vmatprep.mubr.f32.mxu0 %v548
    %739 = vmatmul.mubr.f32.gmra.mrb[0].mxu0 %v469
    %v740 = vpop.f32.mrb[0].mxu0
    %v741 = vadd.f32 0.0, %v740
    %v742 = vpop.f32.mrb[0].mxu0
    %743 = vmatprep.mubr.f32.mxu0 %v551
    %744 = vmatmul.mubr.f32.gmra.mrb[0].mxu0 %v471
    %v745 = vpop.f32.mrb[0].mxu0
    %v746 = vadd.f32 0.0, %v745
    %v747 = vpop.f32.mrb[0].mxu0
    %748 = vmatprep.mubr.f32.mxu0 %v554
    %749 = vmatmul.mubr.f32.gmra.mrb[0].mxu0 %v473
    %v750 = vpop.f32.mrb[0].mxu0
    %v751 = vadd.f32 0.0, %v750
    %v752 = vpop.f32.mrb[0].mxu0
    %753 = vmatprep.mubr.f32.mxu0 %v557
    %754 = vmatmul.mubr.f32.gmra.mrb[0].mxu0 %v475
    %v755 = vpop.f32.mrb[0].mxu0
    %v756 = vadd.f32 0.0, %v755
    %v757 = vpop.f32.mrb[0].mxu0
    %758 = vdwg.mxu0
    %v759 = vld [vmem:[%s5] sm:$0xff]
    %v760 = vld [vmem:[%s5 + $0x8] sm:$0xff]
    %vm761 = vcmask 64512
    %v763 = vsel %vm761, %v631, 0
    %765 = vmatprep.subr.mxu0 0.0
    %766 = vmatpush1.msra.mxu0 %v760
    %767 = vmatprep.subr.mxu0 0.0
    %768 = vmatpush1.msra.mxu0 0.0
    %769 = vmatprep.subr.mxu0 0.0
    %770 = vmatpush1.msra.mxu0 0.0
    %771 = vmatprep.subr.mxu0 0.0
    %772 = vmatpush1.msra.mxu0 0.0
    %773 = vmatprep.subr.mxu0 0.0
    %774 = vmatpush1.msra.mxu0 0.0
    %775 = vmatprep.subr.mxu0 0.0
    %776 = vmatpush1.msra.mxu0 0.0
    %777 = vmatprep.subr.mxu0 0.0
    %778 = vmatpush1.msra.mxu0 0.0
    %779 = vmatprep.subr.mxu0 0.0
    %780 = vmatpush1.msra.mxu0 0.0
    %781 = vmatprep.subr.mxu0 0.0
    %782 = vmatpush1.msra.mxu0 0.0
    %783 = vmatprep.subr.mxu0 0.0
    %784 = vmatpush1.msra.mxu0 0.0
    %785 = vmatprep.subr.mxu0 0.0
    %786 = vmatpush1.msra.mxu0 0.0
    %787 = vmatprep.subr.mxu0 0.0
    %788 = vmatpush1.msra.mxu0 0.0
    %789 = vmatprep.subr.mxu0 0.0
    %790 = vmatpush1.msra.mxu0 0.0
    %791 = vmatprep.subr.mxu0 0.0
    %792 = vmatpush1.msra.mxu0 0.0
    %793 = vmatprep.subr.mxu0 0.0
    %794 = vmatpush1.msra.mxu0 0.0
    %795 = vmatprep.subr.mxu0 0.0
    %796 = vmatpush1.msra.mxu0 0.0
    %797 = vmatprep.subr.mxu0 0.0
    %798 = vmatpush1.msra.mxu0 0.0
    %799 = vmatprep.subr.mxu0 0.0
    %800 = vmatpush1.msra.mxu0 0.0
    %801 = vmatprep.subr.mxu0 0.0
    %802 = vmatpush1.msra.mxu0 0.0
    %803 = vmatprep.subr.mxu0 0.0
    %804 = vmatpush1.msra.mxu0 0.0
    %805 = vmatprep.subr.mxu0 0.0
    %806 = vmatpush1.msra.mxu0 0.0
    %807 = vmatprep.subr.mxu0 0.0
    %808 = vmatpush1.msra.mxu0 0.0
    %809 = vmatprep.subr.mxu0 0.0
    %810 = vmatpush1.msra.mxu0 0.0
    %811 = vmatprep.subr.mxu0 0.0
    %812 = vmatpush1.msra.mxu0 0.0
    %813 = vmatprep.subr.mxu0 0.0
    %814 = vmatpush1.msra.mxu0 0.0
    %815 = vmatprep.subr.mxu0 0.0
    %816 = vmatpush1.msra.mxu0 0.0
    %817 = vmatprep.subr.mxu0 0.0
    %818 = vmatpush1.msra.mxu0 0.0
    %819 = vmatprep.subr.mxu0 0.0
    %820 = vmatpush1.msra.mxu0 0.0
    %821 = vmatprep.subr.mxu0 0.0
    %822 = vmatpush1.msra.mxu0 0.0
    %823 = vmatprep.subr.mxu0 0.0
    %824 = vmatpush1.msra.mxu0 0.0
    %825 = vmatprep.subr.mxu0 0.0
    %826 = vmatpush1.msra.mxu0 0.0
    %827 = vmatprep.subr.mxu0 0.0
    %828 = vmatpush1.msra.mxu0 0.0
    %829 = vmatprep.mubr.f32.mxu0 0.0
    %830 = vmatmul.mubr.f32.gmra.mrb[0].mxu0 %v763
    %v831 = vpop.f32.mrb[0].mxu0
    %v832 = vadd.f32 0.0, %v831
    %v833 = vpop.f32.mrb[0].mxu0
    %834 = vdwg.mxu0
    %v836 = vsel %vm761, %v626, 0
    %838 = vmatprep.subr.mxu0 0.0
    %839 = vmatpush1.msra.mxu0 %v759
    %840 = vmatprep.subr.mxu0 0.0
    %841 = vmatpush1.msra.mxu0 0.0
    %842 = vmatprep.subr.mxu0 0.0
    %843 = vmatpush1.msra.mxu0 0.0
    %844 = vmatprep.subr.mxu0 0.0
    %845 = vmatpush1.msra.mxu0 0.0
    %846 = vmatprep.subr.mxu0 0.0
    %847 = vmatpush1.msra.mxu0 0.0
    %848 = vmatprep.subr.mxu0 0.0
    %849 = vmatpush1.msra.mxu0 0.0
    %850 = vmatprep.subr.mxu0 0.0
    %851 = vmatpush1.msra.mxu0 0.0
    %852 = vmatprep.subr.mxu0 0.0
    %853 = vmatpush1.msra.mxu0 0.0
    %854 = vmatprep.subr.mxu0 0.0
    %855 = vmatpush1.msra.mxu0 0.0
    %856 = vmatprep.subr.mxu0 0.0
    %857 = vmatpush1.msra.mxu0 0.0
    %858 = vmatprep.subr.mxu0 0.0
    %859 = vmatpush1.msra.mxu0 0.0
    %860 = vmatprep.subr.mxu0 0.0
    %861 = vmatpush1.msra.mxu0 0.0
    %862 = vmatprep.subr.mxu0 0.0
    %863 = vmatpush1.msra.mxu0 0.0
    %864 = vmatprep.subr.mxu0 0.0
    %865 = vmatpush1.msra.mxu0 0.0
    %866 = vmatprep.subr.mxu0 0.0
    %867 = vmatpush1.msra.mxu0 0.0
    %868 = vmatprep.subr.mxu0 0.0
    %869 = vmatpush1.msra.mxu0 0.0
    %870 = vmatprep.subr.mxu0 0.0
    %871 = vmatpush1.msra.mxu0 0.0
    %872 = vmatprep.subr.mxu0 0.0
    %873 = vmatpush1.msra.mxu0 0.0
    %874 = vmatprep.subr.mxu0 0.0
    %875 = vmatpush1.msra.mxu0 0.0
    %876 = vmatprep.subr.mxu0 0.0
    %877 = vmatpush1.msra.mxu0 0.0
    %878 = vmatprep.subr.mxu0 0.0
    %879 = vmatpush1.msra.mxu0 0.0
    %880 = vmatprep.subr.mxu0 0.0
    %881 = vmatpush1.msra.mxu0 0.0
    %882 = vmatprep.subr.mxu0 0.0
    %883 = vmatpush1.msra.mxu0 0.0
    %884 = vmatprep.subr.mxu0 0.0
    %885 = vmatpush1.msra.mxu0 0.0
    %886 = vmatprep.subr.mxu0 0.0
    %887 = vmatpush1.msra.mxu0 0.0
    %888 = vmatprep.subr.mxu0 0.0
    %889 = vmatpush1.msra.mxu0 0.0
    %890 = vmatprep.subr.mxu0 0.0
    %891 = vmatpush1.msra.mxu0 0.0
    %892 = vmatprep.subr.mxu0 0.0
    %893 = vmatpush1.msra.mxu0 0.0
    %894 = vmatprep.subr.mxu0 0.0
    %895 = vmatpush1.msra.mxu0 0.0
    %896 = vmatprep.subr.mxu0 0.0
    %897 = vmatpush1.msra.mxu0 0.0
    %898 = vmatprep.subr.mxu0 0.0
    %899 = vmatpush1.msra.mxu0 0.0
    %900 = vmatprep.subr.mxu0 0.0
    %901 = vmatpush1.msra.mxu0 0.0
    %902 = vmatprep.mubr.f32.mxu0 0.0
    %903 = vmatmul.mubr.f32.gmra.mrb[0].mxu0 %v836
    %v904 = vpop.f32.mrb[0].mxu0
    %v905 = vadd.f32 %v832, %v904
    %v906 = vpop.f32.mrb[0].mxu0
    %907 = vdwg.mxu0
    %v908 = vld [vmem:[%s5 + $0x10] sm:$0xff]
    %v910 = vsel %vm761, %v636, 0
    %912 = vmatprep.subr.mxu0 0.0
    %913 = vmatpush1.msra.mxu0 %v908
    %914 = vmatprep.subr.mxu0 0.0
    %915 = vmatpush1.msra.mxu0 0.0
    %916 = vmatprep.subr.mxu0 0.0
    %917 = vmatpush1.msra.mxu0 0.0
    %918 = vmatprep.subr.mxu0 0.0
    %919 = vmatpush1.msra.mxu0 0.0
    %920 = vmatprep.subr.mxu0 0.0
    %921 = vmatpush1.msra.mxu0 0.0
    %922 = vmatprep.subr.mxu0 0.0
    %923 = vmatpush1.msra.mxu0 0.0
    %924 = vmatprep.subr.mxu0 0.0
    %925 = vmatpush1.msra.mxu0 0.0
    %926 = vmatprep.subr.mxu0 0.0
    %927 = vmatpush1.msra.mxu0 0.0
    %928 = vmatprep.subr.mxu0 0.0
    %929 = vmatpush1.msra.mxu0 0.0
    %930 = vmatprep.subr.mxu0 0.0
    %931 = vmatpush1.msra.mxu0 0.0
    %932 = vmatprep.subr.mxu0 0.0
    %933 = vmatpush1.msra.mxu0 0.0
    %934 = vmatprep.subr.mxu0 0.0
    %935 = vmatpush1.msra.mxu0 0.0
    %936 = vmatprep.subr.mxu0 0.0
    %937 = vmatpush1.msra.mxu0 0.0
    %938 = vmatprep.subr.mxu0 0.0
    %939 = vmatpush1.msra.mxu0 0.0
    %940 = vmatprep.subr.mxu0 0.0
    %941 = vmatpush1.msra.mxu0 0.0
    %942 = vmatprep.subr.mxu0 0.0
    %943 = vmatpush1.msra.mxu0 0.0
    %944 = vmatprep.subr.mxu0 0.0
    %945 = vmatpush1.msra.mxu0 0.0
    %946 = vmatprep.subr.mxu0 0.0
    %947 = vmatpush1.msra.mxu0 0.0
    %948 = vmatprep.subr.mxu0 0.0
    %949 = vmatpush1.msra.mxu0 0.0
    %950 = vmatprep.subr.mxu0 0.0
    %951 = vmatpush1.msra.mxu0 0.0
    %952 = vmatprep.subr.mxu0 0.0
    %953 = vmatpush1.msra.mxu0 0.0
    %954 = vmatprep.subr.mxu0 0.0
    %955 = vmatpush1.msra.mxu0 0.0
    %956 = vmatprep.subr.mxu0 0.0
    %957 = vmatpush1.msra.mxu0 0.0
    %958 = vmatprep.subr.mxu0 0.0
    %959 = vmatpush1.msra.mxu0 0.0
    %960 = vmatprep.subr.mxu0 0.0
    %961 = vmatpush1.msra.mxu0 0.0
    %962 = vmatprep.subr.mxu0 0.0
    %963 = vmatpush1.msra.mxu0 0.0
    %964 = vmatprep.subr.mxu0 0.0
    %965 = vmatpush1.msra.mxu0 0.0
    %966 = vmatprep.subr.mxu0 0.0
    %967 = vmatpush1.msra.mxu0 0.0
    %968 = vmatprep.subr.mxu0 0.0
    %969 = vmatpush1.msra.mxu0 0.0
    %970 = vmatprep.subr.mxu0 0.0
    %971 = vmatpush1.msra.mxu0 0.0
    %972 = vmatprep.subr.mxu0 0.0
    %973 = vmatpush1.msra.mxu0 0.0
    %974 = vmatprep.subr.mxu0 0.0
    %975 = vmatpush1.msra.mxu0 0.0
    %976 = vmatprep.mubr.f32.mxu0 0.0
    %977 = vmatmul.mubr.f32.gmra.mrb[0].mxu0 %v910
    %v978 = vpop.f32.mrb[0].mxu0
    %v979 = vadd.f32 0.0, %v978
    %v980 = vpop.f32.mrb[0].mxu0
    %981 = vdwg.mxu0
    %v982 = vadd.f32 %v905, %v979
    %v983 = vld [vmem:[%s5 + $0x18] sm:$0xff]
    %v985 = vsel %vm761, %v641, 0
    %987 = vmatprep.subr.mxu0 0.0
    %988 = vmatpush1.msra.mxu0 %v983
    %989 = vmatprep.subr.mxu0 0.0
    %990 = vmatpush1.msra.mxu0 0.0
    %991 = vmatprep.subr.mxu0 0.0
    %992 = vmatpush1.msra.mxu0 0.0
    %993 = vmatprep.subr.mxu0 0.0
    %994 = vmatpush1.msra.mxu0 0.0
    %995 = vmatprep.subr.mxu0 0.0
    %996 = vmatpush1.msra.mxu0 0.0
    %997 = vmatprep.subr.mxu0 0.0
    %998 = vmatpush1.msra.mxu0 0.0
    %999 = vmatprep.subr.mxu0 0.0
    %1000 = vmatpush1.msra.mxu0 0.0
    %1001 = vmatprep.subr.mxu0 0.0
    %1002 = vmatpush1.msra.mxu0 0.0
    %1003 = vmatprep.subr.mxu0 0.0
    %1004 = vmatpush1.msra.mxu0 0.0
    %1005 = vmatprep.subr.mxu0 0.0
    %1006 = vmatpush1.msra.mxu0 0.0
    %1007 = vmatprep.subr.mxu0 0.0
    %1008 = vmatpush1.msra.mxu0 0.0
    %1009 = vmatprep.subr.mxu0 0.0
    %1010 = vmatpush1.msra.mxu0 0.0
    %1011 = vmatprep.subr.mxu0 0.0
    %1012 = vmatpush1.msra.mxu0 0.0
    %1013 = vmatprep.subr.mxu0 0.0
    %1014 = vmatpush1.msra.mxu0 0.0
    %1015 = vmatprep.subr.mxu0 0.0
    %1016 = vmatpush1.msra.mxu0 0.0
    %1017 = vmatprep.subr.mxu0 0.0
    %1018 = vmatpush1.msra.mxu0 0.0
    %1019 = vmatprep.subr.mxu0 0.0
    %1020 = vmatpush1.msra.mxu0 0.0
    %1021 = vmatprep.subr.mxu0 0.0
    %1022 = vmatpush1.msra.mxu0 0.0
    %1023 = vmatprep.subr.mxu0 0.0
    %1024 = vmatpush1.msra.mxu0 0.0
    %1025 = vmatprep.subr.mxu0 0.0
    %1026 = vmatpush1.msra.mxu0 0.0
    %1027 = vmatprep.subr.mxu0 0.0
    %1028 = vmatpush1.msra.mxu0 0.0
    %1029 = vmatprep.subr.mxu0 0.0
    %1030 = vmatpush1.msra.mxu0 0.0
    %1031 = vmatprep.subr.mxu0 0.0
    %1032 = vmatpush1.msra.mxu0 0.0
    %1033 = vmatprep.subr.mxu0 0.0
    %1034 = vmatpush1.msra.mxu0 0.0
    %1035 = vmatprep.subr.mxu0 0.0
    %1036 = vmatpush1.msra.mxu0 0.0
    %1037 = vmatprep.subr.mxu0 0.0
    %1038 = vmatpush1.msra.mxu0 0.0
    %1039 = vmatprep.subr.mxu0 0.0
    %1040 = vmatpush1.msra.mxu0 0.0
    %1041 = vmatprep.subr.mxu0 0.0
    %1042 = vmatpush1.msra.mxu0 0.0
    %1043 = vmatprep.subr.mxu0 0.0
    %1044 = vmatpush1.msra.mxu0 0.0
    %1045 = vmatprep.subr.mxu0 0.0
    %1046 = vmatpush1.msra.mxu0 0.0
    %1047 = vmatprep.subr.mxu0 0.0
    %1048 = vmatpush1.msra.mxu0 0.0
    %1049 = vmatprep.subr.mxu0 0.0
    %1050 = vmatpush1.msra.mxu0 0.0
    %1051 = vmatprep.mubr.f32.mxu0 0.0
    %1052 = vmatmul.mubr.f32.gmra.mrb[0].mxu0 %v985
    %v1053 = vpop.f32.mrb[0].mxu0
    %v1054 = vadd.f32 0.0, %v1053
    %v1055 = vpop.f32.mrb[0].mxu0
    %1056 = vdwg.mxu0
    %v1057 = vadd.f32 %v982, %v1054
    %v1058 = vld [vmem:[%s5 + $0x20] sm:$0xff]
    %v1060 = vsel %vm761, %v646, 0
    %1062 = vmatprep.subr.mxu0 0.0
    %1063 = vmatpush1.msra.mxu0 %v1058
    %1064 = vmatprep.subr.mxu0 0.0
    %1065 = vmatpush1.msra.mxu0 0.0
    %1066 = vmatprep.subr.mxu0 0.0
    %1067 = vmatpush1.msra.mxu0 0.0
    %1068 = vmatprep.subr.mxu0 0.0
    %1069 = vmatpush1.msra.mxu0 0.0
    %1070 = vmatprep.subr.mxu0 0.0
    %1071 = vmatpush1.msra.mxu0 0.0
    %1072 = vmatprep.subr.mxu0 0.0
    %1073 = vmatpush1.msra.mxu0 0.0
    %1074 = vmatprep.subr.mxu0 0.0
    %1075 = vmatpush1.msra.mxu0 0.0
    %1076 = vmatprep.subr.mxu0 0.0
    %1077 = vmatpush1.msra.mxu0 0.0
    %1078 = vmatprep.subr.mxu0 0.0
    %1079 = vmatpush1.msra.mxu0 0.0
    %1080 = vmatprep.subr.mxu0 0.0
    %1081 = vmatpush1.msra.mxu0 0.0
    %1082 = vmatprep.subr.mxu0 0.0
    %1083 = vmatpush1.msra.mxu0 0.0
    %1084 = vmatprep.subr.mxu0 0.0
    %1085 = vmatpush1.msra.mxu0 0.0
    %1086 = vmatprep.subr.mxu0 0.0
    %1087 = vmatpush1.msra.mxu0 0.0
    %1088 = vmatprep.subr.mxu0 0.0
    %1089 = vmatpush1.msra.mxu0 0.0
    %1090 = vmatprep.subr.mxu0 0.0
    %1091 = vmatpush1.msra.mxu0 0.0
    %1092 = vmatprep.subr.mxu0 0.0
    %1093 = vmatpush1.msra.mxu0 0.0
    %1094 = vmatprep.subr.mxu0 0.0
    %1095 = vmatpush1.msra.mxu0 0.0
    %1096 = vmatprep.subr.mxu0 0.0
    %1097 = vmatpush1.msra.mxu0 0.0
    %1098 = vmatprep.subr.mxu0 0.0
    %1099 = vmatpush1.msra.mxu0 0.0
    %1100 = vmatprep.subr.mxu0 0.0
    %1101 = vmatpush1.msra.mxu0 0.0
    %1102 = vmatprep.subr.mxu0 0.0
    %1103 = vmatpush1.msra.mxu0 0.0
    %1104 = vmatprep.subr.mxu0 0.0
    %1105 = vmatpush1.msra.mxu0 0.0
    %1106 = vmatprep.subr.mxu0 0.0
    %1107 = vmatpush1.msra.mxu0 0.0
    %1108 = vmatprep.subr.mxu0 0.0
    %1109 = vmatpush1.msra.mxu0 0.0
    %1110 = vmatprep.subr.mxu0 0.0
    %1111 = vmatpush1.msra.mxu0 0.0
    %1112 = vmatprep.subr.mxu0 0.0
    %1113 = vmatpush1.msra.mxu0 0.0
    %1114 = vmatprep.subr.mxu0 0.0
    %1115 = vmatpush1.msra.mxu0 0.0
    %1116 = vmatprep.subr.mxu0 0.0
    %1117 = vmatpush1.msra.mxu0 0.0
    %1118 = vmatprep.subr.mxu0 0.0
    %1119 = vmatpush1.msra.mxu0 0.0
    %1120 = vmatprep.subr.mxu0 0.0
    %1121 = vmatpush1.msra.mxu0 0.0
    %1122 = vmatprep.subr.mxu0 0.0
    %1123 = vmatpush1.msra.mxu0 0.0
    %1124 = vmatprep.subr.mxu0 0.0
    %1125 = vmatpush1.msra.mxu0 0.0
    %1126 = vmatprep.mubr.f32.mxu0 0.0
    %1127 = vmatmul.mubr.f32.gmra.mrb[0].mxu0 %v1060
    %v1128 = vpop.f32.mrb[0].mxu0
    %v1129 = vadd.f32 0.0, %v1128
    %v1130 = vpop.f32.mrb[0].mxu0
    %1131 = vdwg.mxu0
    %v1132 = vadd.f32 %v1057, %v1129
    %v1133 = vld [vmem:[%s5 + $0x28] sm:$0xff]
    %v1135 = vsel %vm761, %v651, 0
    %1137 = vmatprep.subr.mxu0 0.0
    %1138 = vmatpush1.msra.mxu0 %v1133
    %1139 = vmatprep.subr.mxu0 0.0
    %1140 = vmatpush1.msra.mxu0 0.0
    %1141 = vmatprep.subr.mxu0 0.0
    %1142 = vmatpush1.msra.mxu0 0.0
    %1143 = vmatprep.subr.mxu0 0.0
    %1144 = vmatpush1.msra.mxu0 0.0
    %1145 = vmatprep.subr.mxu0 0.0
    %1146 = vmatpush1.msra.mxu0 0.0
    %1147 = vmatprep.subr.mxu0 0.0
    %1148 = vmatpush1.msra.mxu0 0.0
    %1149 = vmatprep.subr.mxu0 0.0
    %1150 = vmatpush1.msra.mxu0 0.0
    %1151 = vmatprep.subr.mxu0 0.0
    %1152 = vmatpush1.msra.mxu0 0.0
    %1153 = vmatprep.subr.mxu0 0.0
    %1154 = vmatpush1.msra.mxu0 0.0
    %1155 = vmatprep.subr.mxu0 0.0
    %1156 = vmatpush1.msra.mxu0 0.0
    %1157 = vmatprep.subr.mxu0 0.0
    %1158 = vmatpush1.msra.mxu0 0.0
    %1159 = vmatprep.subr.mxu0 0.0
    %1160 = vmatpush1.msra.mxu0 0.0
    %1161 = vmatprep.subr.mxu0 0.0
    %1162 = vmatpush1.msra.mxu0 0.0
    %1163 = vmatprep.subr.mxu0 0.0
    %1164 = vmatpush1.msra.mxu0 0.0
    %1165 = vmatprep.subr.mxu0 0.0
    %1166 = vmatpush1.msra.mxu0 0.0
    %1167 = vmatprep.subr.mxu0 0.0
    %1168 = vmatpush1.msra.mxu0 0.0
    %1169 = vmatprep.subr.mxu0 0.0
    %1170 = vmatpush1.msra.mxu0 0.0
    %1171 = vmatprep.subr.mxu0 0.0
    %1172 = vmatpush1.msra.mxu0 0.0
    %1173 = vmatprep.subr.mxu0 0.0
    %1174 = vmatpush1.msra.mxu0 0.0
    %1175 = vmatprep.subr.mxu0 0.0
    %1176 = vmatpush1.msra.mxu0 0.0
    %1177 = vmatprep.subr.mxu0 0.0
    %1178 = vmatpush1.msra.mxu0 0.0
    %1179 = vmatprep.subr.mxu0 0.0
    %1180 = vmatpush1.msra.mxu0 0.0
    %1181 = vmatprep.subr.mxu0 0.0
    %1182 = vmatpush1.msra.mxu0 0.0
    %1183 = vmatprep.subr.mxu0 0.0
    %1184 = vmatpush1.msra.mxu0 0.0
    %1185 = vmatprep.subr.mxu0 0.0
    %1186 = vmatpush1.msra.mxu0 0.0
    %1187 = vmatprep.subr.mxu0 0.0
    %1188 = vmatpush1.msra.mxu0 0.0
    %1189 = vmatprep.subr.mxu0 0.0
    %1190 = vmatpush1.msra.mxu0 0.0
    %1191 = vmatprep.subr.mxu0 0.0
    %1192 = vmatpush1.msra.mxu0 0.0
    %1193 = vmatprep.subr.mxu0 0.0
    %1194 = vmatpush1.msra.mxu0 0.0
    %1195 = vmatprep.subr.mxu0 0.0
    %1196 = vmatpush1.msra.mxu0 0.0
    %1197 = vmatprep.subr.mxu0 0.0
    %1198 = vmatpush1.msra.mxu0 0.0
    %1199 = vmatprep.subr.mxu0 0.0
    %1200 = vmatpush1.msra.mxu0 0.0
    %1201 = vmatprep.mubr.f32.mxu0 0.0
    %1202 = vmatmul.mubr.f32.gmra.mrb[0].mxu0 %v1135
    %v1203 = vpop.f32.mrb[0].mxu0
    %v1204 = vadd.f32 0.0, %v1203
    %v1205 = vpop.f32.mrb[0].mxu0
    %1206 = vdwg.mxu0
    %v1207 = vadd.f32 %v1132, %v1204
    %v1208 = vld [vmem:[%s5 + $0x30] sm:$0xff]
    %v1210 = vsel %vm761, %v656, 0
    %1212 = vmatprep.subr.mxu0 0.0
    %1213 = vmatpush1.msra.mxu0 %v1208
    %1214 = vmatprep.subr.mxu0 0.0
    %1215 = vmatpush1.msra.mxu0 0.0
    %1216 = vmatprep.subr.mxu0 0.0
    %1217 = vmatpush1.msra.mxu0 0.0
    %1218 = vmatprep.subr.mxu0 0.0
    %1219 = vmatpush1.msra.mxu0 0.0
    %1220 = vmatprep.subr.mxu0 0.0
    %1221 = vmatpush1.msra.mxu0 0.0
    %1222 = vmatprep.subr.mxu0 0.0
    %1223 = vmatpush1.msra.mxu0 0.0
    %1224 = vmatprep.subr.mxu0 0.0
    %1225 = vmatpush1.msra.mxu0 0.0
    %1226 = vmatprep.subr.mxu0 0.0
    %1227 = vmatpush1.msra.mxu0 0.0
    %1228 = vmatprep.subr.mxu0 0.0
    %1229 = vmatpush1.msra.mxu0 0.0
    %1230 = vmatprep.subr.mxu0 0.0
    %1231 = vmatpush1.msra.mxu0 0.0
    %1232 = vmatprep.subr.mxu0 0.0
    %1233 = vmatpush1.msra.mxu0 0.0
    %1234 = vmatprep.subr.mxu0 0.0
    %1235 = vmatpush1.msra.mxu0 0.0
    %1236 = vmatprep.subr.mxu0 0.0
    %1237 = vmatpush1.msra.mxu0 0.0
    %1238 = vmatprep.subr.mxu0 0.0
    %1239 = vmatpush1.msra.mxu0 0.0
    %1240 = vmatprep.subr.mxu0 0.0
    %1241 = vmatpush1.msra.mxu0 0.0
    %1242 = vmatprep.subr.mxu0 0.0
    %1243 = vmatpush1.msra.mxu0 0.0
    %1244 = vmatprep.subr.mxu0 0.0
    %1245 = vmatpush1.msra.mxu0 0.0
    %1246 = vmatprep.subr.mxu0 0.0
    %1247 = vmatpush1.msra.mxu0 0.0
    %1248 = vmatprep.subr.mxu0 0.0
    %1249 = vmatpush1.msra.mxu0 0.0
    %1250 = vmatprep.subr.mxu0 0.0
    %1251 = vmatpush1.msra.mxu0 0.0
    %1252 = vmatprep.subr.mxu0 0.0
    %1253 = vmatpush1.msra.mxu0 0.0
    %1254 = vmatprep.subr.mxu0 0.0
    %1255 = vmatpush1.msra.mxu0 0.0
    %1256 = vmatprep.subr.mxu0 0.0
    %1257 = vmatpush1.msra.mxu0 0.0
    %1258 = vmatprep.subr.mxu0 0.0
    %1259 = vmatpush1.msra.mxu0 0.0
    %1260 = vmatprep.subr.mxu0 0.0
    %1261 = vmatpush1.msra.mxu0 0.0
    %1262 = vmatprep.subr.mxu0 0.0
    %1263 = vmatpush1.msra.mxu0 0.0
    %1264 = vmatprep.subr.mxu0 0.0
    %1265 = vmatpush1.msra.mxu0 0.0
    %1266 = vmatprep.subr.mxu0 0.0
    %1267 = vmatpush1.msra.mxu0 0.0
    %1268 = vmatprep.subr.mxu0 0.0
    %1269 = vmatpush1.msra.mxu0 0.0
    %1270 = vmatprep.subr.mxu0 0.0
    %1271 = vmatpush1.msra.mxu0 0.0
    %1272 = vmatprep.subr.mxu0 0.0
    %1273 = vmatpush1.msra.mxu0 0.0
    %1274 = vmatprep.subr.mxu0 0.0
    %1275 = vmatpush1.msra.mxu0 0.0
    %1276 = vmatprep.mubr.f32.mxu0 0.0
    %1277 = vmatmul.mubr.f32.gmra.mrb[0].mxu0 %v1210
    %v1278 = vpop.f32.mrb[0].mxu0
    %v1279 = vadd.f32 0.0, %v1278
    %v1280 = vpop.f32.mrb[0].mxu0
    %1281 = vdwg.mxu0
    %v1282 = vadd.f32 %v1207, %v1279
    %v1283 = vld [vmem:[%s5 + $0x38] sm:$0xff]
    %v1285 = vsel %vm761, %v661, 0
    %1287 = vmatprep.subr.mxu0 0.0
    %1288 = vmatpush1.msra.mxu0 %v1283
    %1289 = vmatprep.subr.mxu0 0.0
    %1290 = vmatpush1.msra.mxu0 0.0
    %1291 = vmatprep.subr.mxu0 0.0
    %1292 = vmatpush1.msra.mxu0 0.0
    %1293 = vmatprep.subr.mxu0 0.0
    %1294 = vmatpush1.msra.mxu0 0.0
    %1295 = vmatprep.subr.mxu0 0.0
    %1296 = vmatpush1.msra.mxu0 0.0
    %1297 = vmatprep.subr.mxu0 0.0
    %1298 = vmatpush1.msra.mxu0 0.0
    %1299 = vmatprep.subr.mxu0 0.0
    %1300 = vmatpush1.msra.mxu0 0.0
    %1301 = vmatprep.subr.mxu0 0.0
    %1302 = vmatpush1.msra.mxu0 0.0
    %1303 = vmatprep.subr.mxu0 0.0
    %1304 = vmatpush1.msra.mxu0 0.0
    %1305 = vmatprep.subr.mxu0 0.0
    %1306 = vmatpush1.msra.mxu0 0.0
    %1307 = vmatprep.subr.mxu0 0.0
    %1308 = vmatpush1.msra.mxu0 0.0
    %1309 = vmatprep.subr.mxu0 0.0
    %1310 = vmatpush1.msra.mxu0 0.0
    %1311 = vmatprep.subr.mxu0 0.0
    %1312 = vmatpush1.msra.mxu0 0.0
    %1313 = vmatprep.subr.mxu0 0.0
    %1314 = vmatpush1.msra.mxu0 0.0
    %1315 = vmatprep.subr.mxu0 0.0
    %1316 = vmatpush1.msra.mxu0 0.0
    %1317 = vmatprep.subr.mxu0 0.0
    %1318 = vmatpush1.msra.mxu0 0.0
    %1319 = vmatprep.subr.mxu0 0.0
    %1320 = vmatpush1.msra.mxu0 0.0
    %1321 = vmatprep.subr.mxu0 0.0
    %1322 = vmatpush1.msra.mxu0 0.0
    %1323 = vmatprep.subr.mxu0 0.0
    %1324 = vmatpush1.msra.mxu0 0.0
    %1325 = vmatprep.subr.mxu0 0.0
    %1326 = vmatpush1.msra.mxu0 0.0
    %1327 = vmatprep.subr.mxu0 0.0
    %1328 = vmatpush1.msra.mxu0 0.0
    %1329 = vmatprep.subr.mxu0 0.0
    %1330 = vmatpush1.msra.mxu0 0.0
    %1331 = vmatprep.subr.mxu0 0.0
    %1332 = vmatpush1.msra.mxu0 0.0
    %1333 = vmatprep.subr.mxu0 0.0
    %1334 = vmatpush1.msra.mxu0 0.0
    %1335 = vmatprep.subr.mxu0 0.0
    %1336 = vmatpush1.msra.mxu0 0.0
    %1337 = vmatprep.subr.mxu0 0.0
    %1338 = vmatpush1.msra.mxu0 0.0
    %1339 = vmatprep.subr.mxu0 0.0
    %1340 = vmatpush1.msra.mxu0 0.0
    %1341 = vmatprep.subr.mxu0 0.0
    %1342 = vmatpush1.msra.mxu0 0.0
    %1343 = vmatprep.subr.mxu0 0.0
    %1344 = vmatpush1.msra.mxu0 0.0
    %1345 = vmatprep.subr.mxu0 0.0
    %1346 = vmatpush1.msra.mxu0 0.0
    %1347 = vmatprep.subr.mxu0 0.0
    %1348 = vmatpush1.msra.mxu0 0.0
    %1349 = vmatprep.subr.mxu0 0.0
    %1350 = vmatpush1.msra.mxu0 0.0
    %1351 = vmatprep.mubr.f32.mxu0 0.0
    %1352 = vmatmul.mubr.f32.gmra.mrb[0].mxu0 %v1285
    %v1353 = vpop.f32.mrb[0].mxu0
    %v1354 = vadd.f32 0.0, %v1353
    %v1355 = vpop.f32.mrb[0].mxu0
    %1356 = vdwg.mxu0
    %v1357 = vadd.f32 %v1282, %v1354
    %v1358 = vld [vmem:[%s5 + $0x40] sm:$0xff]
    %v1360 = vsel %vm761, %v666, 0
    %1362 = vmatprep.subr.mxu0 0.0
    %1363 = vmatpush1.msra.mxu0 %v1358
    %1364 = vmatprep.subr.mxu0 0.0
    %1365 = vmatpush1.msra.mxu0 0.0
    %1366 = vmatprep.subr.mxu0 0.0
    %1367 = vmatpush1.msra.mxu0 0.0
    %1368 = vmatprep.subr.mxu0 0.0
    %1369 = vmatpush1.msra.mxu0 0.0
    %1370 = vmatprep.subr.mxu0 0.0
    %1371 = vmatpush1.msra.mxu0 0.0
    %1372 = vmatprep.subr.mxu0 0.0
    %1373 = vmatpush1.msra.mxu0 0.0
    %1374 = vmatprep.subr.mxu0 0.0
    %1375 = vmatpush1.msra.mxu0 0.0
    %1376 = vmatprep.subr.mxu0 0.0
    %1377 = vmatpush1.msra.mxu0 0.0
    %1378 = vmatprep.subr.mxu0 0.0
    %1379 = vmatpush1.msra.mxu0 0.0
    %1380 = vmatprep.subr.mxu0 0.0
    %1381 = vmatpush1.msra.mxu0 0.0
    %1382 = vmatprep.subr.mxu0 0.0
    %1383 = vmatpush1.msra.mxu0 0.0
    %1384 = vmatprep.subr.mxu0 0.0
    %1385 = vmatpush1.msra.mxu0 0.0
    %1386 = vmatprep.subr.mxu0 0.0
    %1387 = vmatpush1.msra.mxu0 0.0
    %1388 = vmatprep.subr.mxu0 0.0
    %1389 = vmatpush1.msra.mxu0 0.0
    %1390 = vmatprep.subr.mxu0 0.0
    %1391 = vmatpush1.msra.mxu0 0.0
    %1392 = vmatprep.subr.mxu0 0.0
    %1393 = vmatpush1.msra.mxu0 0.0
    %1394 = vmatprep.subr.mxu0 0.0
    %1395 = vmatpush1.msra.mxu0 0.0
    %1396 = vmatprep.subr.mxu0 0.0
    %1397 = vmatpush1.msra.mxu0 0.0
    %1398 = vmatprep.subr.mxu0 0.0
    %1399 = vmatpush1.msra.mxu0 0.0
    %1400 = vmatprep.subr.mxu0 0.0
    %1401 = vmatpush1.msra.mxu0 0.0
    %1402 = vmatprep.subr.mxu0 0.0
    %1403 = vmatpush1.msra.mxu0 0.0
    %1404 = vmatprep.subr.mxu0 0.0
    %1405 = vmatpush1.msra.mxu0 0.0
    %1406 = vmatprep.subr.mxu0 0.0
    %1407 = vmatpush1.msra.mxu0 0.0
    %1408 = vmatprep.subr.mxu0 0.0
    %1409 = vmatpush1.msra.mxu0 0.0
    %1410 = vmatprep.subr.mxu0 0.0
    %1411 = vmatpush1.msra.mxu0 0.0
    %1412 = vmatprep.subr.mxu0 0.0
    %1413 = vmatpush1.msra.mxu0 0.0
    %1414 = vmatprep.subr.mxu0 0.0
    %1415 = vmatpush1.msra.mxu0 0.0
    %1416 = vmatprep.subr.mxu0 0.0
    %1417 = vmatpush1.msra.mxu0 0.0
    %1418 = vmatprep.subr.mxu0 0.0
    %1419 = vmatpush1.msra.mxu0 0.0
    %1420 = vmatprep.subr.mxu0 0.0
    %1421 = vmatpush1.msra.mxu0 0.0
    %1422 = vmatprep.subr.mxu0 0.0
    %1423 = vmatpush1.msra.mxu0 0.0
    %1424 = vmatprep.subr.mxu0 0.0
    %1425 = vmatpush1.msra.mxu0 0.0
    %1426 = vmatprep.mubr.f32.mxu0 0.0
    %1427 = vmatmul.mubr.f32.gmra.mrb[0].mxu0 %v1360
    %v1428 = vpop.f32.mrb[0].mxu0
    %v1429 = vadd.f32 0.0, %v1428
    %v1430 = vpop.f32.mrb[0].mxu0
    %1431 = vdwg.mxu0
    %v1432 = vadd.f32 %v1357, %v1429
    %v1433 = vld [vmem:[%s5 + $0x48] sm:$0xff]
    %v1435 = vsel %vm761, %v671, 0
    %1437 = vmatprep.subr.mxu0 0.0
    %1438 = vmatpush1.msra.mxu0 %v1433
    %1439 = vmatprep.subr.mxu0 0.0
    %1440 = vmatpush1.msra.mxu0 0.0
    %1441 = vmatprep.subr.mxu0 0.0
    %1442 = vmatpush1.msra.mxu0 0.0
    %1443 = vmatprep.subr.mxu0 0.0
    %1444 = vmatpush1.msra.mxu0 0.0
    %1445 = vmatprep.subr.mxu0 0.0
    %1446 = vmatpush1.msra.mxu0 0.0
    %1447 = vmatprep.subr.mxu0 0.0
    %1448 = vmatpush1.msra.mxu0 0.0
    %1449 = vmatprep.subr.mxu0 0.0
    %1450 = vmatpush1.msra.mxu0 0.0
    %1451 = vmatprep.subr.mxu0 0.0
    %1452 = vmatpush1.msra.mxu0 0.0
    %1453 = vmatprep.subr.mxu0 0.0
    %1454 = vmatpush1.msra.mxu0 0.0
    %1455 = vmatprep.subr.mxu0 0.0
    %1456 = vmatpush1.msra.mxu0 0.0
    %1457 = vmatprep.subr.mxu0 0.0
    %1458 = vmatpush1.msra.mxu0 0.0
    %1459 = vmatprep.subr.mxu0 0.0
    %1460 = vmatpush1.msra.mxu0 0.0
    %1461 = vmatprep.subr.mxu0 0.0
    %1462 = vmatpush1.msra.mxu0 0.0
    %1463 = vmatprep.subr.mxu0 0.0
    %1464 = vmatpush1.msra.mxu0 0.0
    %1465 = vmatprep.subr.mxu0 0.0
    %1466 = vmatpush1.msra.mxu0 0.0
    %1467 = vmatprep.subr.mxu0 0.0
    %1468 = vmatpush1.msra.mxu0 0.0
    %1469 = vmatprep.subr.mxu0 0.0
    %1470 = vmatpush1.msra.mxu0 0.0
    %1471 = vmatprep.subr.mxu0 0.0
    %1472 = vmatpush1.msra.mxu0 0.0
    %1473 = vmatprep.subr.mxu0 0.0
    %1474 = vmatpush1.msra.mxu0 0.0
    %1475 = vmatprep.subr.mxu0 0.0
    %1476 = vmatpush1.msra.mxu0 0.0
    %1477 = vmatprep.subr.mxu0 0.0
    %1478 = vmatpush1.msra.mxu0 0.0
    %1479 = vmatprep.subr.mxu0 0.0
    %1480 = vmatpush1.msra.mxu0 0.0
    %1481 = vmatprep.subr.mxu0 0.0
    %1482 = vmatpush1.msra.mxu0 0.0
    %1483 = vmatprep.subr.mxu0 0.0
    %1484 = vmatpush1.msra.mxu0 0.0
    %1485 = vmatprep.subr.mxu0 0.0
    %1486 = vmatpush1.msra.mxu0 0.0
    %1487 = vmatprep.subr.mxu0 0.0
    %1488 = vmatpush1.msra.mxu0 0.0
    %1489 = vmatprep.subr.mxu0 0.0
    %1490 = vmatpush1.msra.mxu0 0.0
    %1491 = vmatprep.subr.mxu0 0.0
    %1492 = vmatpush1.msra.mxu0 0.0
    %1493 = vmatprep.subr.mxu0 0.0
    %1494 = vmatpush1.msra.mxu0 0.0
    %1495 = vmatprep.subr.mxu0 0.0
    %1496 = vmatpush1.msra.mxu0 0.0
    %1497 = vmatprep.subr.mxu0 0.0
    %1498 = vmatpush1.msra.mxu0 0.0
    %1499 = vmatprep.subr.mxu0 0.0
    %1500 = vmatpush1.msra.mxu0 0.0
    %1501 = vmatprep.mubr.f32.mxu0 0.0
    %1502 = vmatmul.mubr.f32.gmra.mrb[0].mxu0 %v1435
    %v1503 = vpop.f32.mrb[0].mxu0
    %v1504 = vadd.f32 0.0, %v1503
    %v1505 = vpop.f32.mrb[0].mxu0
    %1506 = vdwg.mxu0
    %v1507 = vadd.f32 %v1432, %v1504
    %v1508 = vld [vmem:[%s5 + $0x50] sm:$0xff]
    %v1510 = vsel %vm761, %v676, 0
    %1512 = vmatprep.subr.mxu0 0.0
    %1513 = vmatpush1.msra.mxu0 %v1508
    %1514 = vmatprep.subr.mxu0 0.0
    %1515 = vmatpush1.msra.mxu0 0.0
    %1516 = vmatprep.subr.mxu0 0.0
    %1517 = vmatpush1.msra.mxu0 0.0
    %1518 = vmatprep.subr.mxu0 0.0
    %1519 = vmatpush1.msra.mxu0 0.0
    %1520 = vmatprep.subr.mxu0 0.0
    %1521 = vmatpush1.msra.mxu0 0.0
    %1522 = vmatprep.subr.mxu0 0.0
    %1523 = vmatpush1.msra.mxu0 0.0
    %1524 = vmatprep.subr.mxu0 0.0
    %1525 = vmatpush1.msra.mxu0 0.0
    %1526 = vmatprep.subr.mxu0 0.0
    %1527 = vmatpush1.msra.mxu0 0.0
    %1528 = vmatprep.subr.mxu0 0.0
    %1529 = vmatpush1.msra.mxu0 0.0
    %1530 = vmatprep.subr.mxu0 0.0
    %1531 = vmatpush1.msra.mxu0 0.0
    %1532 = vmatprep.subr.mxu0 0.0
    %1533 = vmatpush1.msra.mxu0 0.0
    %1534 = vmatprep.subr.mxu0 0.0
    %1535 = vmatpush1.msra.mxu0 0.0
    %1536 = vmatprep.subr.mxu0 0.0
    %1537 = vmatpush1.msra.mxu0 0.0
    %1538 = vmatprep.subr.mxu0 0.0
    %1539 = vmatpush1.msra.mxu0 0.0
    %1540 = vmatprep.subr.mxu0 0.0
    %1541 = vmatpush1.msra.mxu0 0.0
    %1542 = vmatprep.subr.mxu0 0.0
    %1543 = vmatpush1.msra.mxu0 0.0
    %1544 = vmatprep.subr.mxu0 0.0
    %1545 = vmatpush1.msra.mxu0 0.0
    %1546 = vmatprep.subr.mxu0 0.0
    %1547 = vmatpush1.msra.mxu0 0.0
    %1548 = vmatprep.subr.mxu0 0.0
    %1549 = vmatpush1.msra.mxu0 0.0
    %1550 = vmatprep.subr.mxu0 0.0
    %1551 = vmatpush1.msra.mxu0 0.0
    %1552 = vmatprep.subr.mxu0 0.0
    %1553 = vmatpush1.msra.mxu0 0.0
    %1554 = vmatprep.subr.mxu0 0.0
    %1555 = vmatpush1.msra.mxu0 0.0
    %1556 = vmatprep.subr.mxu0 0.0
    %1557 = vmatpush1.msra.mxu0 0.0
    %1558 = vmatprep.subr.mxu0 0.0
    %1559 = vmatpush1.msra.mxu0 0.0
    %1560 = vmatprep.subr.mxu0 0.0
    %1561 = vmatpush1.msra.mxu0 0.0
    %1562 = vmatprep.subr.mxu0 0.0
    %1563 = vmatpush1.msra.mxu0 0.0
    %1564 = vmatprep.subr.mxu0 0.0
    %1565 = vmatpush1.msra.mxu0 0.0
    %1566 = vmatprep.subr.mxu0 0.0
    %1567 = vmatpush1.msra.mxu0 0.0
    %1568 = vmatprep.subr.mxu0 0.0
    %1569 = vmatpush1.msra.mxu0 0.0
    %1570 = vmatprep.subr.mxu0 0.0
    %1571 = vmatpush1.msra.mxu0 0.0
    %1572 = vmatprep.subr.mxu0 0.0
    %1573 = vmatpush1.msra.mxu0 0.0
    %1574 = vmatprep.subr.mxu0 0.0
    %1575 = vmatpush1.msra.mxu0 0.0
    %1576 = vmatprep.mubr.f32.mxu0 0.0
    %1577 = vmatmul.mubr.f32.gmra.mrb[0].mxu0 %v1510
    %v1578 = vpop.f32.mrb[0].mxu0
    %v1579 = vadd.f32 0.0, %v1578
    %v1580 = vpop.f32.mrb[0].mxu0
    %1581 = vdwg.mxu0
    %v1582 = vadd.f32 %v1507, %v1579
    %v1583 = vld [vmem:[%s5 + $0x58] sm:$0xff]
    %v1585 = vsel %vm761, %v681, 0
    %1587 = vmatprep.subr.mxu0 0.0
    %1588 = vmatpush1.msra.mxu0 %v1583
    %1589 = vmatprep.subr.mxu0 0.0
    %1590 = vmatpush1.msra.mxu0 0.0
    %1591 = vmatprep.subr.mxu0 0.0
    %1592 = vmatpush1.msra.mxu0 0.0
    %1593 = vmatprep.subr.mxu0 0.0
    %1594 = vmatpush1.msra.mxu0 0.0
    %1595 = vmatprep.subr.mxu0 0.0
    %1596 = vmatpush1.msra.mxu0 0.0
    %1597 = vmatprep.subr.mxu0 0.0
    %1598 = vmatpush1.msra.mxu0 0.0
    %1599 = vmatprep.subr.mxu0 0.0
    %1600 = vmatpush1.msra.mxu0 0.0
    %1601 = vmatprep.subr.mxu0 0.0
    %1602 = vmatpush1.msra.mxu0 0.0
    %1603 = vmatprep.subr.mxu0 0.0
    %1604 = vmatpush1.msra.mxu0 0.0
    %1605 = vmatprep.subr.mxu0 0.0
    %1606 = vmatpush1.msra.mxu0 0.0
    %1607 = vmatprep.subr.mxu0 0.0
    %1608 = vmatpush1.msra.mxu0 0.0
    %1609 = vmatprep.subr.mxu0 0.0
    %1610 = vmatpush1.msra.mxu0 0.0
    %1611 = vmatprep.subr.mxu0 0.0
    %1612 = vmatpush1.msra.mxu0 0.0
    %1613 = vmatprep.subr.mxu0 0.0
    %1614 = vmatpush1.msra.mxu0 0.0
    %1615 = vmatprep.subr.mxu0 0.0
    %1616 = vmatpush1.msra.mxu0 0.0
    %1617 = vmatprep.subr.mxu0 0.0
    %1618 = vmatpush1.msra.mxu0 0.0
    %1619 = vmatprep.subr.mxu0 0.0
    %1620 = vmatpush1.msra.mxu0 0.0
    %1621 = vmatprep.subr.mxu0 0.0
    %1622 = vmatpush1.msra.mxu0 0.0
    %1623 = vmatprep.subr.mxu0 0.0
    %1624 = vmatpush1.msra.mxu0 0.0
    %1625 = vmatprep.subr.mxu0 0.0
    %1626 = vmatpush1.msra.mxu0 0.0
    %1627 = vmatprep.subr.mxu0 0.0
    %1628 = vmatpush1.msra.mxu0 0.0
    %1629 = vmatprep.subr.mxu0 0.0
    %1630 = vmatpush1.msra.mxu0 0.0
    %1631 = vmatprep.subr.mxu0 0.0
    %1632 = vmatpush1.msra.mxu0 0.0
    %1633 = vmatprep.subr.mxu0 0.0
    %1634 = vmatpush1.msra.mxu0 0.0
    %1635 = vmatprep.subr.mxu0 0.0
    %1636 = vmatpush1.msra.mxu0 0.0
    %1637 = vmatprep.subr.mxu0 0.0
    %1638 = vmatpush1.msra.mxu0 0.0
    %1639 = vmatprep.subr.mxu0 0.0
    %1640 = vmatpush1.msra.mxu0 0.0
    %1641 = vmatprep.subr.mxu0 0.0
    %1642 = vmatpush1.msra.mxu0 0.0
    %1643 = vmatprep.subr.mxu0 0.0
    %1644 = vmatpush1.msra.mxu0 0.0
    %1645 = vmatprep.subr.mxu0 0.0
    %1646 = vmatpush1.msra.mxu0 0.0
    %1647 = vmatprep.subr.mxu0 0.0
    %1648 = vmatpush1.msra.mxu0 0.0
    %1649 = vmatprep.subr.mxu0 0.0
    %1650 = vmatpush1.msra.mxu0 0.0
    %1651 = vmatprep.mubr.f32.mxu0 0.0
    %1652 = vmatmul.mubr.f32.gmra.mrb[0].mxu0 %v1585
    %v1653 = vpop.f32.mrb[0].mxu0
    %v1654 = vadd.f32 0.0, %v1653
    %v1655 = vpop.f32.mrb[0].mxu0
    %1656 = vdwg.mxu0
    %v1657 = vadd.f32 %v1582, %v1654
    %v1658 = vld [vmem:[%s5 + $0x60] sm:$0xff]
    %v1660 = vsel %vm761, %v686, 0
    %1662 = vmatprep.subr.mxu0 0.0
    %1663 = vmatpush1.msra.mxu0 %v1658
    %1664 = vmatprep.subr.mxu0 0.0
    %1665 = vmatpush1.msra.mxu0 0.0
    %1666 = vmatprep.subr.mxu0 0.0
    %1667 = vmatpush1.msra.mxu0 0.0
    %1668 = vmatprep.subr.mxu0 0.0
    %1669 = vmatpush1.msra.mxu0 0.0
    %1670 = vmatprep.subr.mxu0 0.0
    %1671 = vmatpush1.msra.mxu0 0.0
    %1672 = vmatprep.subr.mxu0 0.0
    %1673 = vmatpush1.msra.mxu0 0.0
    %1674 = vmatprep.subr.mxu0 0.0
    %1675 = vmatpush1.msra.mxu0 0.0
    %1676 = vmatprep.subr.mxu0 0.0
    %1677 = vmatpush1.msra.mxu0 0.0
    %1678 = vmatprep.subr.mxu0 0.0
    %1679 = vmatpush1.msra.mxu0 0.0
    %1680 = vmatprep.subr.mxu0 0.0
    %1681 = vmatpush1.msra.mxu0 0.0
    %1682 = vmatprep.subr.mxu0 0.0
    %1683 = vmatpush1.msra.mxu0 0.0
    %1684 = vmatprep.subr.mxu0 0.0
    %1685 = vmatpush1.msra.mxu0 0.0
    %1686 = vmatprep.subr.mxu0 0.0
    %1687 = vmatpush1.msra.mxu0 0.0
    %1688 = vmatprep.subr.mxu0 0.0
    %1689 = vmatpush1.msra.mxu0 0.0
    %1690 = vmatprep.subr.mxu0 0.0
    %1691 = vmatpush1.msra.mxu0 0.0
    %1692 = vmatprep.subr.mxu0 0.0
    %1693 = vmatpush1.msra.mxu0 0.0
    %1694 = vmatprep.subr.mxu0 0.0
    %1695 = vmatpush1.msra.mxu0 0.0
    %1696 = vmatprep.subr.mxu0 0.0
    %1697 = vmatpush1.msra.mxu0 0.0
    %1698 = vmatprep.subr.mxu0 0.0
    %1699 = vmatpush1.msra.mxu0 0.0
    %1700 = vmatprep.subr.mxu0 0.0
    %1701 = vmatpush1.msra.mxu0 0.0
    %1702 = vmatprep.subr.mxu0 0.0
    %1703 = vmatpush1.msra.mxu0 0.0
    %1704 = vmatprep.subr.mxu0 0.0
    %1705 = vmatpush1.msra.mxu0 0.0
    %1706 = vmatprep.subr.mxu0 0.0
    %1707 = vmatpush1.msra.mxu0 0.0
    %1708 = vmatprep.subr.mxu0 0.0
    %1709 = vmatpush1.msra.mxu0 0.0
    %1710 = vmatprep.subr.mxu0 0.0
    %1711 = vmatpush1.msra.mxu0 0.0
    %1712 = vmatprep.subr.mxu0 0.0
    %1713 = vmatpush1.msra.mxu0 0.0
    %1714 = vmatprep.subr.mxu0 0.0
    %1715 = vmatpush1.msra.mxu0 0.0
    %1716 = vmatprep.subr.mxu0 0.0
    %1717 = vmatpush1.msra.mxu0 0.0
    %1718 = vmatprep.subr.mxu0 0.0
    %1719 = vmatpush1.msra.mxu0 0.0
    %1720 = vmatprep.subr.mxu0 0.0
    %1721 = vmatpush1.msra.mxu0 0.0
    %1722 = vmatprep.subr.mxu0 0.0
    %1723 = vmatpush1.msra.mxu0 0.0
    %1724 = vmatprep.subr.mxu0 0.0
    %1725 = vmatpush1.msra.mxu0 0.0
    %1726 = vmatprep.mubr.f32.mxu0 0.0
    %1727 = vmatmul.mubr.f32.gmra.mrb[0].mxu0 %v1660
    %v1728 = vpop.f32.mrb[0].mxu0
    %v1729 = vadd.f32 0.0, %v1728
    %v1730 = vpop.f32.mrb[0].mxu0
    %1731 = vdwg.mxu0
    %v1732 = vadd.f32 %v1657, %v1729
    %v1733 = vld [vmem:[%s5 + $0x68] sm:$0xff]
    %v1735 = vsel %vm761, %v691, 0
    %1737 = vmatprep.subr.mxu0 0.0
    %1738 = vmatpush1.msra.mxu0 %v1733
    %1739 = vmatprep.subr.mxu0 0.0
    %1740 = vmatpush1.msra.mxu0 0.0
    %1741 = vmatprep.subr.mxu0 0.0
    %1742 = vmatpush1.msra.mxu0 0.0
    %1743 = vmatprep.subr.mxu0 0.0
    %1744 = vmatpush1.msra.mxu0 0.0
    %1745 = vmatprep.subr.mxu0 0.0
    %1746 = vmatpush1.msra.mxu0 0.0
    %1747 = vmatprep.subr.mxu0 0.0
    %1748 = vmatpush1.msra.mxu0 0.0
    %1749 = vmatprep.subr.mxu0 0.0
    %1750 = vmatpush1.msra.mxu0 0.0
    %1751 = vmatprep.subr.mxu0 0.0
    %1752 = vmatpush1.msra.mxu0 0.0
    %1753 = vmatprep.subr.mxu0 0.0
    %1754 = vmatpush1.msra.mxu0 0.0
    %1755 = vmatprep.subr.mxu0 0.0
    %1756 = vmatpush1.msra.mxu0 0.0
    %1757 = vmatprep.subr.mxu0 0.0
    %1758 = vmatpush1.msra.mxu0 0.0
    %1759 = vmatprep.subr.mxu0 0.0
    %1760 = vmatpush1.msra.mxu0 0.0
    %1761 = vmatprep.subr.mxu0 0.0
    %1762 = vmatpush1.msra.mxu0 0.0
    %1763 = vmatprep.subr.mxu0 0.0
    %1764 = vmatpush1.msra.mxu0 0.0
    %1765 = vmatprep.subr.mxu0 0.0
    %1766 = vmatpush1.msra.mxu0 0.0
    %1767 = vmatprep.subr.mxu0 0.0
    %1768 = vmatpush1.msra.mxu0 0.0
    %1769 = vmatprep.subr.mxu0 0.0
    %1770 = vmatpush1.msra.mxu0 0.0
    %1771 = vmatprep.subr.mxu0 0.0
    %1772 = vmatpush1.msra.mxu0 0.0
    %1773 = vmatprep.subr.mxu0 0.0
    %1774 = vmatpush1.msra.mxu0 0.0
    %1775 = vmatprep.subr.mxu0 0.0
    %1776 = vmatpush1.msra.mxu0 0.0
    %1777 = vmatprep.subr.mxu0 0.0
    %1778 = vmatpush1.msra.mxu0 0.0
    %1779 = vmatprep.subr.mxu0 0.0
    %1780 = vmatpush1.msra.mxu0 0.0
    %1781 = vmatprep.subr.mxu0 0.0
    %1782 = vmatpush1.msra.mxu0 0.0
    %1783 = vmatprep.subr.mxu0 0.0
    %1784 = vmatpush1.msra.mxu0 0.0
    %1785 = vmatprep.subr.mxu0 0.0
    %1786 = vmatpush1.msra.mxu0 0.0
    %1787 = vmatprep.subr.mxu0 0.0
    %1788 = vmatpush1.msra.mxu0 0.0
    %1789 = vmatprep.subr.mxu0 0.0
    %1790 = vmatpush1.msra.mxu0 0.0
    %1791 = vmatprep.subr.mxu0 0.0
    %1792 = vmatpush1.msra.mxu0 0.0
    %1793 = vmatprep.subr.mxu0 0.0
    %1794 = vmatpush1.msra.mxu0 0.0
    %1795 = vmatprep.subr.mxu0 0.0
    %1796 = vmatpush1.msra.mxu0 0.0
    %1797 = vmatprep.subr.mxu0 0.0
    %1798 = vmatpush1.msra.mxu0 0.0
    %1799 = vmatprep.subr.mxu0 0.0
    %1800 = vmatpush1.msra.mxu0 0.0
    %1801 = vmatprep.mubr.f32.mxu0 0.0
    %1802 = vmatmul.mubr.f32.gmra.mrb[0].mxu0 %v1735
    %v1803 = vpop.f32.mrb[0].mxu0
    %v1804 = vadd.f32 0.0, %v1803
    %v1805 = vpop.f32.mrb[0].mxu0
    %1806 = vdwg.mxu0
    %v1807 = vadd.f32 %v1732, %v1804
    %v1808 = vld [vmem:[%s5 + $0x70] sm:$0xff]
    %v1810 = vsel %vm761, %v696, 0
    %1812 = vmatprep.subr.mxu0 0.0
    %1813 = vmatpush1.msra.mxu0 %v1808
    %1814 = vmatprep.subr.mxu0 0.0
    %1815 = vmatpush1.msra.mxu0 0.0
    %1816 = vmatprep.subr.mxu0 0.0
    %1817 = vmatpush1.msra.mxu0 0.0
    %1818 = vmatprep.subr.mxu0 0.0
    %1819 = vmatpush1.msra.mxu0 0.0
    %1820 = vmatprep.subr.mxu0 0.0
    %1821 = vmatpush1.msra.mxu0 0.0
    %1822 = vmatprep.subr.mxu0 0.0
    %1823 = vmatpush1.msra.mxu0 0.0
    %1824 = vmatprep.subr.mxu0 0.0
    %1825 = vmatpush1.msra.mxu0 0.0
    %1826 = vmatprep.subr.mxu0 0.0
    %1827 = vmatpush1.msra.mxu0 0.0
    %1828 = vmatprep.subr.mxu0 0.0
    %1829 = vmatpush1.msra.mxu0 0.0
    %1830 = vmatprep.subr.mxu0 0.0
    %1831 = vmatpush1.msra.mxu0 0.0
    %1832 = vmatprep.subr.mxu0 0.0
    %1833 = vmatpush1.msra.mxu0 0.0
    %1834 = vmatprep.subr.mxu0 0.0
    %1835 = vmatpush1.msra.mxu0 0.0
    %1836 = vmatprep.subr.mxu0 0.0
    %1837 = vmatpush1.msra.mxu0 0.0
    %1838 = vmatprep.subr.mxu0 0.0
    %1839 = vmatpush1.msra.mxu0 0.0
    %1840 = vmatprep.subr.mxu0 0.0
    %1841 = vmatpush1.msra.mxu0 0.0
    %1842 = vmatprep.subr.mxu0 0.0
    %1843 = vmatpush1.msra.mxu0 0.0
    %1844 = vmatprep.subr.mxu0 0.0
    %1845 = vmatpush1.msra.mxu0 0.0
    %1846 = vmatprep.subr.mxu0 0.0
    %1847 = vmatpush1.msra.mxu0 0.0
    %1848 = vmatprep.subr.mxu0 0.0
    %1849 = vmatpush1.msra.mxu0 0.0
    %1850 = vmatprep.subr.mxu0 0.0
    %1851 = vmatpush1.msra.mxu0 0.0
    %1852 = vmatprep.subr.mxu0 0.0
    %1853 = vmatpush1.msra.mxu0 0.0
    %1854 = vmatprep.subr.mxu0 0.0
    %1855 = vmatpush1.msra.mxu0 0.0
    %1856 = vmatprep.subr.mxu0 0.0
    %1857 = vmatpush1.msra.mxu0 0.0
    %1858 = vmatprep.subr.mxu0 0.0
    %1859 = vmatpush1.msra.mxu0 0.0
    %1860 = vmatprep.subr.mxu0 0.0
    %1861 = vmatpush1.msra.mxu0 0.0
    %1862 = vmatprep.subr.mxu0 0.0
    %1863 = vmatpush1.msra.mxu0 0.0
    %1864 = vmatprep.subr.mxu0 0.0
    %1865 = vmatpush1.msra.mxu0 0.0
    %1866 = vmatprep.subr.mxu0 0.0
    %1867 = vmatpush1.msra.mxu0 0.0
    %1868 = vmatprep.subr.mxu0 0.0
    %1869 = vmatpush1.msra.mxu0 0.0
    %1870 = vmatprep.subr.mxu0 0.0
    %1871 = vmatpush1.msra.mxu0 0.0
    %1872 = vmatprep.subr.mxu0 0.0
    %1873 = vmatpush1.msra.mxu0 0.0
    %1874 = vmatprep.subr.mxu0 0.0
    %1875 = vmatpush1.msra.mxu0 0.0
    %1876 = vmatprep.mubr.f32.mxu0 0.0
    %1877 = vmatmul.mubr.f32.gmra.mrb[0].mxu0 %v1810
    %v1878 = vpop.f32.mrb[0].mxu0
    %v1879 = vadd.f32 0.0, %v1878
    %v1880 = vpop.f32.mrb[0].mxu0
    %1881 = vdwg.mxu0
    %v1882 = vadd.f32 %v1807, %v1879
    %v1883 = vld [vmem:[%s5 + $0x78] sm:$0xff]
    %v1885 = vsel %vm761, %v701, 0
    %1887 = vmatprep.subr.mxu0 0.0
    %1888 = vmatpush1.msra.mxu0 %v1883
    %1889 = vmatprep.subr.mxu0 0.0
    %1890 = vmatpush1.msra.mxu0 0.0
    %1891 = vmatprep.subr.mxu0 0.0
    %1892 = vmatpush1.msra.mxu0 0.0
    %1893 = vmatprep.subr.mxu0 0.0
    %1894 = vmatpush1.msra.mxu0 0.0
    %1895 = vmatprep.subr.mxu0 0.0
    %1896 = vmatpush1.msra.mxu0 0.0
    %1897 = vmatprep.subr.mxu0 0.0
    %1898 = vmatpush1.msra.mxu0 0.0
    %1899 = vmatprep.subr.mxu0 0.0
    %1900 = vmatpush1.msra.mxu0 0.0
    %1901 = vmatprep.subr.mxu0 0.0
    %1902 = vmatpush1.msra.mxu0 0.0
    %1903 = vmatprep.subr.mxu0 0.0
    %1904 = vmatpush1.msra.mxu0 0.0
    %1905 = vmatprep.subr.mxu0 0.0
    %1906 = vmatpush1.msra.mxu0 0.0
    %1907 = vmatprep.subr.mxu0 0.0
    %1908 = vmatpush1.msra.mxu0 0.0
    %1909 = vmatprep.subr.mxu0 0.0
    %1910 = vmatpush1.msra.mxu0 0.0
    %1911 = vmatprep.subr.mxu0 0.0
    %1912 = vmatpush1.msra.mxu0 0.0
    %1913 = vmatprep.subr.mxu0 0.0
    %1914 = vmatpush1.msra.mxu0 0.0
    %1915 = vmatprep.subr.mxu0 0.0
    %1916 = vmatpush1.msra.mxu0 0.0
    %1917 = vmatprep.subr.mxu0 0.0
    %1918 = vmatpush1.msra.mxu0 0.0
    %1919 = vmatprep.subr.mxu0 0.0
    %1920 = vmatpush1.msra.mxu0 0.0
    %1921 = vmatprep.subr.mxu0 0.0
    %1922 = vmatpush1.msra.mxu0 0.0
    %1923 = vmatprep.subr.mxu0 0.0
    %1924 = vmatpush1.msra.mxu0 0.0
    %1925 = vmatprep.subr.mxu0 0.0
    %1926 = vmatpush1.msra.mxu0 0.0
    %1927 = vmatprep.subr.mxu0 0.0
    %1928 = vmatpush1.msra.mxu0 0.0
    %1929 = vmatprep.subr.mxu0 0.0
    %1930 = vmatpush1.msra.mxu0 0.0
    %1931 = vmatprep.subr.mxu0 0.0
    %1932 = vmatpush1.msra.mxu0 0.0
    %1933 = vmatprep.subr.mxu0 0.0
    %1934 = vmatpush1.msra.mxu0 0.0
    %1935 = vmatprep.subr.mxu0 0.0
    %1936 = vmatpush1.msra.mxu0 0.0
    %1937 = vmatprep.subr.mxu0 0.0
    %1938 = vmatpush1.msra.mxu0 0.0
    %1939 = vmatprep.subr.mxu0 0.0
    %1940 = vmatpush1.msra.mxu0 0.0
    %1941 = vmatprep.subr.mxu0 0.0
    %1942 = vmatpush1.msra.mxu0 0.0
    %1943 = vmatprep.subr.mxu0 0.0
    %1944 = vmatpush1.msra.mxu0 0.0
    %1945 = vmatprep.subr.mxu0 0.0
    %1946 = vmatpush1.msra.mxu0 0.0
    %1947 = vmatprep.subr.mxu0 0.0
    %1948 = vmatpush1.msra.mxu0 0.0
    %1949 = vmatprep.subr.mxu0 0.0
    %1950 = vmatpush1.msra.mxu0 0.0
    %1951 = vmatprep.mubr.f32.mxu0 0.0
    %1952 = vmatmul.mubr.f32.gmra.mrb[0].mxu0 %v1885
    %v1953 = vpop.f32.mrb[0].mxu0
    %v1954 = vadd.f32 0.0, %v1953
    %v1955 = vpop.f32.mrb[0].mxu0
    %1956 = vdwg.mxu0
    %v1957 = vadd.f32 %v1882, %v1954
    %v1958 = vld [vmem:[%s5 + $0x80] sm:$0xff]
    %v1960 = vsel %vm761, %v706, 0
    %1962 = vmatprep.subr.mxu0 0.0
    %1963 = vmatpush1.msra.mxu0 %v1958
    %1964 = vmatprep.subr.mxu0 0.0
    %1965 = vmatpush1.msra.mxu0 0.0
    %1966 = vmatprep.subr.mxu0 0.0
    %1967 = vmatpush1.msra.mxu0 0.0
    %1968 = vmatprep.subr.mxu0 0.0
    %1969 = vmatpush1.msra.mxu0 0.0
    %1970 = vmatprep.subr.mxu0 0.0
    %1971 = vmatpush1.msra.mxu0 0.0
    %1972 = vmatprep.subr.mxu0 0.0
    %1973 = vmatpush1.msra.mxu0 0.0
    %1974 = vmatprep.subr.mxu0 0.0
    %1975 = vmatpush1.msra.mxu0 0.0
    %1976 = vmatprep.subr.mxu0 0.0
    %1977 = vmatpush1.msra.mxu0 0.0
    %1978 = vmatprep.subr.mxu0 0.0
    %1979 = vmatpush1.msra.mxu0 0.0
    %1980 = vmatprep.subr.mxu0 0.0
    %1981 = vmatpush1.msra.mxu0 0.0
    %1982 = vmatprep.subr.mxu0 0.0
    %1983 = vmatpush1.msra.mxu0 0.0
    %1984 = vmatprep.subr.mxu0 0.0
    %1985 = vmatpush1.msra.mxu0 0.0
    %1986 = vmatprep.subr.mxu0 0.0
    %1987 = vmatpush1.msra.mxu0 0.0
    %1988 = vmatprep.subr.mxu0 0.0
    %1989 = vmatpush1.msra.mxu0 0.0
    %1990 = vmatprep.subr.mxu0 0.0
    %1991 = vmatpush1.msra.mxu0 0.0
    %1992 = vmatprep.subr.mxu0 0.0
    %1993 = vmatpush1.msra.mxu0 0.0
    %1994 = vmatprep.subr.mxu0 0.0
    %1995 = vmatpush1.msra.mxu0 0.0
    %1996 = vmatprep.subr.mxu0 0.0
    %1997 = vmatpush1.msra.mxu0 0.0
    %1998 = vmatprep.subr.mxu0 0.0
    %1999 = vmatpush1.msra.mxu0 0.0
    %2000 = vmatprep.subr.mxu0 0.0
    %2001 = vmatpush1.msra.mxu0 0.0
    %2002 = vmatprep.subr.mxu0 0.0
    %2003 = vmatpush1.msra.mxu0 0.0
    %2004 = vmatprep.subr.mxu0 0.0
    %2005 = vmatpush1.msra.mxu0 0.0
    %2006 = vmatprep.subr.mxu0 0.0
    %2007 = vmatpush1.msra.mxu0 0.0
    %2008 = vmatprep.subr.mxu0 0.0
    %2009 = vmatpush1.msra.mxu0 0.0
    %2010 = vmatprep.subr.mxu0 0.0
    %2011 = vmatpush1.msra.mxu0 0.0
    %2012 = vmatprep.subr.mxu0 0.0
    %2013 = vmatpush1.msra.mxu0 0.0
    %2014 = vmatprep.subr.mxu0 0.0
    %2015 = vmatpush1.msra.mxu0 0.0
    %2016 = vmatprep.subr.mxu0 0.0
    %2017 = vmatpush1.msra.mxu0 0.0
    %2018 = vmatprep.subr.mxu0 0.0
    %2019 = vmatpush1.msra.mxu0 0.0
    %2020 = vmatprep.subr.mxu0 0.0
    %2021 = vmatpush1.msra.mxu0 0.0
    %2022 = vmatprep.subr.mxu0 0.0
    %2023 = vmatpush1.msra.mxu0 0.0
    %2024 = vmatprep.subr.mxu0 0.0
    %2025 = vmatpush1.msra.mxu0 0.0
    %2026 = vmatprep.mubr.f32.mxu0 0.0
    %2027 = vmatmul.mubr.f32.gmra.mrb[0].mxu0 %v1960
    %v2028 = vpop.f32.mrb[0].mxu0
    %v2029 = vadd.f32 0.0, %v2028
    %v2030 = vpop.f32.mrb[0].mxu0
    %2031 = vdwg.mxu0
    %v2032 = vadd.f32 %v1957, %v2029
    %v2033 = vld [vmem:[%s5 + $0x88] sm:$0xff]
    %v2035 = vsel %vm761, %v711, 0
    %2037 = vmatprep.subr.mxu0 0.0
    %2038 = vmatpush1.msra.mxu0 %v2033
    %2039 = vmatprep.subr.mxu0 0.0
    %2040 = vmatpush1.msra.mxu0 0.0
    %2041 = vmatprep.subr.mxu0 0.0
    %2042 = vmatpush1.msra.mxu0 0.0
    %2043 = vmatprep.subr.mxu0 0.0
    %2044 = vmatpush1.msra.mxu0 0.0
    %2045 = vmatprep.subr.mxu0 0.0
    %2046 = vmatpush1.msra.mxu0 0.0
    %2047 = vmatprep.subr.mxu0 0.0
    %2048 = vmatpush1.msra.mxu0 0.0
    %2049 = vmatprep.subr.mxu0 0.0
    %2050 = vmatpush1.msra.mxu0 0.0
    %2051 = vmatprep.subr.mxu0 0.0
    %2052 = vmatpush1.msra.mxu0 0.0
    %2053 = vmatprep.subr.mxu0 0.0
    %2054 = vmatpush1.msra.mxu0 0.0
    %2055 = vmatprep.subr.mxu0 0.0
    %2056 = vmatpush1.msra.mxu0 0.0
    %2057 = vmatprep.subr.mxu0 0.0
    %2058 = vmatpush1.msra.mxu0 0.0
    %2059 = vmatprep.subr.mxu0 0.0
    %2060 = vmatpush1.msra.mxu0 0.0
    %2061 = vmatprep.subr.mxu0 0.0
    %2062 = vmatpush1.msra.mxu0 0.0
    %2063 = vmatprep.subr.mxu0 0.0
    %2064 = vmatpush1.msra.mxu0 0.0
    %2065 = vmatprep.subr.mxu0 0.0
    %2066 = vmatpush1.msra.mxu0 0.0
    %2067 = vmatprep.subr.mxu0 0.0
    %2068 = vmatpush1.msra.mxu0 0.0
    %2069 = vmatprep.subr.mxu0 0.0
    %2070 = vmatpush1.msra.mxu0 0.0
    %2071 = vmatprep.subr.mxu0 0.0
    %2072 = vmatpush1.msra.mxu0 0.0
    %2073 = vmatprep.subr.mxu0 0.0
    %2074 = vmatpush1.msra.mxu0 0.0
    %2075 = vmatprep.subr.mxu0 0.0
    %2076 = vmatpush1.msra.mxu0 0.0
    %2077 = vmatprep.subr.mxu0 0.0
    %2078 = vmatpush1.msra.mxu0 0.0
    %2079 = vmatprep.subr.mxu0 0.0
    %2080 = vmatpush1.msra.mxu0 0.0
    %2081 = vmatprep.subr.mxu0 0.0
    %2082 = vmatpush1.msra.mxu0 0.0
    %2083 = vmatprep.subr.mxu0 0.0
    %2084 = vmatpush1.msra.mxu0 0.0
    %2085 = vmatprep.subr.mxu0 0.0
    %2086 = vmatpush1.msra.mxu0 0.0
    %2087 = vmatprep.subr.mxu0 0.0
    %2088 = vmatpush1.msra.mxu0 0.0
    %2089 = vmatprep.subr.mxu0 0.0
    %2090 = vmatpush1.msra.mxu0 0.0
    %2091 = vmatprep.subr.mxu0 0.0
    %2092 = vmatpush1.msra.mxu0 0.0
    %2093 = vmatprep.subr.mxu0 0.0
    %2094 = vmatpush1.msra.mxu0 0.0
    %2095 = vmatprep.subr.mxu0 0.0
    %2096 = vmatpush1.msra.mxu0 0.0
    %2097 = vmatprep.subr.mxu0 0.0
    %2098 = vmatpush1.msra.mxu0 0.0
    %2099 = vmatprep.subr.mxu0 0.0
    %2100 = vmatpush1.msra.mxu0 0.0
    %2101 = vmatprep.mubr.f32.mxu0 0.0
    %2102 = vmatmul.mubr.f32.gmra.mrb[0].mxu0 %v2035
    %v2103 = vpop.f32.mrb[0].mxu0
    %v2104 = vadd.f32 0.0, %v2103
    %v2105 = vpop.f32.mrb[0].mxu0
    %2106 = vdwg.mxu0
    %v2107 = vadd.f32 %v2032, %v2104
    %v2108 = vld [vmem:[%s5 + $0x90] sm:$0xff]
    %v2110 = vsel %vm761, %v716, 0
    %2112 = vmatprep.subr.mxu0 0.0
    %2113 = vmatpush1.msra.mxu0 %v2108
    %2114 = vmatprep.subr.mxu0 0.0
    %2115 = vmatpush1.msra.mxu0 0.0
    %2116 = vmatprep.subr.mxu0 0.0
    %2117 = vmatpush1.msra.mxu0 0.0
    %2118 = vmatprep.subr.mxu0 0.0
    %2119 = vmatpush1.msra.mxu0 0.0
    %2120 = vmatprep.subr.mxu0 0.0
    %2121 = vmatpush1.msra.mxu0 0.0
    %2122 = vmatprep.subr.mxu0 0.0
    %2123 = vmatpush1.msra.mxu0 0.0
    %2124 = vmatprep.subr.mxu0 0.0
    %2125 = vmatpush1.msra.mxu0 0.0
    %2126 = vmatprep.subr.mxu0 0.0
    %2127 = vmatpush1.msra.mxu0 0.0
    %2128 = vmatprep.subr.mxu0 0.0
    %2129 = vmatpush1.msra.mxu0 0.0
    %2130 = vmatprep.subr.mxu0 0.0
    %2131 = vmatpush1.msra.mxu0 0.0
    %2132 = vmatprep.subr.mxu0 0.0
    %2133 = vmatpush1.msra.mxu0 0.0
    %2134 = vmatprep.subr.mxu0 0.0
    %2135 = vmatpush1.msra.mxu0 0.0
    %2136 = vmatprep.subr.mxu0 0.0
    %2137 = vmatpush1.msra.mxu0 0.0
    %2138 = vmatprep.subr.mxu0 0.0
    %2139 = vmatpush1.msra.mxu0 0.0
    %2140 = vmatprep.subr.mxu0 0.0
    %2141 = vmatpush1.msra.mxu0 0.0
    %2142 = vmatprep.subr.mxu0 0.0
    %2143 = vmatpush1.msra.mxu0 0.0
    %2144 = vmatprep.subr.mxu0 0.0
    %2145 = vmatpush1.msra.mxu0 0.0
    %2146 = vmatprep.subr.mxu0 0.0
    %2147 = vmatpush1.msra.mxu0 0.0
    %2148 = vmatprep.subr.mxu0 0.0
    %2149 = vmatpush1.msra.mxu0 0.0
    %2150 = vmatprep.subr.mxu0 0.0
    %2151 = vmatpush1.msra.mxu0 0.0
    %2152 = vmatprep.subr.mxu0 0.0
    %2153 = vmatpush1.msra.mxu0 0.0
    %2154 = vmatprep.subr.mxu0 0.0
    %2155 = vmatpush1.msra.mxu0 0.0
    %2156 = vmatprep.subr.mxu0 0.0
    %2157 = vmatpush1.msra.mxu0 0.0
    %2158 = vmatprep.subr.mxu0 0.0
    %2159 = vmatpush1.msra.mxu0 0.0
    %2160 = vmatprep.subr.mxu0 0.0
    %2161 = vmatpush1.msra.mxu0 0.0
    %2162 = vmatprep.subr.mxu0 0.0
    %2163 = vmatpush1.msra.mxu0 0.0
    %2164 = vmatprep.subr.mxu0 0.0
    %2165 = vmatpush1.msra.mxu0 0.0
    %2166 = vmatprep.subr.mxu0 0.0
    %2167 = vmatpush1.msra.mxu0 0.0
    %2168 = vmatprep.subr.mxu0 0.0
    %2169 = vmatpush1.msra.mxu0 0.0
    %2170 = vmatprep.subr.mxu0 0.0
    %2171 = vmatpush1.msra.mxu0 0.0
    %2172 = vmatprep.subr.mxu0 0.0
    %2173 = vmatpush1.msra.mxu0 0.0
    %2174 = vmatprep.subr.mxu0 0.0
    %2175 = vmatpush1.msra.mxu0 0.0
    %2176 = vmatprep.mubr.f32.mxu0 0.0
    %2177 = vmatmul.mubr.f32.gmra.mrb[0].mxu0 %v2110
    %v2178 = vpop.f32.mrb[0].mxu0
    %v2179 = vadd.f32 0.0, %v2178
    %v2180 = vpop.f32.mrb[0].mxu0
    %2181 = vdwg.mxu0
    %v2182 = vadd.f32 %v2107, %v2179
    %v2183 = vld [vmem:[%s5 + $0x98] sm:$0xff]
    %v2185 = vsel %vm761, %v721, 0
    %2187 = vmatprep.subr.mxu0 0.0
    %2188 = vmatpush1.msra.mxu0 %v2183
    %2189 = vmatprep.subr.mxu0 0.0
    %2190 = vmatpush1.msra.mxu0 0.0
    %2191 = vmatprep.subr.mxu0 0.0
    %2192 = vmatpush1.msra.mxu0 0.0
    %2193 = vmatprep.subr.mxu0 0.0
    %2194 = vmatpush1.msra.mxu0 0.0
    %2195 = vmatprep.subr.mxu0 0.0
    %2196 = vmatpush1.msra.mxu0 0.0
    %2197 = vmatprep.subr.mxu0 0.0
    %2198 = vmatpush1.msra.mxu0 0.0
    %2199 = vmatprep.subr.mxu0 0.0
    %2200 = vmatpush1.msra.mxu0 0.0
    %2201 = vmatprep.subr.mxu0 0.0
    %2202 = vmatpush1.msra.mxu0 0.0
    %2203 = vmatprep.subr.mxu0 0.0
    %2204 = vmatpush1.msra.mxu0 0.0
    %2205 = vmatprep.subr.mxu0 0.0
    %2206 = vmatpush1.msra.mxu0 0.0
    %2207 = vmatprep.subr.mxu0 0.0
    %2208 = vmatpush1.msra.mxu0 0.0
    %2209 = vmatprep.subr.mxu0 0.0
    %2210 = vmatpush1.msra.mxu0 0.0
    %2211 = vmatprep.subr.mxu0 0.0
    %2212 = vmatpush1.msra.mxu0 0.0
    %2213 = vmatprep.subr.mxu0 0.0
    %2214 = vmatpush1.msra.mxu0 0.0
    %2215 = vmatprep.subr.mxu0 0.0
    %2216 = vmatpush1.msra.mxu0 0.0
    %2217 = vmatprep.subr.mxu0 0.0
    %2218 = vmatpush1.msra.mxu0 0.0
    %2219 = vmatprep.subr.mxu0 0.0
    %2220 = vmatpush1.msra.mxu0 0.0
    %2221 = vmatprep.subr.mxu0 0.0
    %2222 = vmatpush1.msra.mxu0 0.0
    %2223 = vmatprep.subr.mxu0 0.0
    %2224 = vmatpush1.msra.mxu0 0.0
    %2225 = vmatprep.subr.mxu0 0.0
    %2226 = vmatpush1.msra.mxu0 0.0
    %2227 = vmatprep.subr.mxu0 0.0
    %2228 = vmatpush1.msra.mxu0 0.0
    %2229 = vmatprep.subr.mxu0 0.0
    %2230 = vmatpush1.msra.mxu0 0.0
    %2231 = vmatprep.subr.mxu0 0.0
    %2232 = vmatpush1.msra.mxu0 0.0
    %2233 = vmatprep.subr.mxu0 0.0
    %2234 = vmatpush1.msra.mxu0 0.0
    %2235 = vmatprep.subr.mxu0 0.0
    %2236 = vmatpush1.msra.mxu0 0.0
    %2237 = vmatprep.subr.mxu0 0.0
    %2238 = vmatpush1.msra.mxu0 0.0
    %2239 = vmatprep.subr.mxu0 0.0
    %2240 = vmatpush1.msra.mxu0 0.0
    %2241 = vmatprep.subr.mxu0 0.0
    %2242 = vmatpush1.msra.mxu0 0.0
    %2243 = vmatprep.subr.mxu0 0.0
    %2244 = vmatpush1.msra.mxu0 0.0
    %2245 = vmatprep.subr.mxu0 0.0
    %2246 = vmatpush1.msra.mxu0 0.0
    %2247 = vmatprep.subr.mxu0 0.0
    %2248 = vmatpush1.msra.mxu0 0.0
    %2249 = vmatprep.subr.mxu0 0.0
    %2250 = vmatpush1.msra.mxu0 0.0
    %2251 = vmatprep.mubr.f32.mxu0 0.0
    %2252 = vmatmul.mubr.f32.gmra.mrb[0].mxu0 %v2185
    %v2253 = vpop.f32.mrb[0].mxu0
    %v2254 = vadd.f32 0.0, %v2253
    %v2255 = vpop.f32.mrb[0].mxu0
    %2256 = vdwg.mxu0
    %v2257 = vadd.f32 %v2182, %v2254
    %v2258 = vld [vmem:[%s5 + $0xa0] sm:$0xff]
    %v2260 = vsel %vm761, %v726, 0
    %2262 = vmatprep.subr.mxu0 0.0
    %2263 = vmatpush1.msra.mxu0 %v2258
    %2264 = vmatprep.subr.mxu0 0.0
    %2265 = vmatpush1.msra.mxu0 0.0
    %2266 = vmatprep.subr.mxu0 0.0
    %2267 = vmatpush1.msra.mxu0 0.0
    %2268 = vmatprep.subr.mxu0 0.0
    %2269 = vmatpush1.msra.mxu0 0.0
    %2270 = vmatprep.subr.mxu0 0.0
    %2271 = vmatpush1.msra.mxu0 0.0
    %2272 = vmatprep.subr.mxu0 0.0
    %2273 = vmatpush1.msra.mxu0 0.0
    %2274 = vmatprep.subr.mxu0 0.0
    %2275 = vmatpush1.msra.mxu0 0.0
    %2276 = vmatprep.subr.mxu0 0.0
    %2277 = vmatpush1.msra.mxu0 0.0
    %2278 = vmatprep.subr.mxu0 0.0
    %2279 = vmatpush1.msra.mxu0 0.0
    %2280 = vmatprep.subr.mxu0 0.0
    %2281 = vmatpush1.msra.mxu0 0.0
    %2282 = vmatprep.subr.mxu0 0.0
    %2283 = vmatpush1.msra.mxu0 0.0
    %2284 = vmatprep.subr.mxu0 0.0
    %2285 = vmatpush1.msra.mxu0 0.0
    %2286 = vmatprep.subr.mxu0 0.0
    %2287 = vmatpush1.msra.mxu0 0.0
    %2288 = vmatprep.subr.mxu0 0.0
    %2289 = vmatpush1.msra.mxu0 0.0
    %2290 = vmatprep.subr.mxu0 0.0
    %2291 = vmatpush1.msra.mxu0 0.0
    %2292 = vmatprep.subr.mxu0 0.0
    %2293 = vmatpush1.msra.mxu0 0.0
    %2294 = vmatprep.subr.mxu0 0.0
    %2295 = vmatpush1.msra.mxu0 0.0
    %2296 = vmatprep.subr.mxu0 0.0
    %2297 = vmatpush1.msra.mxu0 0.0
    %2298 = vmatprep.subr.mxu0 0.0
    %2299 = vmatpush1.msra.mxu0 0.0
    %2300 = vmatprep.subr.mxu0 0.0
    %2301 = vmatpush1.msra.mxu0 0.0
    %2302 = vmatprep.subr.mxu0 0.0
    %2303 = vmatpush1.msra.mxu0 0.0
    %2304 = vmatprep.subr.mxu0 0.0
    %2305 = vmatpush1.msra.mxu0 0.0
    %2306 = vmatprep.subr.mxu0 0.0
    %2307 = vmatpush1.msra.mxu0 0.0
    %2308 = vmatprep.subr.mxu0 0.0
    %2309 = vmatpush1.msra.mxu0 0.0
    %2310 = vmatprep.subr.mxu0 0.0
    %2311 = vmatpush1.msra.mxu0 0.0
    %2312 = vmatprep.subr.mxu0 0.0
    %2313 = vmatpush1.msra.mxu0 0.0
    %2314 = vmatprep.subr.mxu0 0.0
    %2315 = vmatpush1.msra.mxu0 0.0
    %2316 = vmatprep.subr.mxu0 0.0
    %2317 = vmatpush1.msra.mxu0 0.0
    %2318 = vmatprep.subr.mxu0 0.0
    %2319 = vmatpush1.msra.mxu0 0.0
    %2320 = vmatprep.subr.mxu0 0.0
    %2321 = vmatpush1.msra.mxu0 0.0
    %2322 = vmatprep.subr.mxu0 0.0
    %2323 = vmatpush1.msra.mxu0 0.0
    %2324 = vmatprep.subr.mxu0 0.0
    %2325 = vmatpush1.msra.mxu0 0.0
    %2326 = vmatprep.mubr.f32.mxu0 0.0
    %2327 = vmatmul.mubr.f32.gmra.mrb[0].mxu0 %v2260
    %v2328 = vpop.f32.mrb[0].mxu0
    %v2329 = vadd.f32 0.0, %v2328
    %v2330 = vpop.f32.mrb[0].mxu0
    %2331 = vdwg.mxu0
    %v2332 = vadd.f32 %v2257, %v2329
    %v2333 = vld [vmem:[%s5 + $0xa8] sm:$0xff]
    %v2335 = vsel %vm761, %v731, 0
    %2337 = vmatprep.subr.mxu0 0.0
    %2338 = vmatpush1.msra.mxu0 %v2333
    %2339 = vmatprep.subr.mxu0 0.0
    %2340 = vmatpush1.msra.mxu0 0.0
    %2341 = vmatprep.subr.mxu0 0.0
    %2342 = vmatpush1.msra.mxu0 0.0
    %2343 = vmatprep.subr.mxu0 0.0
    %2344 = vmatpush1.msra.mxu0 0.0
    %2345 = vmatprep.subr.mxu0 0.0
    %2346 = vmatpush1.msra.mxu0 0.0
    %2347 = vmatprep.subr.mxu0 0.0
    %2348 = vmatpush1.msra.mxu0 0.0
    %2349 = vmatprep.subr.mxu0 0.0
    %2350 = vmatpush1.msra.mxu0 0.0
    %2351 = vmatprep.subr.mxu0 0.0
    %2352 = vmatpush1.msra.mxu0 0.0
    %2353 = vmatprep.subr.mxu0 0.0
    %2354 = vmatpush1.msra.mxu0 0.0
    %2355 = vmatprep.subr.mxu0 0.0
    %2356 = vmatpush1.msra.mxu0 0.0
    %2357 = vmatprep.subr.mxu0 0.0
    %2358 = vmatpush1.msra.mxu0 0.0
    %2359 = vmatprep.subr.mxu0 0.0
    %2360 = vmatpush1.msra.mxu0 0.0
    %2361 = vmatprep.subr.mxu0 0.0
    %2362 = vmatpush1.msra.mxu0 0.0
    %2363 = vmatprep.subr.mxu0 0.0
    %2364 = vmatpush1.msra.mxu0 0.0
    %2365 = vmatprep.subr.mxu0 0.0
    %2366 = vmatpush1.msra.mxu0 0.0
    %2367 = vmatprep.subr.mxu0 0.0
    %2368 = vmatpush1.msra.mxu0 0.0
    %2369 = vmatprep.subr.mxu0 0.0
    %2370 = vmatpush1.msra.mxu0 0.0
    %2371 = vmatprep.subr.mxu0 0.0
    %2372 = vmatpush1.msra.mxu0 0.0
    %2373 = vmatprep.subr.mxu0 0.0
    %2374 = vmatpush1.msra.mxu0 0.0
    %2375 = vmatprep.subr.mxu0 0.0
    %2376 = vmatpush1.msra.mxu0 0.0
    %2377 = vmatprep.subr.mxu0 0.0
    %2378 = vmatpush1.msra.mxu0 0.0
    %2379 = vmatprep.subr.mxu0 0.0
    %2380 = vmatpush1.msra.mxu0 0.0
    %2381 = vmatprep.subr.mxu0 0.0
    %2382 = vmatpush1.msra.mxu0 0.0
    %2383 = vmatprep.subr.mxu0 0.0
    %2384 = vmatpush1.msra.mxu0 0.0
    %2385 = vmatprep.subr.mxu0 0.0
    %2386 = vmatpush1.msra.mxu0 0.0
    %2387 = vmatprep.subr.mxu0 0.0
    %2388 = vmatpush1.msra.mxu0 0.0
    %2389 = vmatprep.subr.mxu0 0.0
    %2390 = vmatpush1.msra.mxu0 0.0
    %2391 = vmatprep.subr.mxu0 0.0
    %2392 = vmatpush1.msra.mxu0 0.0
    %2393 = vmatprep.subr.mxu0 0.0
    %2394 = vmatpush1.msra.mxu0 0.0
    %2395 = vmatprep.subr.mxu0 0.0
    %2396 = vmatpush1.msra.mxu0 0.0
    %2397 = vmatprep.subr.mxu0 0.0
    %2398 = vmatpush1.msra.mxu0 0.0
    %2399 = vmatprep.subr.mxu0 0.0
    %2400 = vmatpush1.msra.mxu0 0.0
    %2401 = vmatprep.mubr.f32.mxu0 0.0
    %2402 = vmatmul.mubr.f32.gmra.mrb[0].mxu0 %v2335
    %v2403 = vpop.f32.mrb[0].mxu0
    %v2404 = vadd.f32 0.0, %v2403
    %v2405 = vpop.f32.mrb[0].mxu0
    %2406 = vdwg.mxu0
    %v2407 = vadd.f32 %v2332, %v2404
    %v2408 = vld [vmem:[%s5 + $0xb0] sm:$0xff]
    %v2410 = vsel %vm761, %v736, 0
    %2412 = vmatprep.subr.mxu0 0.0
    %2413 = vmatpush1.msra.mxu0 %v2408
    %2414 = vmatprep.subr.mxu0 0.0
    %2415 = vmatpush1.msra.mxu0 0.0
    %2416 = vmatprep.subr.mxu0 0.0
    %2417 = vmatpush1.msra.mxu0 0.0
    %2418 = vmatprep.subr.mxu0 0.0
    %2419 = vmatpush1.msra.mxu0 0.0
    %2420 = vmatprep.subr.mxu0 0.0
    %2421 = vmatpush1.msra.mxu0 0.0
    %2422 = vmatprep.subr.mxu0 0.0
    %2423 = vmatpush1.msra.mxu0 0.0
    %2424 = vmatprep.subr.mxu0 0.0
    %2425 = vmatpush1.msra.mxu0 0.0
    %2426 = vmatprep.subr.mxu0 0.0
    %2427 = vmatpush1.msra.mxu0 0.0
    %2428 = vmatprep.subr.mxu0 0.0
    %2429 = vmatpush1.msra.mxu0 0.0
    %2430 = vmatprep.subr.mxu0 0.0
    %2431 = vmatpush1.msra.mxu0 0.0
    %2432 = vmatprep.subr.mxu0 0.0
    %2433 = vmatpush1.msra.mxu0 0.0
    %2434 = vmatprep.subr.mxu0 0.0
    %2435 = vmatpush1.msra.mxu0 0.0
    %2436 = vmatprep.subr.mxu0 0.0
    %2437 = vmatpush1.msra.mxu0 0.0
    %2438 = vmatprep.subr.mxu0 0.0
    %2439 = vmatpush1.msra.mxu0 0.0
    %2440 = vmatprep.subr.mxu0 0.0
    %2441 = vmatpush1.msra.mxu0 0.0
    %2442 = vmatprep.subr.mxu0 0.0
    %2443 = vmatpush1.msra.mxu0 0.0
    %2444 = vmatprep.subr.mxu0 0.0
    %2445 = vmatpush1.msra.mxu0 0.0
    %2446 = vmatprep.subr.mxu0 0.0
    %2447 = vmatpush1.msra.mxu0 0.0
    %2448 = vmatprep.subr.mxu0 0.0
    %2449 = vmatpush1.msra.mxu0 0.0
    %2450 = vmatprep.subr.mxu0 0.0
    %2451 = vmatpush1.msra.mxu0 0.0
    %2452 = vmatprep.subr.mxu0 0.0
    %2453 = vmatpush1.msra.mxu0 0.0
    %2454 = vmatprep.subr.mxu0 0.0
    %2455 = vmatpush1.msra.mxu0 0.0
    %2456 = vmatprep.subr.mxu0 0.0
    %2457 = vmatpush1.msra.mxu0 0.0
    %2458 = vmatprep.subr.mxu0 0.0
    %2459 = vmatpush1.msra.mxu0 0.0
    %2460 = vmatprep.subr.mxu0 0.0
    %2461 = vmatpush1.msra.mxu0 0.0
    %2462 = vmatprep.subr.mxu0 0.0
    %2463 = vmatpush1.msra.mxu0 0.0
    %2464 = vmatprep.subr.mxu0 0.0
    %2465 = vmatpush1.msra.mxu0 0.0
    %2466 = vmatprep.subr.mxu0 0.0
    %2467 = vmatpush1.msra.mxu0 0.0
    %2468 = vmatprep.subr.mxu0 0.0
    %2469 = vmatpush1.msra.mxu0 0.0
    %2470 = vmatprep.subr.mxu0 0.0
    %2471 = vmatpush1.msra.mxu0 0.0
    %2472 = vmatprep.subr.mxu0 0.0
    %2473 = vmatpush1.msra.mxu0 0.0
    %2474 = vmatprep.subr.mxu0 0.0
    %2475 = vmatpush1.msra.mxu0 0.0
    %2476 = vmatprep.mubr.f32.mxu0 0.0
    %2477 = vmatmul.mubr.f32.gmra.mrb[0].mxu0 %v2410
    %v2478 = vpop.f32.mrb[0].mxu0
    %v2479 = vadd.f32 0.0, %v2478
    %v2480 = vpop.f32.mrb[0].mxu0
    %2481 = vdwg.mxu0
    %v2482 = vadd.f32 %v2407, %v2479
    %v2483 = vld [vmem:[%s5 + $0xb8] sm:$0xff]
    %v2485 = vsel %vm761, %v741, 0
    %2487 = vmatprep.subr.mxu0 0.0
    %2488 = vmatpush1.msra.mxu0 %v2483
    %2489 = vmatprep.subr.mxu0 0.0
    %2490 = vmatpush1.msra.mxu0 0.0
    %2491 = vmatprep.subr.mxu0 0.0
    %2492 = vmatpush1.msra.mxu0 0.0
    %2493 = vmatprep.subr.mxu0 0.0
    %2494 = vmatpush1.msra.mxu0 0.0
    %2495 = vmatprep.subr.mxu0 0.0
    %2496 = vmatpush1.msra.mxu0 0.0
    %2497 = vmatprep.subr.mxu0 0.0
    %2498 = vmatpush1.msra.mxu0 0.0
    %2499 = vmatprep.subr.mxu0 0.0
    %2500 = vmatpush1.msra.mxu0 0.0
    %2501 = vmatprep.subr.mxu0 0.0
    %2502 = vmatpush1.msra.mxu0 0.0
    %2503 = vmatprep.subr.mxu0 0.0
    %2504 = vmatpush1.msra.mxu0 0.0
    %2505 = vmatprep.subr.mxu0 0.0
    %2506 = vmatpush1.msra.mxu0 0.0
    %2507 = vmatprep.subr.mxu0 0.0
    %2508 = vmatpush1.msra.mxu0 0.0
    %2509 = vmatprep.subr.mxu0 0.0
    %2510 = vmatpush1.msra.mxu0 0.0
    %2511 = vmatprep.subr.mxu0 0.0
    %2512 = vmatpush1.msra.mxu0 0.0
    %2513 = vmatprep.subr.mxu0 0.0
    %2514 = vmatpush1.msra.mxu0 0.0
    %2515 = vmatprep.subr.mxu0 0.0
    %2516 = vmatpush1.msra.mxu0 0.0
    %2517 = vmatprep.subr.mxu0 0.0
    %2518 = vmatpush1.msra.mxu0 0.0
    %2519 = vmatprep.subr.mxu0 0.0
    %2520 = vmatpush1.msra.mxu0 0.0
    %2521 = vmatprep.subr.mxu0 0.0
    %2522 = vmatpush1.msra.mxu0 0.0
    %2523 = vmatprep.subr.mxu0 0.0
    %2524 = vmatpush1.msra.mxu0 0.0
    %2525 = vmatprep.subr.mxu0 0.0
    %2526 = vmatpush1.msra.mxu0 0.0
    %2527 = vmatprep.subr.mxu0 0.0
    %2528 = vmatpush1.msra.mxu0 0.0
    %2529 = vmatprep.subr.mxu0 0.0
    %2530 = vmatpush1.msra.mxu0 0.0
    %2531 = vmatprep.subr.mxu0 0.0
    %2532 = vmatpush1.msra.mxu0 0.0
    %2533 = vmatprep.subr.mxu0 0.0
    %2534 = vmatpush1.msra.mxu0 0.0
    %2535 = vmatprep.subr.mxu0 0.0
    %2536 = vmatpush1.msra.mxu0 0.0
    %2537 = vmatprep.subr.mxu0 0.0
    %2538 = vmatpush1.msra.mxu0 0.0
    %2539 = vmatprep.subr.mxu0 0.0
    %2540 = vmatpush1.msra.mxu0 0.0
    %2541 = vmatprep.subr.mxu0 0.0
    %2542 = vmatpush1.msra.mxu0 0.0
    %2543 = vmatprep.subr.mxu0 0.0
    %2544 = vmatpush1.msra.mxu0 0.0
    %2545 = vmatprep.subr.mxu0 0.0
    %2546 = vmatpush1.msra.mxu0 0.0
    %2547 = vmatprep.subr.mxu0 0.0
    %2548 = vmatpush1.msra.mxu0 0.0
    %2549 = vmatprep.subr.mxu0 0.0
    %2550 = vmatpush1.msra.mxu0 0.0
    %2551 = vmatprep.mubr.f32.mxu0 0.0
    %2552 = vmatmul.mubr.f32.gmra.mrb[0].mxu0 %v2485
    %v2553 = vpop.f32.mrb[0].mxu0
    %v2554 = vadd.f32 0.0, %v2553
    %v2555 = vpop.f32.mrb[0].mxu0
    %2556 = vdwg.mxu0
    %v2557 = vadd.f32 %v2482, %v2554
    %v2558 = vld [vmem:[%s5 + $0xc0] sm:$0xff]
    %v2560 = vsel %vm761, %v746, 0
    %2562 = vmatprep.subr.mxu0 0.0
    %2563 = vmatpush1.msra.mxu0 %v2558
    %2564 = vmatprep.subr.mxu0 0.0
    %2565 = vmatpush1.msra.mxu0 0.0
    %2566 = vmatprep.subr.mxu0 0.0
    %2567 = vmatpush1.msra.mxu0 0.0
    %2568 = vmatprep.subr.mxu0 0.0
    %2569 = vmatpush1.msra.mxu0 0.0
    %2570 = vmatprep.subr.mxu0 0.0
    %2571 = vmatpush1.msra.mxu0 0.0
    %2572 = vmatprep.subr.mxu0 0.0
    %2573 = vmatpush1.msra.mxu0 0.0
    %2574 = vmatprep.subr.mxu0 0.0
    %2575 = vmatpush1.msra.mxu0 0.0
    %2576 = vmatprep.subr.mxu0 0.0
    %2577 = vmatpush1.msra.mxu0 0.0
    %2578 = vmatprep.subr.mxu0 0.0
    %2579 = vmatpush1.msra.mxu0 0.0
    %2580 = vmatprep.subr.mxu0 0.0
    %2581 = vmatpush1.msra.mxu0 0.0
    %2582 = vmatprep.subr.mxu0 0.0
    %2583 = vmatpush1.msra.mxu0 0.0
    %2584 = vmatprep.subr.mxu0 0.0
    %2585 = vmatpush1.msra.mxu0 0.0
    %2586 = vmatprep.subr.mxu0 0.0
    %2587 = vmatpush1.msra.mxu0 0.0
    %2588 = vmatprep.subr.mxu0 0.0
    %2589 = vmatpush1.msra.mxu0 0.0
    %2590 = vmatprep.subr.mxu0 0.0
    %2591 = vmatpush1.msra.mxu0 0.0
    %2592 = vmatprep.subr.mxu0 0.0
    %2593 = vmatpush1.msra.mxu0 0.0
    %2594 = vmatprep.subr.mxu0 0.0
    %2595 = vmatpush1.msra.mxu0 0.0
    %2596 = vmatprep.subr.mxu0 0.0
    %2597 = vmatpush1.msra.mxu0 0.0
    %2598 = vmatprep.subr.mxu0 0.0
    %2599 = vmatpush1.msra.mxu0 0.0
    %2600 = vmatprep.subr.mxu0 0.0
    %2601 = vmatpush1.msra.mxu0 0.0
    %2602 = vmatprep.subr.mxu0 0.0
    %2603 = vmatpush1.msra.mxu0 0.0
    %2604 = vmatprep.subr.mxu0 0.0
    %2605 = vmatpush1.msra.mxu0 0.0
    %2606 = vmatprep.subr.mxu0 0.0
    %2607 = vmatpush1.msra.mxu0 0.0
    %2608 = vmatprep.subr.mxu0 0.0
    %2609 = vmatpush1.msra.mxu0 0.0
    %2610 = vmatprep.subr.mxu0 0.0
    %2611 = vmatpush1.msra.mxu0 0.0
    %2612 = vmatprep.subr.mxu0 0.0
    %2613 = vmatpush1.msra.mxu0 0.0
    %2614 = vmatprep.subr.mxu0 0.0
    %2615 = vmatpush1.msra.mxu0 0.0
    %2616 = vmatprep.subr.mxu0 0.0
    %2617 = vmatpush1.msra.mxu0 0.0
    %2618 = vmatprep.subr.mxu0 0.0
    %2619 = vmatpush1.msra.mxu0 0.0
    %2620 = vmatprep.subr.mxu0 0.0
    %2621 = vmatpush1.msra.mxu0 0.0
    %2622 = vmatprep.subr.mxu0 0.0
    %2623 = vmatpush1.msra.mxu0 0.0
    %2624 = vmatprep.subr.mxu0 0.0
    %2625 = vmatpush1.msra.mxu0 0.0
    %2626 = vmatprep.mubr.f32.mxu0 0.0
    %2627 = vmatmul.mubr.f32.gmra.mrb[0].mxu0 %v2560
    %v2628 = vpop.f32.mrb[0].mxu0
    %v2629 = vadd.f32 0.0, %v2628
    %v2630 = vpop.f32.mrb[0].mxu0
    %2631 = vdwg.mxu0
    %v2632 = vadd.f32 %v2557, %v2629
    %v2633 = vld [vmem:[%s5 + $0xc8] sm:$0xff]
    %v2635 = vsel %vm761, %v751, 0
    %2637 = vmatprep.subr.mxu0 0.0
    %2638 = vmatpush1.msra.mxu0 %v2633
    %2639 = vmatprep.subr.mxu0 0.0
    %2640 = vmatpush1.msra.mxu0 0.0
    %2641 = vmatprep.subr.mxu0 0.0
    %2642 = vmatpush1.msra.mxu0 0.0
    %2643 = vmatprep.subr.mxu0 0.0
    %2644 = vmatpush1.msra.mxu0 0.0
    %2645 = vmatprep.subr.mxu0 0.0
    %2646 = vmatpush1.msra.mxu0 0.0
    %2647 = vmatprep.subr.mxu0 0.0
    %2648 = vmatpush1.msra.mxu0 0.0
    %2649 = vmatprep.subr.mxu0 0.0
    %2650 = vmatpush1.msra.mxu0 0.0
    %2651 = vmatprep.subr.mxu0 0.0
    %2652 = vmatpush1.msra.mxu0 0.0
    %2653 = vmatprep.subr.mxu0 0.0
    %2654 = vmatpush1.msra.mxu0 0.0
    %2655 = vmatprep.subr.mxu0 0.0
    %2656 = vmatpush1.msra.mxu0 0.0
    %2657 = vmatprep.subr.mxu0 0.0
    %2658 = vmatpush1.msra.mxu0 0.0
    %2659 = vmatprep.subr.mxu0 0.0
    %2660 = vmatpush1.msra.mxu0 0.0
    %2661 = vmatprep.subr.mxu0 0.0
    %2662 = vmatpush1.msra.mxu0 0.0
    %2663 = vmatprep.subr.mxu0 0.0
    %2664 = vmatpush1.msra.mxu0 0.0
    %2665 = vmatprep.subr.mxu0 0.0
    %2666 = vmatpush1.msra.mxu0 0.0
    %2667 = vmatprep.subr.mxu0 0.0
    %2668 = vmatpush1.msra.mxu0 0.0
    %2669 = vmatprep.subr.mxu0 0.0
    %2670 = vmatpush1.msra.mxu0 0.0
    %2671 = vmatprep.subr.mxu0 0.0
    %2672 = vmatpush1.msra.mxu0 0.0
    %2673 = vmatprep.subr.mxu0 0.0
    %2674 = vmatpush1.msra.mxu0 0.0
    %2675 = vmatprep.subr.mxu0 0.0
    %2676 = vmatpush1.msra.mxu0 0.0
    %2677 = vmatprep.subr.mxu0 0.0
    %2678 = vmatpush1.msra.mxu0 0.0
    %2679 = vmatprep.subr.mxu0 0.0
    %2680 = vmatpush1.msra.mxu0 0.0
    %2681 = vmatprep.subr.mxu0 0.0
    %2682 = vmatpush1.msra.mxu0 0.0
    %2683 = vmatprep.subr.mxu0 0.0
    %2684 = vmatpush1.msra.mxu0 0.0
    %2685 = vmatprep.subr.mxu0 0.0
    %2686 = vmatpush1.msra.mxu0 0.0
    %2687 = vmatprep.subr.mxu0 0.0
    %2688 = vmatpush1.msra.mxu0 0.0
    %2689 = vmatprep.subr.mxu0 0.0
    %2690 = vmatpush1.msra.mxu0 0.0
    %2691 = vmatprep.subr.mxu0 0.0
    %2692 = vmatpush1.msra.mxu0 0.0
    %2693 = vmatprep.subr.mxu0 0.0
    %2694 = vmatpush1.msra.mxu0 0.0
    %2695 = vmatprep.subr.mxu0 0.0
    %2696 = vmatpush1.msra.mxu0 0.0
    %2697 = vmatprep.subr.mxu0 0.0
    %2698 = vmatpush1.msra.mxu0 0.0
    %2699 = vmatprep.subr.mxu0 0.0
    %2700 = vmatpush1.msra.mxu0 0.0
    %2701 = vmatprep.mubr.f32.mxu0 0.0
    %2702 = vmatmul.mubr.f32.gmra.mrb[0].mxu0 %v2635
    %v2703 = vpop.f32.mrb[0].mxu0
    %v2704 = vadd.f32 0.0, %v2703
    %v2705 = vpop.f32.mrb[0].mxu0
    %2706 = vdwg.mxu0
    %v2707 = vadd.f32 %v2632, %v2704
    %v2708 = vld [vmem:[%s5 + $0xd0] sm:$0xff]
    %v2710 = vsel %vm761, %v756, 0
    %2712 = vmatprep.subr.mxu0 0.0
    %2713 = vmatpush1.msra.mxu0 %v2708
    %2714 = vmatprep.subr.mxu0 0.0
    %2715 = vmatpush1.msra.mxu0 0.0
    %2716 = vmatprep.subr.mxu0 0.0
    %2717 = vmatpush1.msra.mxu0 0.0
    %2718 = vmatprep.subr.mxu0 0.0
    %2719 = vmatpush1.msra.mxu0 0.0
    %2720 = vmatprep.subr.mxu0 0.0
    %2721 = vmatpush1.msra.mxu0 0.0
    %2722 = vmatprep.subr.mxu0 0.0
    %2723 = vmatpush1.msra.mxu0 0.0
    %2724 = vmatprep.subr.mxu0 0.0
    %2725 = vmatpush1.msra.mxu0 0.0
    %2726 = vmatprep.subr.mxu0 0.0
    %2727 = vmatpush1.msra.mxu0 0.0
    %2728 = vmatprep.subr.mxu0 0.0
    %2729 = vmatpush1.msra.mxu0 0.0
    %2730 = vmatprep.subr.mxu0 0.0
    %2731 = vmatpush1.msra.mxu0 0.0
    %2732 = vmatprep.subr.mxu0 0.0
    %2733 = vmatpush1.msra.mxu0 0.0
    %2734 = vmatprep.subr.mxu0 0.0
    %2735 = vmatpush1.msra.mxu0 0.0
    %2736 = vmatprep.subr.mxu0 0.0
    %2737 = vmatpush1.msra.mxu0 0.0
    %2738 = vmatprep.subr.mxu0 0.0
    %2739 = vmatpush1.msra.mxu0 0.0
    %2740 = vmatprep.subr.mxu0 0.0
    %2741 = vmatpush1.msra.mxu0 0.0
    %2742 = vmatprep.subr.mxu0 0.0
    %2743 = vmatpush1.msra.mxu0 0.0
    %2744 = vmatprep.subr.mxu0 0.0
    %2745 = vmatpush1.msra.mxu0 0.0
    %2746 = vmatprep.subr.mxu0 0.0
    %2747 = vmatpush1.msra.mxu0 0.0
    %2748 = vmatprep.subr.mxu0 0.0
    %2749 = vmatpush1.msra.mxu0 0.0
    %2750 = vmatprep.subr.mxu0 0.0
    %2751 = vmatpush1.msra.mxu0 0.0
    %2752 = vmatprep.subr.mxu0 0.0
    %2753 = vmatpush1.msra.mxu0 0.0
    %2754 = vmatprep.subr.mxu0 0.0
    %2755 = vmatpush1.msra.mxu0 0.0
    %2756 = vmatprep.subr.mxu0 0.0
    %2757 = vmatpush1.msra.mxu0 0.0
    %2758 = vmatprep.subr.mxu0 0.0
    %2759 = vmatpush1.msra.mxu0 0.0
    %2760 = vmatprep.subr.mxu0 0.0
    %2761 = vmatpush1.msra.mxu0 0.0
    %2762 = vmatprep.subr.mxu0 0.0
    %2763 = vmatpush1.msra.mxu0 0.0
    %2764 = vmatprep.subr.mxu0 0.0
    %2765 = vmatpush1.msra.mxu0 0.0
    %2766 = vmatprep.subr.mxu0 0.0
    %2767 = vmatpush1.msra.mxu0 0.0
    %2768 = vmatprep.subr.mxu0 0.0
    %2769 = vmatpush1.msra.mxu0 0.0
    %2770 = vmatprep.subr.mxu0 0.0
    %2771 = vmatpush1.msra.mxu0 0.0
    %2772 = vmatprep.subr.mxu0 0.0
    %2773 = vmatpush1.msra.mxu0 0.0
    %2774 = vmatprep.subr.mxu0 0.0
    %2775 = vmatpush1.msra.mxu0 0.0
    %2776 = vmatprep.mubr.f32.mxu0 0.0
    %2777 = vmatmul.mubr.f32.gmra.mrb[0].mxu0 %v2710
    %v2778 = vpop.f32.mrb[0].mxu0
    %v2779 = vadd.f32 0.0, %v2778
    %v2780 = vpop.f32.mrb[0].mxu0
    %2781 = vdwg.mxu0
    %v2782 = vadd.f32 %v2707, %v2779
    %v2783 = vld [vmem:[%s6] sm:$0x1]
    %v2785 = vlaneseq
    %v2786 = vshrl.u32 %v2785, 7
    %v2787 = vsub.s32 0, %v2786
    %v2788 = vrot.slane %v2783, %v2787
    %v2790 = vadd.f32 %v2782, %v2788
    %v2791 = vmax.f32 %v2790, 0.0
    %v2792 = vld [vmem:[%s7] sm:$0xff]
    %v2793 = vld [vmem:[%s7 + $0x8] sm:$0xf]
    %v2794 = vld [vmem:[%s7 + $0xc] sm:$0xff]
    %v2795 = vld [vmem:[%s7 + $0x14] sm:$0xf]
    %v2797 = vrot.slane %v2791, 2
    %vm2798 = vcmask 97280
    %v2799 = vsel %vm2798, %v2797, 0
    %vm2801 = vcmask 1043456
    %v2803 = vsel %vm2801, %v2795, 0
    %2805 = vmatprep.subr.mxu0 0.0
    %2806 = vmatpush1.msra.mxu0 %v2794
    %2807 = vmatprep.subr.mxu0 0.0
    %2808 = vmatpush1.msra.mxu0 %v2803
    %2809 = vmatprep.subr.mxu0 0.0
    %2810 = vmatpush1.msra.mxu0 0.0
    %2811 = vmatprep.subr.mxu0 0.0
    %2812 = vmatpush1.msra.mxu0 0.0
    %2813 = vmatprep.subr.mxu0 0.0
    %2814 = vmatpush1.msra.mxu0 0.0
    %2815 = vmatprep.subr.mxu0 0.0
    %2816 = vmatpush1.msra.mxu0 0.0
    %2817 = vmatprep.subr.mxu0 0.0
    %2818 = vmatpush1.msra.mxu0 0.0
    %2819 = vmatprep.subr.mxu0 0.0
    %2820 = vmatpush1.msra.mxu0 0.0
    %2821 = vmatprep.subr.mxu0 0.0
    %2822 = vmatpush1.msra.mxu0 0.0
    %2823 = vmatprep.subr.mxu0 0.0
    %2824 = vmatpush1.msra.mxu0 0.0
    %2825 = vmatprep.subr.mxu0 0.0
    %2826 = vmatpush1.msra.mxu0 0.0
    %2827 = vmatprep.subr.mxu0 0.0
    %2828 = vmatpush1.msra.mxu0 0.0
    %2829 = vmatprep.subr.mxu0 0.0
    %2830 = vmatpush1.msra.mxu0 0.0
    %2831 = vmatprep.subr.mxu0 0.0
    %2832 = vmatpush1.msra.mxu0 0.0
    %2833 = vmatprep.subr.mxu0 0.0
    %2834 = vmatpush1.msra.mxu0 0.0
    %2835 = vmatprep.subr.mxu0 0.0
    %2836 = vmatpush1.msra.mxu0 0.0
    %2837 = vmatprep.subr.mxu0 0.0
    %2838 = vmatpush1.msra.mxu0 0.0
    %2839 = vmatprep.subr.mxu0 0.0
    %2840 = vmatpush1.msra.mxu0 0.0
    %2841 = vmatprep.subr.mxu0 0.0
    %2842 = vmatpush1.msra.mxu0 0.0
    %2843 = vmatprep.subr.mxu0 0.0
    %2844 = vmatpush1.msra.mxu0 0.0
    %2845 = vmatprep.subr.mxu0 0.0
    %2846 = vmatpush1.msra.mxu0 0.0
    %2847 = vmatprep.subr.mxu0 0.0
    %2848 = vmatpush1.msra.mxu0 0.0
    %2849 = vmatprep.subr.mxu0 0.0
    %2850 = vmatpush1.msra.mxu0 0.0
    %2851 = vmatprep.subr.mxu0 0.0
    %2852 = vmatpush1.msra.mxu0 0.0
    %2853 = vmatprep.subr.mxu0 0.0
    %2854 = vmatpush1.msra.mxu0 0.0
    %2855 = vmatprep.subr.mxu0 0.0
    %2856 = vmatpush1.msra.mxu0 0.0
    %2857 = vmatprep.subr.mxu0 0.0
    %2858 = vmatpush1.msra.mxu0 0.0
    %2859 = vmatprep.subr.mxu0 0.0
    %2860 = vmatpush1.msra.mxu0 0.0
    %2861 = vmatprep.subr.mxu0 0.0
    %2862 = vmatpush1.msra.mxu0 0.0
    %2863 = vmatprep.subr.mxu0 0.0
    %2864 = vmatpush1.msra.mxu0 0.0
    %2865 = vmatprep.subr.mxu0 0.0
    %2866 = vmatpush1.msra.mxu0 0.0
    %2867 = vmatprep.subr.mxu0 0.0
    %2868 = vmatpush1.msra.mxu0 0.0
    %2869 = vmatprep.mubr.f32.mxu0 0.0
    %2870 = vmatmul.mubr.f32.gmra.mrb[0].mxu0 %v2799
    %v2871 = vpop.f32.mrb[0].mxu0
    %v2872 = vadd.f32 0.0, %v2871
    %v2873 = vpop.f32.mrb[0].mxu0
    %2874 = vdwg.mxu0
    %v2875 = vsel %vm2798, %v2791, 0
    %v2878 = vsel %vm2801, %v2793, 0
    %2880 = vmatprep.subr.mxu0 0.0
    %2881 = vmatpush1.msra.mxu0 %v2792
    %2882 = vmatprep.subr.mxu0 0.0
    %2883 = vmatpush1.msra.mxu0 %v2878
    %2884 = vmatprep.subr.mxu0 0.0
    %2885 = vmatpush1.msra.mxu0 0.0
    %2886 = vmatprep.subr.mxu0 0.0
    %2887 = vmatpush1.msra.mxu0 0.0
    %2888 = vmatprep.subr.mxu0 0.0
    %2889 = vmatpush1.msra.mxu0 0.0
    %2890 = vmatprep.subr.mxu0 0.0
    %2891 = vmatpush1.msra.mxu0 0.0
    %2892 = vmatprep.subr.mxu0 0.0
    %2893 = vmatpush1.msra.mxu0 0.0
    %2894 = vmatprep.subr.mxu0 0.0
    %2895 = vmatpush1.msra.mxu0 0.0
    %2896 = vmatprep.subr.mxu0 0.0
    %2897 = vmatpush1.msra.mxu0 0.0
    %2898 = vmatprep.subr.mxu0 0.0
    %2899 = vmatpush1.msra.mxu0 0.0
    %2900 = vmatprep.subr.mxu0 0.0
    %2901 = vmatpush1.msra.mxu0 0.0
    %2902 = vmatprep.subr.mxu0 0.0
    %2903 = vmatpush1.msra.mxu0 0.0
    %2904 = vmatprep.subr.mxu0 0.0
    %2905 = vmatpush1.msra.mxu0 0.0
    %2906 = vmatprep.subr.mxu0 0.0
    %2907 = vmatpush1.msra.mxu0 0.0
    %2908 = vmatprep.subr.mxu0 0.0
    %2909 = vmatpush1.msra.mxu0 0.0
    %2910 = vmatprep.subr.mxu0 0.0
    %2911 = vmatpush1.msra.mxu0 0.0
    %2912 = vmatprep.subr.mxu0 0.0
    %2913 = vmatpush1.msra.mxu0 0.0
    %2914 = vmatprep.subr.mxu0 0.0
    %2915 = vmatpush1.msra.mxu0 0.0
    %2916 = vmatprep.subr.mxu0 0.0
    %2917 = vmatpush1.msra.mxu0 0.0
    %2918 = vmatprep.subr.mxu0 0.0
    %2919 = vmatpush1.msra.mxu0 0.0
    %2920 = vmatprep.subr.mxu0 0.0
    %2921 = vmatpush1.msra.mxu0 0.0
    %2922 = vmatprep.subr.mxu0 0.0
    %2923 = vmatpush1.msra.mxu0 0.0
    %2924 = vmatprep.subr.mxu0 0.0
    %2925 = vmatpush1.msra.mxu0 0.0
    %2926 = vmatprep.subr.mxu0 0.0
    %2927 = vmatpush1.msra.mxu0 0.0
    %2928 = vmatprep.subr.mxu0 0.0
    %2929 = vmatpush1.msra.mxu0 0.0
    %2930 = vmatprep.subr.mxu0 0.0
    %2931 = vmatpush1.msra.mxu0 0.0
    %2932 = vmatprep.subr.mxu0 0.0
    %2933 = vmatpush1.msra.mxu0 0.0
    %2934 = vmatprep.subr.mxu0 0.0
    %2935 = vmatpush1.msra.mxu0 0.0
    %2936 = vmatprep.subr.mxu0 0.0
    %2937 = vmatpush1.msra.mxu0 0.0
    %2938 = vmatprep.subr.mxu0 0.0
    %2939 = vmatpush1.msra.mxu0 0.0
    %2940 = vmatprep.subr.mxu0 0.0
    %2941 = vmatpush1.msra.mxu0 0.0
    %2942 = vmatprep.subr.mxu0 0.0
    %2943 = vmatpush1.msra.mxu0 0.0
    %2944 = vmatprep.mubr.f32.mxu0 0.0
    %2945 = vmatmul.mubr.f32.gmra.mrb[0].mxu0 %v2875
    %v2946 = vpop.f32.mrb[0].mxu0
    %v2947 = vadd.f32 %v2872, %v2946
    %v2948 = vpop.f32.mrb[0].mxu0
    %2949 = vdwg.mxu0
    %v2950 = vld [vmem:[%s7 + $0x18] sm:$0xff]
    %v2951 = vld [vmem:[%s7 + $0x20] sm:$0xf]
    %v2952 = vrot.slane %v2791, 4
    %v2953 = vsel %vm2798, %v2952, 0
    %v2956 = vsel %vm2801, %v2951, 0
    %2958 = vmatprep.subr.mxu0 0.0
    %2959 = vmatpush1.msra.mxu0 %v2950
    %2960 = vmatprep.subr.mxu0 0.0
    %2961 = vmatpush1.msra.mxu0 %v2956
    %2962 = vmatprep.subr.mxu0 0.0
    %2963 = vmatpush1.msra.mxu0 0.0
    %2964 = vmatprep.subr.mxu0 0.0
    %2965 = vmatpush1.msra.mxu0 0.0
    %2966 = vmatprep.subr.mxu0 0.0
    %2967 = vmatpush1.msra.mxu0 0.0
    %2968 = vmatprep.subr.mxu0 0.0
    %2969 = vmatpush1.msra.mxu0 0.0
    %2970 = vmatprep.subr.mxu0 0.0
    %2971 = vmatpush1.msra.mxu0 0.0
    %2972 = vmatprep.subr.mxu0 0.0
    %2973 = vmatpush1.msra.mxu0 0.0
    %2974 = vmatprep.subr.mxu0 0.0
    %2975 = vmatpush1.msra.mxu0 0.0
    %2976 = vmatprep.subr.mxu0 0.0
    %2977 = vmatpush1.msra.mxu0 0.0
    %2978 = vmatprep.subr.mxu0 0.0
    %2979 = vmatpush1.msra.mxu0 0.0
    %2980 = vmatprep.subr.mxu0 0.0
    %2981 = vmatpush1.msra.mxu0 0.0
    %2982 = vmatprep.subr.mxu0 0.0
    %2983 = vmatpush1.msra.mxu0 0.0
    %2984 = vmatprep.subr.mxu0 0.0
    %2985 = vmatpush1.msra.mxu0 0.0
    %2986 = vmatprep.subr.mxu0 0.0
    %2987 = vmatpush1.msra.mxu0 0.0
    %2988 = vmatprep.subr.mxu0 0.0
    %2989 = vmatpush1.msra.mxu0 0.0
    %2990 = vmatprep.subr.mxu0 0.0
    %2991 = vmatpush1.msra.mxu0 0.0
    %2992 = vmatprep.subr.mxu0 0.0
    %2993 = vmatpush1.msra.mxu0 0.0
    %2994 = vmatprep.subr.mxu0 0.0
    %2995 = vmatpush1.msra.mxu0 0.0
    %2996 = vmatprep.subr.mxu0 0.0
    %2997 = vmatpush1.msra.mxu0 0.0
    %2998 = vmatprep.subr.mxu0 0.0
    %2999 = vmatpush1.msra.mxu0 0.0
    %3000 = vmatprep.subr.mxu0 0.0
    %3001 = vmatpush1.msra.mxu0 0.0
    %3002 = vmatprep.subr.mxu0 0.0
    %3003 = vmatpush1.msra.mxu0 0.0
    %3004 = vmatprep.subr.mxu0 0.0
    %3005 = vmatpush1.msra.mxu0 0.0
    %3006 = vmatprep.subr.mxu0 0.0
    %3007 = vmatpush1.msra.mxu0 0.0
    %3008 = vmatprep.subr.mxu0 0.0
    %3009 = vmatpush1.msra.mxu0 0.0
    %3010 = vmatprep.subr.mxu0 0.0
    %3011 = vmatpush1.msra.mxu0 0.0
    %3012 = vmatprep.subr.mxu0 0.0
    %3013 = vmatpush1.msra.mxu0 0.0
    %3014 = vmatprep.subr.mxu0 0.0
    %3015 = vmatpush1.msra.mxu0 0.0
    %3016 = vmatprep.subr.mxu0 0.0
    %3017 = vmatpush1.msra.mxu0 0.0
    %3018 = vmatprep.subr.mxu0 0.0
    %3019 = vmatpush1.msra.mxu0 0.0
    %3020 = vmatprep.subr.mxu0 0.0
    %3021 = vmatpush1.msra.mxu0 0.0
    %3022 = vmatprep.mubr.f32.mxu0 0.0
    %3023 = vmatmul.mubr.f32.gmra.mrb[0].mxu0 %v2953
    %v3024 = vpop.f32.mrb[0].mxu0
    %v3025 = vadd.f32 0.0, %v3024
    %v3026 = vpop.f32.mrb[0].mxu0
    %3027 = vdwg.mxu0
    %v3028 = vadd.f32 %v2947, %v3025
    %v3029 = vld [vmem:[%s7 + $0x24] sm:$0xff]
    %v3030 = vld [vmem:[%s7 + $0x2c] sm:$0xf]
    %v3031 = vrot.slane %v2791, 6
    %v3032 = vsel %vm2798, %v3031, 0
    %v3035 = vsel %vm2801, %v3030, 0
    %3037 = vmatprep.subr.mxu0 0.0
    %3038 = vmatpush1.msra.mxu0 %v3029
    %3039 = vmatprep.subr.mxu0 0.0
    %3040 = vmatpush1.msra.mxu0 %v3035
    %3041 = vmatprep.subr.mxu0 0.0
    %3042 = vmatpush1.msra.mxu0 0.0
    %3043 = vmatprep.subr.mxu0 0.0
    %3044 = vmatpush1.msra.mxu0 0.0
    %3045 = vmatprep.subr.mxu0 0.0
    %3046 = vmatpush1.msra.mxu0 0.0
    %3047 = vmatprep.subr.mxu0 0.0
    %3048 = vmatpush1.msra.mxu0 0.0
    %3049 = vmatprep.subr.mxu0 0.0
    %3050 = vmatpush1.msra.mxu0 0.0
    %3051 = vmatprep.subr.mxu0 0.0
    %3052 = vmatpush1.msra.mxu0 0.0
    %3053 = vmatprep.subr.mxu0 0.0
    %3054 = vmatpush1.msra.mxu0 0.0
    %3055 = vmatprep.subr.mxu0 0.0
    %3056 = vmatpush1.msra.mxu0 0.0
    %3057 = vmatprep.subr.mxu0 0.0
    %3058 = vmatpush1.msra.mxu0 0.0
    %3059 = vmatprep.subr.mxu0 0.0
    %3060 = vmatpush1.msra.mxu0 0.0
    %3061 = vmatprep.subr.mxu0 0.0
    %3062 = vmatpush1.msra.mxu0 0.0
    %3063 = vmatprep.subr.mxu0 0.0
    %3064 = vmatpush1.msra.mxu0 0.0
    %3065 = vmatprep.subr.mxu0 0.0
    %3066 = vmatpush1.msra.mxu0 0.0
    %3067 = vmatprep.subr.mxu0 0.0
    %3068 = vmatpush1.msra.mxu0 0.0
    %3069 = vmatprep.subr.mxu0 0.0
    %3070 = vmatpush1.msra.mxu0 0.0
    %3071 = vmatprep.subr.mxu0 0.0
    %3072 = vmatpush1.msra.mxu0 0.0
    %3073 = vmatprep.subr.mxu0 0.0
    %3074 = vmatpush1.msra.mxu0 0.0
    %3075 = vmatprep.subr.mxu0 0.0
    %3076 = vmatpush1.msra.mxu0 0.0
    %3077 = vmatprep.subr.mxu0 0.0
    %3078 = vmatpush1.msra.mxu0 0.0
    %3079 = vmatprep.subr.mxu0 0.0
    %3080 = vmatpush1.msra.mxu0 0.0
    %3081 = vmatprep.subr.mxu0 0.0
    %3082 = vmatpush1.msra.mxu0 0.0
    %3083 = vmatprep.subr.mxu0 0.0
    %3084 = vmatpush1.msra.mxu0 0.0
    %3085 = vmatprep.subr.mxu0 0.0
    %3086 = vmatpush1.msra.mxu0 0.0
    %3087 = vmatprep.subr.mxu0 0.0
    %3088 = vmatpush1.msra.mxu0 0.0
    %3089 = vmatprep.subr.mxu0 0.0
    %3090 = vmatpush1.msra.mxu0 0.0
    %3091 = vmatprep.subr.mxu0 0.0
    %3092 = vmatpush1.msra.mxu0 0.0
    %3093 = vmatprep.subr.mxu0 0.0
    %3094 = vmatpush1.msra.mxu0 0.0
    %3095 = vmatprep.subr.mxu0 0.0
    %3096 = vmatpush1.msra.mxu0 0.0
    %3097 = vmatprep.subr.mxu0 0.0
    %3098 = vmatpush1.msra.mxu0 0.0
    %3099 = vmatprep.subr.mxu0 0.0
    %3100 = vmatpush1.msra.mxu0 0.0
    %3101 = vmatprep.mubr.f32.mxu0 0.0
    %3102 = vmatmul.mubr.f32.gmra.mrb[0].mxu0 %v3032
    %v3103 = vpop.f32.mrb[0].mxu0
    %v3104 = vadd.f32 0.0, %v3103
    %v3105 = vpop.f32.mrb[0].mxu0
    %3106 = vdwg.mxu0
    %v3107 = vadd.f32 %v3028, %v3104
    %v3108 = vld [vmem:[%s8] sm:$0x1]
    %v3110 = vlaneseq
    %v3111 = vshrl.u32 %v3110, 7
    %v3112 = vsub.s32 0, %v3111
    %v3113 = vrot.slane %v3108, %v3112
    %v3115 = vadd.f32 %v3107, %v3113
    %v3116 = vmax.f32 %v3115, 0.0
    %v3117 = vld [vmem:[%s1] sm:$0xff]
    %v3118 = vld [vmem:[%s1 + $0x8] sm:$0xff]
    %v3119 = vld [vmem:[%s1 + $0x10] sm:$0xff]
    %v3120 = vld [vmem:[%s1 + $0x18] sm:$0xff]
    %v3121 = vld [vmem:[%s1 + $0x20] sm:$0xff]
    %v3122 = vld [vmem:[%s1 + $0x28] sm:$0xff]
    %v3123 = vld [vmem:[%s9] sm:$0xff]
    %v3124 = vld [vmem:[%s9 + $0x8] sm:$0xff]
    %v3125 = vld [vmem:[%s9 + $0x10] sm:$0xff]
    %v3126 = vld [vmem:[%s9 + $0x18] sm:$0x7]
    %v3127 = vld [vmem:[%s10] sm:$0x1]
    %v3129 = vlaneseq
    %v3130 = vshrl.u32 %v3129, 7
    %v3131 = vsub.s32 0, %v3130
    %v3132 = vrot.slane %v3127, %v3131
    %vm3134 = vcmask 220160
    %v3136 = vsel %vm3134, %v3117, 0
    %v3139 = vsel %vm3134, %v3118, 0
    %v3142 = vsel %vm3134, %v3119, 0
    %v3145 = vsel %vm3134, %v3120, 0
    %v3148 = vsel %vm3134, %v3121, 0
    %v3151 = vsel %vm3134, %v3122, 0
    %vm3153 = vcmask 1042432
    %v3155 = vsel %vm3153, %v3126, 0
    %3157 = vmatprep.subr.mxu0 0.0
    %3158 = vmatpush1.msra.mxu0 %v3123
    %3159 = vmatprep.subr.mxu0 0.0
    %3160 = vmatpush1.msra.mxu0 %v3124
    %3161 = vmatprep.subr.mxu0 0.0
    %3162 = vmatpush1.msra.mxu0 %v3125
    %3163 = vmatprep.subr.mxu0 0.0
    %3164 = vmatpush1.msra.mxu0 %v3155
    %3165 = vmatprep.subr.mxu0 0.0
    %3166 = vmatpush1.msra.mxu0 0.0
    %3167 = vmatprep.subr.mxu0 0.0
    %3168 = vmatpush1.msra.mxu0 0.0
    %3169 = vmatprep.subr.mxu0 0.0
    %3170 = vmatpush1.msra.mxu0 0.0
    %3171 = vmatprep.subr.mxu0 0.0
    %3172 = vmatpush1.msra.mxu0 0.0
    %3173 = vmatprep.subr.mxu0 0.0
    %3174 = vmatpush1.msra.mxu0 0.0
    %3175 = vmatprep.subr.mxu0 0.0
    %3176 = vmatpush1.msra.mxu0 0.0
    %3177 = vmatprep.subr.mxu0 0.0
    %3178 = vmatpush1.msra.mxu0 0.0
    %3179 = vmatprep.subr.mxu0 0.0
    %3180 = vmatpush1.msra.mxu0 0.0
    %3181 = vmatprep.subr.mxu0 0.0
    %3182 = vmatpush1.msra.mxu0 0.0
    %3183 = vmatprep.subr.mxu0 0.0
    %3184 = vmatpush1.msra.mxu0 0.0
    %3185 = vmatprep.subr.mxu0 0.0
    %3186 = vmatpush1.msra.mxu0 0.0
    %3187 = vmatprep.subr.mxu0 0.0
    %3188 = vmatpush1.msra.mxu0 0.0
    %3189 = vmatprep.subr.mxu0 0.0
    %3190 = vmatpush1.msra.mxu0 0.0
    %3191 = vmatprep.subr.mxu0 0.0
    %3192 = vmatpush1.msra.mxu0 0.0
    %3193 = vmatprep.subr.mxu0 0.0
    %3194 = vmatpush1.msra.mxu0 0.0
    %3195 = vmatprep.subr.mxu0 0.0
    %3196 = vmatpush1.msra.mxu0 0.0
    %3197 = vmatprep.subr.mxu0 0.0
    %3198 = vmatpush1.msra.mxu0 0.0
    %3199 = vmatprep.subr.mxu0 0.0
    %3200 = vmatpush1.msra.mxu0 0.0
    %3201 = vmatprep.subr.mxu0 0.0
    %3202 = vmatpush1.msra.mxu0 0.0
    %3203 = vmatprep.subr.mxu0 0.0
    %3204 = vmatpush1.msra.mxu0 0.0
    %3205 = vmatprep.subr.mxu0 0.0
    %3206 = vmatpush1.msra.mxu0 0.0
    %3207 = vmatprep.subr.mxu0 0.0
    %3208 = vmatpush1.msra.mxu0 0.0
    %3209 = vmatprep.subr.mxu0 0.0
    %3210 = vmatpush1.msra.mxu0 0.0
    %3211 = vmatprep.subr.mxu0 0.0
    %3212 = vmatpush1.msra.mxu0 0.0
    %3213 = vmatprep.subr.mxu0 0.0
    %3214 = vmatpush1.msra.mxu0 0.0
    %3215 = vmatprep.subr.mxu0 0.0
    %3216 = vmatpush1.msra.mxu0 0.0
    %3217 = vmatprep.subr.mxu0 0.0
    %3218 = vmatpush1.msra.mxu0 0.0
    %3219 = vmatprep.subr.mxu0 0.0
    %3220 = vmatpush1.msra.mxu0 0.0
    %3221 = vmatprep.mubr.f32.mxu0 0.0
    %3222 = vmatmul.mubr.f32.gmra.mrb[0].mxu0 %v3136
    %v3223 = vpop.f32.mrb[0].mxu0
    %v3224 = vadd.f32 %v3132, %v3223
    %v3225 = vpop.f32.mrb[0].mxu0
    %3226 = vmatprep.mubr.f32.mxu0 0.0
    %3227 = vmatmul.mubr.f32.gmra.mrb[0].mxu0 %v3139
    %v3228 = vpop.f32.mrb[0].mxu0
    %v3229 = vadd.f32 %v3132, %v3228
    %v3230 = vpop.f32.mrb[0].mxu0
    %3231 = vmatprep.mubr.f32.mxu0 0.0
    %3232 = vmatmul.mubr.f32.gmra.mrb[0].mxu0 %v3142
    %v3233 = vpop.f32.mrb[0].mxu0
    %v3234 = vadd.f32 %v3132, %v3233
    %v3235 = vpop.f32.mrb[0].mxu0
    %3236 = vmatprep.mubr.f32.mxu0 0.0
    %3237 = vmatmul.mubr.f32.gmra.mrb[0].mxu0 %v3145
    %v3238 = vpop.f32.mrb[0].mxu0
    %v3239 = vadd.f32 %v3132, %v3238
    %v3240 = vpop.f32.mrb[0].mxu0
    %3241 = vmatprep.mubr.f32.mxu0 0.0
    %3242 = vmatmul.mubr.f32.gmra.mrb[0].mxu0 %v3148
    %v3243 = vpop.f32.mrb[0].mxu0
    %v3244 = vadd.f32 %v3132, %v3243
    %v3245 = vpop.f32.mrb[0].mxu0
    %3246 = vmatprep.mubr.f32.mxu0 0.0
    %3247 = vmatmul.mubr.f32.gmra.mrb[0].mxu0 %v3151
    %v3248 = vpop.f32.mrb[0].mxu0
    %v3249 = vadd.f32 %v3132, %v3248
    %v3250 = vpop.f32.mrb[0].mxu0
    %3251 = vdwg.mxu0
    %v3252 = vmax.f32 %v3224, 0.0
    %v3253 = vmax.f32 %v3229, 0.0
    %v3254 = vmax.f32 %v3234, 0.0
    %v3255 = vmax.f32 %v3239, 0.0
    %v3256 = vmax.f32 %v3244, 0.0
    %v3257 = vmax.f32 %v3249, 0.0
    %v3258 = vld [vmem:[%s11] sm:$0xf]
    %v3259 = vld [vmem:[%s11 + $0x4] sm:$0xf]
    %v3261 = vrot.slane %v3252, 2
    %vm3262 = vcmask 31744
    %v3263 = vsel %vm3262, %v3261, 0
    %v3266 = vsel %vm2801, %v3259, 0
    %3268 = vmatprep.subr.mxu0 0.0
    %3269 = vmatpush1.msra.mxu0 %v3266
    %3270 = vmatprep.subr.mxu0 0.0
    %3271 = vmatpush1.msra.mxu0 0.0
    %3272 = vmatprep.subr.mxu0 0.0
    %3273 = vmatpush1.msra.mxu0 0.0
    %3274 = vmatprep.subr.mxu0 0.0
    %3275 = vmatpush1.msra.mxu0 0.0
    %3276 = vmatprep.subr.mxu0 0.0
    %3277 = vmatpush1.msra.mxu0 0.0
    %3278 = vmatprep.subr.mxu0 0.0
    %3279 = vmatpush1.msra.mxu0 0.0
    %3280 = vmatprep.subr.mxu0 0.0
    %3281 = vmatpush1.msra.mxu0 0.0
    %3282 = vmatprep.subr.mxu0 0.0
    %3283 = vmatpush1.msra.mxu0 0.0
    %3284 = vmatprep.subr.mxu0 0.0
    %3285 = vmatpush1.msra.mxu0 0.0
    %3286 = vmatprep.subr.mxu0 0.0
    %3287 = vmatpush1.msra.mxu0 0.0
    %3288 = vmatprep.subr.mxu0 0.0
    %3289 = vmatpush1.msra.mxu0 0.0
    %3290 = vmatprep.subr.mxu0 0.0
    %3291 = vmatpush1.msra.mxu0 0.0
    %3292 = vmatprep.subr.mxu0 0.0
    %3293 = vmatpush1.msra.mxu0 0.0
    %3294 = vmatprep.subr.mxu0 0.0
    %3295 = vmatpush1.msra.mxu0 0.0
    %3296 = vmatprep.subr.mxu0 0.0
    %3297 = vmatpush1.msra.mxu0 0.0
    %3298 = vmatprep.subr.mxu0 0.0
    %3299 = vmatpush1.msra.mxu0 0.0
    %3300 = vmatprep.subr.mxu0 0.0
    %3301 = vmatpush1.msra.mxu0 0.0
    %3302 = vmatprep.subr.mxu0 0.0
    %3303 = vmatpush1.msra.mxu0 0.0
    %3304 = vmatprep.subr.mxu0 0.0
    %3305 = vmatpush1.msra.mxu0 0.0
    %3306 = vmatprep.subr.mxu0 0.0
    %3307 = vmatpush1.msra.mxu0 0.0
    %3308 = vmatprep.subr.mxu0 0.0
    %3309 = vmatpush1.msra.mxu0 0.0
    %3310 = vmatprep.subr.mxu0 0.0
    %3311 = vmatpush1.msra.mxu0 0.0
    %3312 = vmatprep.subr.mxu0 0.0
    %3313 = vmatpush1.msra.mxu0 0.0
    %3314 = vmatprep.subr.mxu0 0.0
    %3315 = vmatpush1.msra.mxu0 0.0
    %3316 = vmatprep.subr.mxu0 0.0
    %3317 = vmatpush1.msra.mxu0 0.0
    %3318 = vmatprep.subr.mxu0 0.0
    %3319 = vmatpush1.msra.mxu0 0.0
    %3320 = vmatprep.subr.mxu0 0.0
    %3321 = vmatpush1.msra.mxu0 0.0
    %3322 = vmatprep.subr.mxu0 0.0
    %3323 = vmatpush1.msra.mxu0 0.0
    %3324 = vmatprep.subr.mxu0 0.0
    %3325 = vmatpush1.msra.mxu0 0.0
    %3326 = vmatprep.subr.mxu0 0.0
    %3327 = vmatpush1.msra.mxu0 0.0
    %3328 = vmatprep.subr.mxu0 0.0
    %3329 = vmatpush1.msra.mxu0 0.0
    %3330 = vmatprep.subr.mxu0 0.0
    %3331 = vmatpush1.msra.mxu0 0.0
    %3332 = vmatprep.mubr.f32.mxu0 0.0
    %3333 = vmatmul.mubr.f32.gmra.mrb[0].mxu0 %v3263
    %v3334 = vpop.f32.mrb[0].mxu0
    %v3335 = vadd.f32 0.0, %v3334
    %v3336 = vpop.f32.mrb[0].mxu0
    %3337 = vdwg.mxu0
    %v3338 = vsel %vm3262, %v3252, 0
    %v3341 = vsel %vm2801, %v3258, 0
    %3343 = vmatprep.subr.mxu0 0.0
    %3344 = vmatpush1.msra.mxu0 %v3341
    %3345 = vmatprep.subr.mxu0 0.0
    %3346 = vmatpush1.msra.mxu0 0.0
    %3347 = vmatprep.subr.mxu0 0.0
    %3348 = vmatpush1.msra.mxu0 0.0
    %3349 = vmatprep.subr.mxu0 0.0
    %3350 = vmatpush1.msra.mxu0 0.0
    %3351 = vmatprep.subr.mxu0 0.0
    %3352 = vmatpush1.msra.mxu0 0.0
    %3353 = vmatprep.subr.mxu0 0.0
    %3354 = vmatpush1.msra.mxu0 0.0
    %3355 = vmatprep.subr.mxu0 0.0
    %3356 = vmatpush1.msra.mxu0 0.0
    %3357 = vmatprep.subr.mxu0 0.0
    %3358 = vmatpush1.msra.mxu0 0.0
    %3359 = vmatprep.subr.mxu0 0.0
    %3360 = vmatpush1.msra.mxu0 0.0
    %3361 = vmatprep.subr.mxu0 0.0
    %3362 = vmatpush1.msra.mxu0 0.0
    %3363 = vmatprep.subr.mxu0 0.0
    %3364 = vmatpush1.msra.mxu0 0.0
    %3365 = vmatprep.subr.mxu0 0.0
    %3366 = vmatpush1.msra.mxu0 0.0
    %3367 = vmatprep.subr.mxu0 0.0
    %3368 = vmatpush1.msra.mxu0 0.0
    %3369 = vmatprep.subr.mxu0 0.0
    %3370 = vmatpush1.msra.mxu0 0.0
    %3371 = vmatprep.subr.mxu0 0.0
    %3372 = vmatpush1.msra.mxu0 0.0
    %3373 = vmatprep.subr.mxu0 0.0
    %3374 = vmatpush1.msra.mxu0 0.0
    %3375 = vmatprep.subr.mxu0 0.0
    %3376 = vmatpush1.msra.mxu0 0.0
    %3377 = vmatprep.subr.mxu0 0.0
    %3378 = vmatpush1.msra.mxu0 0.0
    %3379 = vmatprep.subr.mxu0 0.0
    %3380 = vmatpush1.msra.mxu0 0.0
    %3381 = vmatprep.subr.mxu0 0.0
    %3382 = vmatpush1.msra.mxu0 0.0
    %3383 = vmatprep.subr.mxu0 0.0
    %3384 = vmatpush1.msra.mxu0 0.0
    %3385 = vmatprep.subr.mxu0 0.0
    %3386 = vmatpush1.msra.mxu0 0.0
    %3387 = vmatprep.subr.mxu0 0.0
    %3388 = vmatpush1.msra.mxu0 0.0
    %3389 = vmatprep.subr.mxu0 0.0
    %3390 = vmatpush1.msra.mxu0 0.0
    %3391 = vmatprep.subr.mxu0 0.0
    %3392 = vmatpush1.msra.mxu0 0.0
    %3393 = vmatprep.subr.mxu0 0.0
    %3394 = vmatpush1.msra.mxu0 0.0
    %3395 = vmatprep.subr.mxu0 0.0
    %3396 = vmatpush1.msra.mxu0 0.0
    %3397 = vmatprep.subr.mxu0 0.0
    %3398 = vmatpush1.msra.mxu0 0.0
    %3399 = vmatprep.subr.mxu0 0.0
    %3400 = vmatpush1.msra.mxu0 0.0
    %3401 = vmatprep.subr.mxu0 0.0
    %3402 = vmatpush1.msra.mxu0 0.0
    %3403 = vmatprep.subr.mxu0 0.0
    %3404 = vmatpush1.msra.mxu0 0.0
    %3405 = vmatprep.subr.mxu0 0.0
    %3406 = vmatpush1.msra.mxu0 0.0
    %3407 = vmatprep.mubr.f32.mxu0 0.0
    %3408 = vmatmul.mubr.f32.gmra.mrb[0].mxu0 %v3338
    %v3409 = vpop.f32.mrb[0].mxu0
    %v3410 = vadd.f32 %v3335, %v3409
    %v3411 = vpop.f32.mrb[0].mxu0
    %3412 = vdwg.mxu0
    %v3413 = vld [vmem:[%s11 + $0x8] sm:$0xf]
    %v3414 = vrot.slane %v3252, 4
    %v3415 = vsel %vm3262, %v3414, 0
    %v3418 = vsel %vm2801, %v3413, 0
    %3420 = vmatprep.subr.mxu0 0.0
    %3421 = vmatpush1.msra.mxu0 %v3418
    %3422 = vmatprep.subr.mxu0 0.0
    %3423 = vmatpush1.msra.mxu0 0.0
    %3424 = vmatprep.subr.mxu0 0.0
    %3425 = vmatpush1.msra.mxu0 0.0
    %3426 = vmatprep.subr.mxu0 0.0
    %3427 = vmatpush1.msra.mxu0 0.0
    %3428 = vmatprep.subr.mxu0 0.0
    %3429 = vmatpush1.msra.mxu0 0.0
    %3430 = vmatprep.subr.mxu0 0.0
    %3431 = vmatpush1.msra.mxu0 0.0
    %3432 = vmatprep.subr.mxu0 0.0
    %3433 = vmatpush1.msra.mxu0 0.0
    %3434 = vmatprep.subr.mxu0 0.0
    %3435 = vmatpush1.msra.mxu0 0.0
    %3436 = vmatprep.subr.mxu0 0.0
    %3437 = vmatpush1.msra.mxu0 0.0
    %3438 = vmatprep.subr.mxu0 0.0
    %3439 = vmatpush1.msra.mxu0 0.0
    %3440 = vmatprep.subr.mxu0 0.0
    %3441 = vmatpush1.msra.mxu0 0.0
    %3442 = vmatprep.subr.mxu0 0.0
    %3443 = vmatpush1.msra.mxu0 0.0
    %3444 = vmatprep.subr.mxu0 0.0
    %3445 = vmatpush1.msra.mxu0 0.0
    %3446 = vmatprep.subr.mxu0 0.0
    %3447 = vmatpush1.msra.mxu0 0.0
    %3448 = vmatprep.subr.mxu0 0.0
    %3449 = vmatpush1.msra.mxu0 0.0
    %3450 = vmatprep.subr.mxu0 0.0
    %3451 = vmatpush1.msra.mxu0 0.0
    %3452 = vmatprep.subr.mxu0 0.0
    %3453 = vmatpush1.msra.mxu0 0.0
    %3454 = vmatprep.subr.mxu0 0.0
    %3455 = vmatpush1.msra.mxu0 0.0
    %3456 = vmatprep.subr.mxu0 0.0
    %3457 = vmatpush1.msra.mxu0 0.0
    %3458 = vmatprep.subr.mxu0 0.0
    %3459 = vmatpush1.msra.mxu0 0.0
    %3460 = vmatprep.subr.mxu0 0.0
    %3461 = vmatpush1.msra.mxu0 0.0
    %3462 = vmatprep.subr.mxu0 0.0
    %3463 = vmatpush1.msra.mxu0 0.0
    %3464 = vmatprep.subr.mxu0 0.0
    %3465 = vmatpush1.msra.mxu0 0.0
    %3466 = vmatprep.subr.mxu0 0.0
    %3467 = vmatpush1.msra.mxu0 0.0
    %3468 = vmatprep.subr.mxu0 0.0
    %3469 = vmatpush1.msra.mxu0 0.0
    %3470 = vmatprep.subr.mxu0 0.0
    %3471 = vmatpush1.msra.mxu0 0.0
    %3472 = vmatprep.subr.mxu0 0.0
    %3473 = vmatpush1.msra.mxu0 0.0
    %3474 = vmatprep.subr.mxu0 0.0
    %3475 = vmatpush1.msra.mxu0 0.0
    %3476 = vmatprep.subr.mxu0 0.0
    %3477 = vmatpush1.msra.mxu0 0.0
    %3478 = vmatprep.subr.mxu0 0.0
    %3479 = vmatpush1.msra.mxu0 0.0
    %3480 = vmatprep.subr.mxu0 0.0
    %3481 = vmatpush1.msra.mxu0 0.0
    %3482 = vmatprep.subr.mxu0 0.0
    %3483 = vmatpush1.msra.mxu0 0.0
    %3484 = vmatprep.mubr.f32.mxu0 0.0
    %3485 = vmatmul.mubr.f32.gmra.mrb[0].mxu0 %v3415
    %v3486 = vpop.f32.mrb[0].mxu0
    %v3487 = vadd.f32 0.0, %v3486
    %v3488 = vpop.f32.mrb[0].mxu0
    %3489 = vdwg.mxu0
    %v3490 = vadd.f32 %v3410, %v3487
    %v3491 = vld [vmem:[%s11 + $0xc] sm:$0xf]
    %v3492 = vrot.slane %v3252, 6
    %v3493 = vsel %vm3262, %v3492, 0
    %v3496 = vsel %vm2801, %v3491, 0
    %3498 = vmatprep.subr.mxu0 0.0
    %3499 = vmatpush1.msra.mxu0 %v3496
    %3500 = vmatprep.subr.mxu0 0.0
    %3501 = vmatpush1.msra.mxu0 0.0
    %3502 = vmatprep.subr.mxu0 0.0
    %3503 = vmatpush1.msra.mxu0 0.0
    %3504 = vmatprep.subr.mxu0 0.0
    %3505 = vmatpush1.msra.mxu0 0.0
    %3506 = vmatprep.subr.mxu0 0.0
    %3507 = vmatpush1.msra.mxu0 0.0
    %3508 = vmatprep.subr.mxu0 0.0
    %3509 = vmatpush1.msra.mxu0 0.0
    %3510 = vmatprep.subr.mxu0 0.0
    %3511 = vmatpush1.msra.mxu0 0.0
    %3512 = vmatprep.subr.mxu0 0.0
    %3513 = vmatpush1.msra.mxu0 0.0
    %3514 = vmatprep.subr.mxu0 0.0
    %3515 = vmatpush1.msra.mxu0 0.0
    %3516 = vmatprep.subr.mxu0 0.0
    %3517 = vmatpush1.msra.mxu0 0.0
    %3518 = vmatprep.subr.mxu0 0.0
    %3519 = vmatpush1.msra.mxu0 0.0
    %3520 = vmatprep.subr.mxu0 0.0
    %3521 = vmatpush1.msra.mxu0 0.0
    %3522 = vmatprep.subr.mxu0 0.0
    %3523 = vmatpush1.msra.mxu0 0.0
    %3524 = vmatprep.subr.mxu0 0.0
    %3525 = vmatpush1.msra.mxu0 0.0
    %3526 = vmatprep.subr.mxu0 0.0
    %3527 = vmatpush1.msra.mxu0 0.0
    %3528 = vmatprep.subr.mxu0 0.0
    %3529 = vmatpush1.msra.mxu0 0.0
    %3530 = vmatprep.subr.mxu0 0.0
    %3531 = vmatpush1.msra.mxu0 0.0
    %3532 = vmatprep.subr.mxu0 0.0
    %3533 = vmatpush1.msra.mxu0 0.0
    %3534 = vmatprep.subr.mxu0 0.0
    %3535 = vmatpush1.msra.mxu0 0.0
    %3536 = vmatprep.subr.mxu0 0.0
    %3537 = vmatpush1.msra.mxu0 0.0
    %3538 = vmatprep.subr.mxu0 0.0
    %3539 = vmatpush1.msra.mxu0 0.0
    %3540 = vmatprep.subr.mxu0 0.0
    %3541 = vmatpush1.msra.mxu0 0.0
    %3542 = vmatprep.subr.mxu0 0.0
    %3543 = vmatpush1.msra.mxu0 0.0
    %3544 = vmatprep.subr.mxu0 0.0
    %3545 = vmatpush1.msra.mxu0 0.0
    %3546 = vmatprep.subr.mxu0 0.0
    %3547 = vmatpush1.msra.mxu0 0.0
    %3548 = vmatprep.subr.mxu0 0.0
    %3549 = vmatpush1.msra.mxu0 0.0
    %3550 = vmatprep.subr.mxu0 0.0
    %3551 = vmatpush1.msra.mxu0 0.0
    %3552 = vmatprep.subr.mxu0 0.0
    %3553 = vmatpush1.msra.mxu0 0.0
    %3554 = vmatprep.subr.mxu0 0.0
    %3555 = vmatpush1.msra.mxu0 0.0
    %3556 = vmatprep.subr.mxu0 0.0
    %3557 = vmatpush1.msra.mxu0 0.0
    %3558 = vmatprep.subr.mxu0 0.0
    %3559 = vmatpush1.msra.mxu0 0.0
    %3560 = vmatprep.subr.mxu0 0.0
    %3561 = vmatpush1.msra.mxu0 0.0
    %3562 = vmatprep.mubr.f32.mxu0 0.0
    %3563 = vmatmul.mubr.f32.gmra.mrb[0].mxu0 %v3493
    %v3564 = vpop.f32.mrb[0].mxu0
    %v3565 = vadd.f32 0.0, %v3564
    %v3566 = vpop.f32.mrb[0].mxu0
    %3567 = vdwg.mxu0
    %v3568 = vadd.f32 %v3490, %v3565
    %v3569 = vld [vmem:[%s11 + $0x10] sm:$0xf]
    %v3571 = vsel %vm3262, %v3253, 0
    %v3574 = vsel %vm2801, %v3569, 0
    %3576 = vmatprep.subr.mxu0 0.0
    %3577 = vmatpush1.msra.mxu0 %v3574
    %3578 = vmatprep.subr.mxu0 0.0
    %3579 = vmatpush1.msra.mxu0 0.0
    %3580 = vmatprep.subr.mxu0 0.0
    %3581 = vmatpush1.msra.mxu0 0.0
    %3582 = vmatprep.subr.mxu0 0.0
    %3583 = vmatpush1.msra.mxu0 0.0
    %3584 = vmatprep.subr.mxu0 0.0
    %3585 = vmatpush1.msra.mxu0 0.0
    %3586 = vmatprep.subr.mxu0 0.0
    %3587 = vmatpush1.msra.mxu0 0.0
    %3588 = vmatprep.subr.mxu0 0.0
    %3589 = vmatpush1.msra.mxu0 0.0
    %3590 = vmatprep.subr.mxu0 0.0
    %3591 = vmatpush1.msra.mxu0 0.0
    %3592 = vmatprep.subr.mxu0 0.0
    %3593 = vmatpush1.msra.mxu0 0.0
    %3594 = vmatprep.subr.mxu0 0.0
    %3595 = vmatpush1.msra.mxu0 0.0
    %3596 = vmatprep.subr.mxu0 0.0
    %3597 = vmatpush1.msra.mxu0 0.0
    %3598 = vmatprep.subr.mxu0 0.0
    %3599 = vmatpush1.msra.mxu0 0.0
    %3600 = vmatprep.subr.mxu0 0.0
    %3601 = vmatpush1.msra.mxu0 0.0
    %3602 = vmatprep.subr.mxu0 0.0
    %3603 = vmatpush1.msra.mxu0 0.0
    %3604 = vmatprep.subr.mxu0 0.0
    %3605 = vmatpush1.msra.mxu0 0.0
    %3606 = vmatprep.subr.mxu0 0.0
    %3607 = vmatpush1.msra.mxu0 0.0
    %3608 = vmatprep.subr.mxu0 0.0
    %3609 = vmatpush1.msra.mxu0 0.0
    %3610 = vmatprep.subr.mxu0 0.0
    %3611 = vmatpush1.msra.mxu0 0.0
    %3612 = vmatprep.subr.mxu0 0.0
    %3613 = vmatpush1.msra.mxu0 0.0
    %3614 = vmatprep.subr.mxu0 0.0
    %3615 = vmatpush1.msra.mxu0 0.0
    %3616 = vmatprep.subr.mxu0 0.0
    %3617 = vmatpush1.msra.mxu0 0.0
    %3618 = vmatprep.subr.mxu0 0.0
    %3619 = vmatpush1.msra.mxu0 0.0
    %3620 = vmatprep.subr.mxu0 0.0
    %3621 = vmatpush1.msra.mxu0 0.0
    %3622 = vmatprep.subr.mxu0 0.0
    %3623 = vmatpush1.msra.mxu0 0.0
    %3624 = vmatprep.subr.mxu0 0.0
    %3625 = vmatpush1.msra.mxu0 0.0
    %3626 = vmatprep.subr.mxu0 0.0
    %3627 = vmatpush1.msra.mxu0 0.0
    %3628 = vmatprep.subr.mxu0 0.0
    %3629 = vmatpush1.msra.mxu0 0.0
    %3630 = vmatprep.subr.mxu0 0.0
    %3631 = vmatpush1.msra.mxu0 0.0
    %3632 = vmatprep.subr.mxu0 0.0
    %3633 = vmatpush1.msra.mxu0 0.0
    %3634 = vmatprep.subr.mxu0 0.0
    %3635 = vmatpush1.msra.mxu0 0.0
    %3636 = vmatprep.subr.mxu0 0.0
    %3637 = vmatpush1.msra.mxu0 0.0
    %3638 = vmatprep.subr.mxu0 0.0
    %3639 = vmatpush1.msra.mxu0 0.0
    %3640 = vmatprep.mubr.f32.mxu0 0.0
    %3641 = vmatmul.mubr.f32.gmra.mrb[0].mxu0 %v3571
    %v3642 = vpop.f32.mrb[0].mxu0
    %v3643 = vadd.f32 0.0, %v3642
    %v3644 = vpop.f32.mrb[0].mxu0
    %3645 = vdwg.mxu0
    %v3646 = vadd.f32 %v3568, %v3643
    %v3647 = vld [vmem:[%s11 + $0x14] sm:$0xf]
    %v3648 = vrot.slane %v3253, 2
    %v3649 = vsel %vm3262, %v3648, 0
    %v3652 = vsel %vm2801, %v3647, 0
    %3654 = vmatprep.subr.mxu0 0.0
    %3655 = vmatpush1.msra.mxu0 %v3652
    %3656 = vmatprep.subr.mxu0 0.0
    %3657 = vmatpush1.msra.mxu0 0.0
    %3658 = vmatprep.subr.mxu0 0.0
    %3659 = vmatpush1.msra.mxu0 0.0
    %3660 = vmatprep.subr.mxu0 0.0
    %3661 = vmatpush1.msra.mxu0 0.0
    %3662 = vmatprep.subr.mxu0 0.0
    %3663 = vmatpush1.msra.mxu0 0.0
    %3664 = vmatprep.subr.mxu0 0.0
    %3665 = vmatpush1.msra.mxu0 0.0
    %3666 = vmatprep.subr.mxu0 0.0
    %3667 = vmatpush1.msra.mxu0 0.0
    %3668 = vmatprep.subr.mxu0 0.0
    %3669 = vmatpush1.msra.mxu0 0.0
    %3670 = vmatprep.subr.mxu0 0.0
    %3671 = vmatpush1.msra.mxu0 0.0
    %3672 = vmatprep.subr.mxu0 0.0
    %3673 = vmatpush1.msra.mxu0 0.0
    %3674 = vmatprep.subr.mxu0 0.0
    %3675 = vmatpush1.msra.mxu0 0.0
    %3676 = vmatprep.subr.mxu0 0.0
    %3677 = vmatpush1.msra.mxu0 0.0
    %3678 = vmatprep.subr.mxu0 0.0
    %3679 = vmatpush1.msra.mxu0 0.0
    %3680 = vmatprep.subr.mxu0 0.0
    %3681 = vmatpush1.msra.mxu0 0.0
    %3682 = vmatprep.subr.mxu0 0.0
    %3683 = vmatpush1.msra.mxu0 0.0
    %3684 = vmatprep.subr.mxu0 0.0
    %3685 = vmatpush1.msra.mxu0 0.0
    %3686 = vmatprep.subr.mxu0 0.0
    %3687 = vmatpush1.msra.mxu0 0.0
    %3688 = vmatprep.subr.mxu0 0.0
    %3689 = vmatpush1.msra.mxu0 0.0
    %3690 = vmatprep.subr.mxu0 0.0
    %3691 = vmatpush1.msra.mxu0 0.0
    %3692 = vmatprep.subr.mxu0 0.0
    %3693 = vmatpush1.msra.mxu0 0.0
    %3694 = vmatprep.subr.mxu0 0.0
    %3695 = vmatpush1.msra.mxu0 0.0
    %3696 = vmatprep.subr.mxu0 0.0
    %3697 = vmatpush1.msra.mxu0 0.0
    %3698 = vmatprep.subr.mxu0 0.0
    %3699 = vmatpush1.msra.mxu0 0.0
    %3700 = vmatprep.subr.mxu0 0.0
    %3701 = vmatpush1.msra.mxu0 0.0
    %3702 = vmatprep.subr.mxu0 0.0
    %3703 = vmatpush1.msra.mxu0 0.0
    %3704 = vmatprep.subr.mxu0 0.0
    %3705 = vmatpush1.msra.mxu0 0.0
    %3706 = vmatprep.subr.mxu0 0.0
    %3707 = vmatpush1.msra.mxu0 0.0
    %3708 = vmatprep.subr.mxu0 0.0
    %3709 = vmatpush1.msra.mxu0 0.0
    %3710 = vmatprep.subr.mxu0 0.0
    %3711 = vmatpush1.msra.mxu0 0.0
    %3712 = vmatprep.subr.mxu0 0.0
    %3713 = vmatpush1.msra.mxu0 0.0
    %3714 = vmatprep.subr.mxu0 0.0
    %3715 = vmatpush1.msra.mxu0 0.0
    %3716 = vmatprep.subr.mxu0 0.0
    %3717 = vmatpush1.msra.mxu0 0.0
    %3718 = vmatprep.mubr.f32.mxu0 0.0
    %3719 = vmatmul.mubr.f32.gmra.mrb[0].mxu0 %v3649
    %v3720 = vpop.f32.mrb[0].mxu0
    %v3721 = vadd.f32 0.0, %v3720
    %v3722 = vpop.f32.mrb[0].mxu0
    %3723 = vdwg.mxu0
    %v3724 = vadd.f32 %v3646, %v3721
    %v3725 = vld [vmem:[%s11 + $0x18] sm:$0xf]
    %v3726 = vrot.slane %v3253, 4
    %v3727 = vsel %vm3262, %v3726, 0
    %v3730 = vsel %vm2801, %v3725, 0
    %3732 = vmatprep.subr.mxu0 0.0
    %3733 = vmatpush1.msra.mxu0 %v3730
    %3734 = vmatprep.subr.mxu0 0.0
    %3735 = vmatpush1.msra.mxu0 0.0
    %3736 = vmatprep.subr.mxu0 0.0
    %3737 = vmatpush1.msra.mxu0 0.0
    %3738 = vmatprep.subr.mxu0 0.0
    %3739 = vmatpush1.msra.mxu0 0.0
    %3740 = vmatprep.subr.mxu0 0.0
    %3741 = vmatpush1.msra.mxu0 0.0
    %3742 = vmatprep.subr.mxu0 0.0
    %3743 = vmatpush1.msra.mxu0 0.0
    %3744 = vmatprep.subr.mxu0 0.0
    %3745 = vmatpush1.msra.mxu0 0.0
    %3746 = vmatprep.subr.mxu0 0.0
    %3747 = vmatpush1.msra.mxu0 0.0
    %3748 = vmatprep.subr.mxu0 0.0
    %3749 = vmatpush1.msra.mxu0 0.0
    %3750 = vmatprep.subr.mxu0 0.0
    %3751 = vmatpush1.msra.mxu0 0.0
    %3752 = vmatprep.subr.mxu0 0.0
    %3753 = vmatpush1.msra.mxu0 0.0
    %3754 = vmatprep.subr.mxu0 0.0
    %3755 = vmatpush1.msra.mxu0 0.0
    %3756 = vmatprep.subr.mxu0 0.0
    %3757 = vmatpush1.msra.mxu0 0.0
    %3758 = vmatprep.subr.mxu0 0.0
    %3759 = vmatpush1.msra.mxu0 0.0
    %3760 = vmatprep.subr.mxu0 0.0
    %3761 = vmatpush1.msra.mxu0 0.0
    %3762 = vmatprep.subr.mxu0 0.0
    %3763 = vmatpush1.msra.mxu0 0.0
    %3764 = vmatprep.subr.mxu0 0.0
    %3765 = vmatpush1.msra.mxu0 0.0
    %3766 = vmatprep.subr.mxu0 0.0
    %3767 = vmatpush1.msra.mxu0 0.0
    %3768 = vmatprep.subr.mxu0 0.0
    %3769 = vmatpush1.msra.mxu0 0.0
    %3770 = vmatprep.subr.mxu0 0.0
    %3771 = vmatpush1.msra.mxu0 0.0
    %3772 = vmatprep.subr.mxu0 0.0
    %3773 = vmatpush1.msra.mxu0 0.0
    %3774 = vmatprep.subr.mxu0 0.0
    %3775 = vmatpush1.msra.mxu0 0.0
    %3776 = vmatprep.subr.mxu0 0.0
    %3777 = vmatpush1.msra.mxu0 0.0
    %3778 = vmatprep.subr.mxu0 0.0
    %3779 = vmatpush1.msra.mxu0 0.0
    %3780 = vmatprep.subr.mxu0 0.0
    %3781 = vmatpush1.msra.mxu0 0.0
    %3782 = vmatprep.subr.mxu0 0.0
    %3783 = vmatpush1.msra.mxu0 0.0
    %3784 = vmatprep.subr.mxu0 0.0
    %3785 = vmatpush1.msra.mxu0 0.0
    %3786 = vmatprep.subr.mxu0 0.0
    %3787 = vmatpush1.msra.mxu0 0.0
    %3788 = vmatprep.subr.mxu0 0.0
    %3789 = vmatpush1.msra.mxu0 0.0
    %3790 = vmatprep.subr.mxu0 0.0
    %3791 = vmatpush1.msra.mxu0 0.0
    %3792 = vmatprep.subr.mxu0 0.0
    %3793 = vmatpush1.msra.mxu0 0.0
    %3794 = vmatprep.subr.mxu0 0.0
    %3795 = vmatpush1.msra.mxu0 0.0
    %3796 = vmatprep.mubr.f32.mxu0 0.0
    %3797 = vmatmul.mubr.f32.gmra.mrb[0].mxu0 %v3727
    %v3798 = vpop.f32.mrb[0].mxu0
    %v3799 = vadd.f32 0.0, %v3798
    %v3800 = vpop.f32.mrb[0].mxu0
    %3801 = vdwg.mxu0
    %v3802 = vadd.f32 %v3724, %v3799
    %v3803 = vld [vmem:[%s11 + $0x1c] sm:$0xf]
    %v3804 = vrot.slane %v3253, 6
    %v3805 = vsel %vm3262, %v3804, 0
    %v3808 = vsel %vm2801, %v3803, 0
    %3810 = vmatprep.subr.mxu0 0.0
    %3811 = vmatpush1.msra.mxu0 %v3808
    %3812 = vmatprep.subr.mxu0 0.0
    %3813 = vmatpush1.msra.mxu0 0.0
    %3814 = vmatprep.subr.mxu0 0.0
    %3815 = vmatpush1.msra.mxu0 0.0
    %3816 = vmatprep.subr.mxu0 0.0
    %3817 = vmatpush1.msra.mxu0 0.0
    %3818 = vmatprep.subr.mxu0 0.0
    %3819 = vmatpush1.msra.mxu0 0.0
    %3820 = vmatprep.subr.mxu0 0.0
    %3821 = vmatpush1.msra.mxu0 0.0
    %3822 = vmatprep.subr.mxu0 0.0
    %3823 = vmatpush1.msra.mxu0 0.0
    %3824 = vmatprep.subr.mxu0 0.0
    %3825 = vmatpush1.msra.mxu0 0.0
    %3826 = vmatprep.subr.mxu0 0.0
    %3827 = vmatpush1.msra.mxu0 0.0
    %3828 = vmatprep.subr.mxu0 0.0
    %3829 = vmatpush1.msra.mxu0 0.0
    %3830 = vmatprep.subr.mxu0 0.0
    %3831 = vmatpush1.msra.mxu0 0.0
    %3832 = vmatprep.subr.mxu0 0.0
    %3833 = vmatpush1.msra.mxu0 0.0
    %3834 = vmatprep.subr.mxu0 0.0
    %3835 = vmatpush1.msra.mxu0 0.0
    %3836 = vmatprep.subr.mxu0 0.0
    %3837 = vmatpush1.msra.mxu0 0.0
    %3838 = vmatprep.subr.mxu0 0.0
    %3839 = vmatpush1.msra.mxu0 0.0
    %3840 = vmatprep.subr.mxu0 0.0
    %3841 = vmatpush1.msra.mxu0 0.0
    %3842 = vmatprep.subr.mxu0 0.0
    %3843 = vmatpush1.msra.mxu0 0.0
    %3844 = vmatprep.subr.mxu0 0.0
    %3845 = vmatpush1.msra.mxu0 0.0
    %3846 = vmatprep.subr.mxu0 0.0
    %3847 = vmatpush1.msra.mxu0 0.0
    %3848 = vmatprep.subr.mxu0 0.0
    %3849 = vmatpush1.msra.mxu0 0.0
    %3850 = vmatprep.subr.mxu0 0.0
    %3851 = vmatpush1.msra.mxu0 0.0
    %3852 = vmatprep.subr.mxu0 0.0
    %3853 = vmatpush1.msra.mxu0 0.0
    %3854 = vmatprep.subr.mxu0 0.0
    %3855 = vmatpush1.msra.mxu0 0.0
    %3856 = vmatprep.subr.mxu0 0.0
    %3857 = vmatpush1.msra.mxu0 0.0
    %3858 = vmatprep.subr.mxu0 0.0
    %3859 = vmatpush1.msra.mxu0 0.0
    %3860 = vmatprep.subr.mxu0 0.0
    %3861 = vmatpush1.msra.mxu0 0.0
    %3862 = vmatprep.subr.mxu0 0.0
    %3863 = vmatpush1.msra.mxu0 0.0
    %3864 = vmatprep.subr.mxu0 0.0
    %3865 = vmatpush1.msra.mxu0 0.0
    %3866 = vmatprep.subr.mxu0 0.0
    %3867 = vmatpush1.msra.mxu0 0.0
    %3868 = vmatprep.subr.mxu0 0.0
    %3869 = vmatpush1.msra.mxu0 0.0
    %3870 = vmatprep.subr.mxu0 0.0
    %3871 = vmatpush1.msra.mxu0 0.0
    %3872 = vmatprep.subr.mxu0 0.0
    %3873 = vmatpush1.msra.mxu0 0.0
    %3874 = vmatprep.mubr.f32.mxu0 0.0
    %3875 = vmatmul.mubr.f32.gmra.mrb[0].mxu0 %v3805
    %v3876 = vpop.f32.mrb[0].mxu0
    %v3877 = vadd.f32 0.0, %v3876
    %v3878 = vpop.f32.mrb[0].mxu0
    %3879 = vdwg.mxu0
    %v3880 = vadd.f32 %v3802, %v3877
    %v3881 = vld [vmem:[%s11 + $0x20] sm:$0xf]
    %v3883 = vsel %vm3262, %v3254, 0
    %v3886 = vsel %vm2801, %v3881, 0
    %3888 = vmatprep.subr.mxu0 0.0
    %3889 = vmatpush1.msra.mxu0 %v3886
    %3890 = vmatprep.subr.mxu0 0.0
    %3891 = vmatpush1.msra.mxu0 0.0
    %3892 = vmatprep.subr.mxu0 0.0
    %3893 = vmatpush1.msra.mxu0 0.0
    %3894 = vmatprep.subr.mxu0 0.0
    %3895 = vmatpush1.msra.mxu0 0.0
    %3896 = vmatprep.subr.mxu0 0.0
    %3897 = vmatpush1.msra.mxu0 0.0
    %3898 = vmatprep.subr.mxu0 0.0
    %3899 = vmatpush1.msra.mxu0 0.0
    %3900 = vmatprep.subr.mxu0 0.0
    %3901 = vmatpush1.msra.mxu0 0.0
    %3902 = vmatprep.subr.mxu0 0.0
    %3903 = vmatpush1.msra.mxu0 0.0
    %3904 = vmatprep.subr.mxu0 0.0
    %3905 = vmatpush1.msra.mxu0 0.0
    %3906 = vmatprep.subr.mxu0 0.0
    %3907 = vmatpush1.msra.mxu0 0.0
    %3908 = vmatprep.subr.mxu0 0.0
    %3909 = vmatpush1.msra.mxu0 0.0
    %3910 = vmatprep.subr.mxu0 0.0
    %3911 = vmatpush1.msra.mxu0 0.0
    %3912 = vmatprep.subr.mxu0 0.0
    %3913 = vmatpush1.msra.mxu0 0.0
    %3914 = vmatprep.subr.mxu0 0.0
    %3915 = vmatpush1.msra.mxu0 0.0
    %3916 = vmatprep.subr.mxu0 0.0
    %3917 = vmatpush1.msra.mxu0 0.0
    %3918 = vmatprep.subr.mxu0 0.0
    %3919 = vmatpush1.msra.mxu0 0.0
    %3920 = vmatprep.subr.mxu0 0.0
    %3921 = vmatpush1.msra.mxu0 0.0
    %3922 = vmatprep.subr.mxu0 0.0
    %3923 = vmatpush1.msra.mxu0 0.0
    %3924 = vmatprep.subr.mxu0 0.0
    %3925 = vmatpush1.msra.mxu0 0.0
    %3926 = vmatprep.subr.mxu0 0.0
    %3927 = vmatpush1.msra.mxu0 0.0
    %3928 = vmatprep.subr.mxu0 0.0
    %3929 = vmatpush1.msra.mxu0 0.0
    %3930 = vmatprep.subr.mxu0 0.0
    %3931 = vmatpush1.msra.mxu0 0.0
    %3932 = vmatprep.subr.mxu0 0.0
    %3933 = vmatpush1.msra.mxu0 0.0
    %3934 = vmatprep.subr.mxu0 0.0
    %3935 = vmatpush1.msra.mxu0 0.0
    %3936 = vmatprep.subr.mxu0 0.0
    %3937 = vmatpush1.msra.mxu0 0.0
    %3938 = vmatprep.subr.mxu0 0.0
    %3939 = vmatpush1.msra.mxu0 0.0
    %3940 = vmatprep.subr.mxu0 0.0
    %3941 = vmatpush1.msra.mxu0 0.0
    %3942 = vmatprep.subr.mxu0 0.0
    %3943 = vmatpush1.msra.mxu0 0.0
    %3944 = vmatprep.subr.mxu0 0.0
    %3945 = vmatpush1.msra.mxu0 0.0
    %3946 = vmatprep.subr.mxu0 0.0
    %3947 = vmatpush1.msra.mxu0 0.0
    %3948 = vmatprep.subr.mxu0 0.0
    %3949 = vmatpush1.msra.mxu0 0.0
    %3950 = vmatprep.subr.mxu0 0.0
    %3951 = vmatpush1.msra.mxu0 0.0
    %3952 = vmatprep.mubr.f32.mxu0 0.0
    %3953 = vmatmul.mubr.f32.gmra.mrb[0].mxu0 %v3883
    %v3954 = vpop.f32.mrb[0].mxu0
    %v3955 = vadd.f32 0.0, %v3954
    %v3956 = vpop.f32.mrb[0].mxu0
    %3957 = vdwg.mxu0
    %v3958 = vadd.f32 %v3880, %v3955
    %v3959 = vld [vmem:[%s11 + $0x24] sm:$0xf]
    %v3960 = vrot.slane %v3254, 2
    %v3961 = vsel %vm3262, %v3960, 0
    %v3964 = vsel %vm2801, %v3959, 0
    %3966 = vmatprep.subr.mxu0 0.0
    %3967 = vmatpush1.msra.mxu0 %v3964
    %3968 = vmatprep.subr.mxu0 0.0
    %3969 = vmatpush1.msra.mxu0 0.0
    %3970 = vmatprep.subr.mxu0 0.0
    %3971 = vmatpush1.msra.mxu0 0.0
    %3972 = vmatprep.subr.mxu0 0.0
    %3973 = vmatpush1.msra.mxu0 0.0
    %3974 = vmatprep.subr.mxu0 0.0
    %3975 = vmatpush1.msra.mxu0 0.0
    %3976 = vmatprep.subr.mxu0 0.0
    %3977 = vmatpush1.msra.mxu0 0.0
    %3978 = vmatprep.subr.mxu0 0.0
    %3979 = vmatpush1.msra.mxu0 0.0
    %3980 = vmatprep.subr.mxu0 0.0
    %3981 = vmatpush1.msra.mxu0 0.0
    %3982 = vmatprep.subr.mxu0 0.0
    %3983 = vmatpush1.msra.mxu0 0.0
    %3984 = vmatprep.subr.mxu0 0.0
    %3985 = vmatpush1.msra.mxu0 0.0
    %3986 = vmatprep.subr.mxu0 0.0
    %3987 = vmatpush1.msra.mxu0 0.0
    %3988 = vmatprep.subr.mxu0 0.0
    %3989 = vmatpush1.msra.mxu0 0.0
    %3990 = vmatprep.subr.mxu0 0.0
    %3991 = vmatpush1.msra.mxu0 0.0
    %3992 = vmatprep.subr.mxu0 0.0
    %3993 = vmatpush1.msra.mxu0 0.0
    %3994 = vmatprep.subr.mxu0 0.0
    %3995 = vmatpush1.msra.mxu0 0.0
    %3996 = vmatprep.subr.mxu0 0.0
    %3997 = vmatpush1.msra.mxu0 0.0
    %3998 = vmatprep.subr.mxu0 0.0
    %3999 = vmatpush1.msra.mxu0 0.0
    %4000 = vmatprep.subr.mxu0 0.0
    %4001 = vmatpush1.msra.mxu0 0.0
    %4002 = vmatprep.subr.mxu0 0.0
    %4003 = vmatpush1.msra.mxu0 0.0
    %4004 = vmatprep.subr.mxu0 0.0
    %4005 = vmatpush1.msra.mxu0 0.0
    %4006 = vmatprep.subr.mxu0 0.0
    %4007 = vmatpush1.msra.mxu0 0.0
    %4008 = vmatprep.subr.mxu0 0.0
    %4009 = vmatpush1.msra.mxu0 0.0
    %4010 = vmatprep.subr.mxu0 0.0
    %4011 = vmatpush1.msra.mxu0 0.0
    %4012 = vmatprep.subr.mxu0 0.0
    %4013 = vmatpush1.msra.mxu0 0.0
    %4014 = vmatprep.subr.mxu0 0.0
    %4015 = vmatpush1.msra.mxu0 0.0
    %4016 = vmatprep.subr.mxu0 0.0
    %4017 = vmatpush1.msra.mxu0 0.0
    %4018 = vmatprep.subr.mxu0 0.0
    %4019 = vmatpush1.msra.mxu0 0.0
    %4020 = vmatprep.subr.mxu0 0.0
    %4021 = vmatpush1.msra.mxu0 0.0
    %4022 = vmatprep.subr.mxu0 0.0
    %4023 = vmatpush1.msra.mxu0 0.0
    %4024 = vmatprep.subr.mxu0 0.0
    %4025 = vmatpush1.msra.mxu0 0.0
    %4026 = vmatprep.subr.mxu0 0.0
    %4027 = vmatpush1.msra.mxu0 0.0
    %4028 = vmatprep.subr.mxu0 0.0
    %4029 = vmatpush1.msra.mxu0 0.0
    %4030 = vmatprep.mubr.f32.mxu0 0.0
    %4031 = vmatmul.mubr.f32.gmra.mrb[0].mxu0 %v3961
    %v4032 = vpop.f32.mrb[0].mxu0
    %v4033 = vadd.f32 0.0, %v4032
    %v4034 = vpop.f32.mrb[0].mxu0
    %4035 = vdwg.mxu0
    %v4036 = vadd.f32 %v3958, %v4033
    %v4037 = vld [vmem:[%s11 + $0x28] sm:$0xf]
    %v4038 = vrot.slane %v3254, 4
    %v4039 = vsel %vm3262, %v4038, 0
    %v4042 = vsel %vm2801, %v4037, 0
    %4044 = vmatprep.subr.mxu0 0.0
    %4045 = vmatpush1.msra.mxu0 %v4042
    %4046 = vmatprep.subr.mxu0 0.0
    %4047 = vmatpush1.msra.mxu0 0.0
    %4048 = vmatprep.subr.mxu0 0.0
    %4049 = vmatpush1.msra.mxu0 0.0
    %4050 = vmatprep.subr.mxu0 0.0
    %4051 = vmatpush1.msra.mxu0 0.0
    %4052 = vmatprep.subr.mxu0 0.0
    %4053 = vmatpush1.msra.mxu0 0.0
    %4054 = vmatprep.subr.mxu0 0.0
    %4055 = vmatpush1.msra.mxu0 0.0
    %4056 = vmatprep.subr.mxu0 0.0
    %4057 = vmatpush1.msra.mxu0 0.0
    %4058 = vmatprep.subr.mxu0 0.0
    %4059 = vmatpush1.msra.mxu0 0.0
    %4060 = vmatprep.subr.mxu0 0.0
    %4061 = vmatpush1.msra.mxu0 0.0
    %4062 = vmatprep.subr.mxu0 0.0
    %4063 = vmatpush1.msra.mxu0 0.0
    %4064 = vmatprep.subr.mxu0 0.0
    %4065 = vmatpush1.msra.mxu0 0.0
    %4066 = vmatprep.subr.mxu0 0.0
    %4067 = vmatpush1.msra.mxu0 0.0
    %4068 = vmatprep.subr.mxu0 0.0
    %4069 = vmatpush1.msra.mxu0 0.0
    %4070 = vmatprep.subr.mxu0 0.0
    %4071 = vmatpush1.msra.mxu0 0.0
    %4072 = vmatprep.subr.mxu0 0.0
    %4073 = vmatpush1.msra.mxu0 0.0
    %4074 = vmatprep.subr.mxu0 0.0
    %4075 = vmatpush1.msra.mxu0 0.0
    %4076 = vmatprep.subr.mxu0 0.0
    %4077 = vmatpush1.msra.mxu0 0.0
    %4078 = vmatprep.subr.mxu0 0.0
    %4079 = vmatpush1.msra.mxu0 0.0
    %4080 = vmatprep.subr.mxu0 0.0
    %4081 = vmatpush1.msra.mxu0 0.0
    %4082 = vmatprep.subr.mxu0 0.0
    %4083 = vmatpush1.msra.mxu0 0.0
    %4084 = vmatprep.subr.mxu0 0.0
    %4085 = vmatpush1.msra.mxu0 0.0
    %4086 = vmatprep.subr.mxu0 0.0
    %4087 = vmatpush1.msra.mxu0 0.0
    %4088 = vmatprep.subr.mxu0 0.0
    %4089 = vmatpush1.msra.mxu0 0.0
    %4090 = vmatprep.subr.mxu0 0.0
    %4091 = vmatpush1.msra.mxu0 0.0
    %4092 = vmatprep.subr.mxu0 0.0
    %4093 = vmatpush1.msra.mxu0 0.0
    %4094 = vmatprep.subr.mxu0 0.0
    %4095 = vmatpush1.msra.mxu0 0.0
    %4096 = vmatprep.subr.mxu0 0.0
    %4097 = vmatpush1.msra.mxu0 0.0
    %4098 = vmatprep.subr.mxu0 0.0
    %4099 = vmatpush1.msra.mxu0 0.0
    %4100 = vmatprep.subr.mxu0 0.0
    %4101 = vmatpush1.msra.mxu0 0.0
    %4102 = vmatprep.subr.mxu0 0.0
    %4103 = vmatpush1.msra.mxu0 0.0
    %4104 = vmatprep.subr.mxu0 0.0
    %4105 = vmatpush1.msra.mxu0 0.0
    %4106 = vmatprep.subr.mxu0 0.0
    %4107 = vmatpush1.msra.mxu0 0.0
    %4108 = vmatprep.mubr.f32.mxu0 0.0
    %4109 = vmatmul.mubr.f32.gmra.mrb[0].mxu0 %v4039
    %v4110 = vpop.f32.mrb[0].mxu0
    %v4111 = vadd.f32 0.0, %v4110
    %v4112 = vpop.f32.mrb[0].mxu0
    %4113 = vdwg.mxu0
    %v4114 = vadd.f32 %v4036, %v4111
    %v4115 = vld [vmem:[%s11 + $0x2c] sm:$0xf]
    %v4116 = vrot.slane %v3254, 6
    %v4117 = vsel %vm3262, %v4116, 0
    %v4120 = vsel %vm2801, %v4115, 0
    %4122 = vmatprep.subr.mxu0 0.0
    %4123 = vmatpush1.msra.mxu0 %v4120
    %4124 = vmatprep.subr.mxu0 0.0
    %4125 = vmatpush1.msra.mxu0 0.0
    %4126 = vmatprep.subr.mxu0 0.0
    %4127 = vmatpush1.msra.mxu0 0.0
    %4128 = vmatprep.subr.mxu0 0.0
    %4129 = vmatpush1.msra.mxu0 0.0
    %4130 = vmatprep.subr.mxu0 0.0
    %4131 = vmatpush1.msra.mxu0 0.0
    %4132 = vmatprep.subr.mxu0 0.0
    %4133 = vmatpush1.msra.mxu0 0.0
    %4134 = vmatprep.subr.mxu0 0.0
    %4135 = vmatpush1.msra.mxu0 0.0
    %4136 = vmatprep.subr.mxu0 0.0
    %4137 = vmatpush1.msra.mxu0 0.0
    %4138 = vmatprep.subr.mxu0 0.0
    %4139 = vmatpush1.msra.mxu0 0.0
    %4140 = vmatprep.subr.mxu0 0.0
    %4141 = vmatpush1.msra.mxu0 0.0
    %4142 = vmatprep.subr.mxu0 0.0
    %4143 = vmatpush1.msra.mxu0 0.0
    %4144 = vmatprep.subr.mxu0 0.0
    %4145 = vmatpush1.msra.mxu0 0.0
    %4146 = vmatprep.subr.mxu0 0.0
    %4147 = vmatpush1.msra.mxu0 0.0
    %4148 = vmatprep.subr.mxu0 0.0
    %4149 = vmatpush1.msra.mxu0 0.0
    %4150 = vmatprep.subr.mxu0 0.0
    %4151 = vmatpush1.msra.mxu0 0.0
    %4152 = vmatprep.subr.mxu0 0.0
    %4153 = vmatpush1.msra.mxu0 0.0
    %4154 = vmatprep.subr.mxu0 0.0
    %4155 = vmatpush1.msra.mxu0 0.0
    %4156 = vmatprep.subr.mxu0 0.0
    %4157 = vmatpush1.msra.mxu0 0.0
    %4158 = vmatprep.subr.mxu0 0.0
    %4159 = vmatpush1.msra.mxu0 0.0
    %4160 = vmatprep.subr.mxu0 0.0
    %4161 = vmatpush1.msra.mxu0 0.0
    %4162 = vmatprep.subr.mxu0 0.0
    %4163 = vmatpush1.msra.mxu0 0.0
    %4164 = vmatprep.subr.mxu0 0.0
    %4165 = vmatpush1.msra.mxu0 0.0
    %4166 = vmatprep.subr.mxu0 0.0
    %4167 = vmatpush1.msra.mxu0 0.0
    %4168 = vmatprep.subr.mxu0 0.0
    %4169 = vmatpush1.msra.mxu0 0.0
    %4170 = vmatprep.subr.mxu0 0.0
    %4171 = vmatpush1.msra.mxu0 0.0
    %4172 = vmatprep.subr.mxu0 0.0
    %4173 = vmatpush1.msra.mxu0 0.0
    %4174 = vmatprep.subr.mxu0 0.0
    %4175 = vmatpush1.msra.mxu0 0.0
    %4176 = vmatprep.subr.mxu0 0.0
    %4177 = vmatpush1.msra.mxu0 0.0
    %4178 = vmatprep.subr.mxu0 0.0
    %4179 = vmatpush1.msra.mxu0 0.0
    %4180 = vmatprep.subr.mxu0 0.0
    %4181 = vmatpush1.msra.mxu0 0.0
    %4182 = vmatprep.subr.mxu0 0.0
    %4183 = vmatpush1.msra.mxu0 0.0
    %4184 = vmatprep.subr.mxu0 0.0
    %4185 = vmatpush1.msra.mxu0 0.0
    %4186 = vmatprep.mubr.f32.mxu0 0.0
    %4187 = vmatmul.mubr.f32.gmra.mrb[0].mxu0 %v4117
    %v4188 = vpop.f32.mrb[0].mxu0
    %v4189 = vadd.f32 0.0, %v4188
    %v4190 = vpop.f32.mrb[0].mxu0
    %4191 = vdwg.mxu0
    %v4192 = vadd.f32 %v4114, %v4189
    %v4193 = vld [vmem:[%s11 + $0x30] sm:$0xf]
    %v4195 = vsel %vm3262, %v3255, 0
    %v4198 = vsel %vm2801, %v4193, 0
    %4200 = vmatprep.subr.mxu0 0.0
    %4201 = vmatpush1.msra.mxu0 %v4198
    %4202 = vmatprep.subr.mxu0 0.0
    %4203 = vmatpush1.msra.mxu0 0.0
    %4204 = vmatprep.subr.mxu0 0.0
    %4205 = vmatpush1.msra.mxu0 0.0
    %4206 = vmatprep.subr.mxu0 0.0
    %4207 = vmatpush1.msra.mxu0 0.0
    %4208 = vmatprep.subr.mxu0 0.0
    %4209 = vmatpush1.msra.mxu0 0.0
    %4210 = vmatprep.subr.mxu0 0.0
    %4211 = vmatpush1.msra.mxu0 0.0
    %4212 = vmatprep.subr.mxu0 0.0
    %4213 = vmatpush1.msra.mxu0 0.0
    %4214 = vmatprep.subr.mxu0 0.0
    %4215 = vmatpush1.msra.mxu0 0.0
    %4216 = vmatprep.subr.mxu0 0.0
    %4217 = vmatpush1.msra.mxu0 0.0
    %4218 = vmatprep.subr.mxu0 0.0
    %4219 = vmatpush1.msra.mxu0 0.0
    %4220 = vmatprep.subr.mxu0 0.0
    %4221 = vmatpush1.msra.mxu0 0.0
    %4222 = vmatprep.subr.mxu0 0.0
    %4223 = vmatpush1.msra.mxu0 0.0
    %4224 = vmatprep.subr.mxu0 0.0
    %4225 = vmatpush1.msra.mxu0 0.0
    %4226 = vmatprep.subr.mxu0 0.0
    %4227 = vmatpush1.msra.mxu0 0.0
    %4228 = vmatprep.subr.mxu0 0.0
    %4229 = vmatpush1.msra.mxu0 0.0
    %4230 = vmatprep.subr.mxu0 0.0
    %4231 = vmatpush1.msra.mxu0 0.0
    %4232 = vmatprep.subr.mxu0 0.0
    %4233 = vmatpush1.msra.mxu0 0.0
    %4234 = vmatprep.subr.mxu0 0.0
    %4235 = vmatpush1.msra.mxu0 0.0
    %4236 = vmatprep.subr.mxu0 0.0
    %4237 = vmatpush1.msra.mxu0 0.0
    %4238 = vmatprep.subr.mxu0 0.0
    %4239 = vmatpush1.msra.mxu0 0.0
    %4240 = vmatprep.subr.mxu0 0.0
    %4241 = vmatpush1.msra.mxu0 0.0
    %4242 = vmatprep.subr.mxu0 0.0
    %4243 = vmatpush1.msra.mxu0 0.0
    %4244 = vmatprep.subr.mxu0 0.0
    %4245 = vmatpush1.msra.mxu0 0.0
    %4246 = vmatprep.subr.mxu0 0.0
    %4247 = vmatpush1.msra.mxu0 0.0
    %4248 = vmatprep.subr.mxu0 0.0
    %4249 = vmatpush1.msra.mxu0 0.0
    %4250 = vmatprep.subr.mxu0 0.0
    %4251 = vmatpush1.msra.mxu0 0.0
    %4252 = vmatprep.subr.mxu0 0.0
    %4253 = vmatpush1.msra.mxu0 0.0
    %4254 = vmatprep.subr.mxu0 0.0
    %4255 = vmatpush1.msra.mxu0 0.0
    %4256 = vmatprep.subr.mxu0 0.0
    %4257 = vmatpush1.msra.mxu0 0.0
    %4258 = vmatprep.subr.mxu0 0.0
    %4259 = vmatpush1.msra.mxu0 0.0
    %4260 = vmatprep.subr.mxu0 0.0
    %4261 = vmatpush1.msra.mxu0 0.0
    %4262 = vmatprep.subr.mxu0 0.0
    %4263 = vmatpush1.msra.mxu0 0.0
    %4264 = vmatprep.mubr.f32.mxu0 0.0
    %4265 = vmatmul.mubr.f32.gmra.mrb[0].mxu0 %v4195
    %v4266 = vpop.f32.mrb[0].mxu0
    %v4267 = vadd.f32 0.0, %v4266
    %v4268 = vpop.f32.mrb[0].mxu0
    %4269 = vdwg.mxu0
    %v4270 = vadd.f32 %v4192, %v4267
    %v4271 = vld [vmem:[%s11 + $0x34] sm:$0xf]
    %v4272 = vrot.slane %v3255, 2
    %v4273 = vsel %vm3262, %v4272, 0
    %v4276 = vsel %vm2801, %v4271, 0
    %4278 = vmatprep.subr.mxu0 0.0
    %4279 = vmatpush1.msra.mxu0 %v4276
    %4280 = vmatprep.subr.mxu0 0.0
    %4281 = vmatpush1.msra.mxu0 0.0
    %4282 = vmatprep.subr.mxu0 0.0
    %4283 = vmatpush1.msra.mxu0 0.0
    %4284 = vmatprep.subr.mxu0 0.0
    %4285 = vmatpush1.msra.mxu0 0.0
    %4286 = vmatprep.subr.mxu0 0.0
    %4287 = vmatpush1.msra.mxu0 0.0
    %4288 = vmatprep.subr.mxu0 0.0
    %4289 = vmatpush1.msra.mxu0 0.0
    %4290 = vmatprep.subr.mxu0 0.0
    %4291 = vmatpush1.msra.mxu0 0.0
    %4292 = vmatprep.subr.mxu0 0.0
    %4293 = vmatpush1.msra.mxu0 0.0
    %4294 = vmatprep.subr.mxu0 0.0
    %4295 = vmatpush1.msra.mxu0 0.0
    %4296 = vmatprep.subr.mxu0 0.0
    %4297 = vmatpush1.msra.mxu0 0.0
    %4298 = vmatprep.subr.mxu0 0.0
    %4299 = vmatpush1.msra.mxu0 0.0
    %4300 = vmatprep.subr.mxu0 0.0
    %4301 = vmatpush1.msra.mxu0 0.0
    %4302 = vmatprep.subr.mxu0 0.0
    %4303 = vmatpush1.msra.mxu0 0.0
    %4304 = vmatprep.subr.mxu0 0.0
    %4305 = vmatpush1.msra.mxu0 0.0
    %4306 = vmatprep.subr.mxu0 0.0
    %4307 = vmatpush1.msra.mxu0 0.0
    %4308 = vmatprep.subr.mxu0 0.0
    %4309 = vmatpush1.msra.mxu0 0.0
    %4310 = vmatprep.subr.mxu0 0.0
    %4311 = vmatpush1.msra.mxu0 0.0
    %4312 = vmatprep.subr.mxu0 0.0
    %4313 = vmatpush1.msra.mxu0 0.0
    %4314 = vmatprep.subr.mxu0 0.0
    %4315 = vmatpush1.msra.mxu0 0.0
    %4316 = vmatprep.subr.mxu0 0.0
    %4317 = vmatpush1.msra.mxu0 0.0
    %4318 = vmatprep.subr.mxu0 0.0
    %4319 = vmatpush1.msra.mxu0 0.0
    %4320 = vmatprep.subr.mxu0 0.0
    %4321 = vmatpush1.msra.mxu0 0.0
    %4322 = vmatprep.subr.mxu0 0.0
    %4323 = vmatpush1.msra.mxu0 0.0
    %4324 = vmatprep.subr.mxu0 0.0
    %4325 = vmatpush1.msra.mxu0 0.0
    %4326 = vmatprep.subr.mxu0 0.0
    %4327 = vmatpush1.msra.mxu0 0.0
    %4328 = vmatprep.subr.mxu0 0.0
    %4329 = vmatpush1.msra.mxu0 0.0
    %4330 = vmatprep.subr.mxu0 0.0
    %4331 = vmatpush1.msra.mxu0 0.0
    %4332 = vmatprep.subr.mxu0 0.0
    %4333 = vmatpush1.msra.mxu0 0.0
    %4334 = vmatprep.subr.mxu0 0.0
    %4335 = vmatpush1.msra.mxu0 0.0
    %4336 = vmatprep.subr.mxu0 0.0
    %4337 = vmatpush1.msra.mxu0 0.0
    %4338 = vmatprep.subr.mxu0 0.0
    %4339 = vmatpush1.msra.mxu0 0.0
    %4340 = vmatprep.subr.mxu0 0.0
    %4341 = vmatpush1.msra.mxu0 0.0
    %4342 = vmatprep.mubr.f32.mxu0 0.0
    %4343 = vmatmul.mubr.f32.gmra.mrb[0].mxu0 %v4273
    %v4344 = vpop.f32.mrb[0].mxu0
    %v4345 = vadd.f32 0.0, %v4344
    %v4346 = vpop.f32.mrb[0].mxu0
    %4347 = vdwg.mxu0
    %v4348 = vadd.f32 %v4270, %v4345
    %v4349 = vld [vmem:[%s11 + $0x38] sm:$0xf]
    %v4350 = vrot.slane %v3255, 4
    %v4351 = vsel %vm3262, %v4350, 0
    %v4354 = vsel %vm2801, %v4349, 0
    %4356 = vmatprep.subr.mxu0 0.0
    %4357 = vmatpush1.msra.mxu0 %v4354
    %4358 = vmatprep.subr.mxu0 0.0
    %4359 = vmatpush1.msra.mxu0 0.0
    %4360 = vmatprep.subr.mxu0 0.0
    %4361 = vmatpush1.msra.mxu0 0.0
    %4362 = vmatprep.subr.mxu0 0.0
    %4363 = vmatpush1.msra.mxu0 0.0
    %4364 = vmatprep.subr.mxu0 0.0
    %4365 = vmatpush1.msra.mxu0 0.0
    %4366 = vmatprep.subr.mxu0 0.0
    %4367 = vmatpush1.msra.mxu0 0.0
    %4368 = vmatprep.subr.mxu0 0.0
    %4369 = vmatpush1.msra.mxu0 0.0
    %4370 = vmatprep.subr.mxu0 0.0
    %4371 = vmatpush1.msra.mxu0 0.0
    %4372 = vmatprep.subr.mxu0 0.0
    %4373 = vmatpush1.msra.mxu0 0.0
    %4374 = vmatprep.subr.mxu0 0.0
    %4375 = vmatpush1.msra.mxu0 0.0
    %4376 = vmatprep.subr.mxu0 0.0
    %4377 = vmatpush1.msra.mxu0 0.0
    %4378 = vmatprep.subr.mxu0 0.0
    %4379 = vmatpush1.msra.mxu0 0.0
    %4380 = vmatprep.subr.mxu0 0.0
    %4381 = vmatpush1.msra.mxu0 0.0
    %4382 = vmatprep.subr.mxu0 0.0
    %4383 = vmatpush1.msra.mxu0 0.0
    %4384 = vmatprep.subr.mxu0 0.0
    %4385 = vmatpush1.msra.mxu0 0.0
    %4386 = vmatprep.subr.mxu0 0.0
    %4387 = vmatpush1.msra.mxu0 0.0
    %4388 = vmatprep.subr.mxu0 0.0
    %4389 = vmatpush1.msra.mxu0 0.0
    %4390 = vmatprep.subr.mxu0 0.0
    %4391 = vmatpush1.msra.mxu0 0.0
    %4392 = vmatprep.subr.mxu0 0.0
    %4393 = vmatpush1.msra.mxu0 0.0
    %4394 = vmatprep.subr.mxu0 0.0
    %4395 = vmatpush1.msra.mxu0 0.0
    %4396 = vmatprep.subr.mxu0 0.0
    %4397 = vmatpush1.msra.mxu0 0.0
    %4398 = vmatprep.subr.mxu0 0.0
    %4399 = vmatpush1.msra.mxu0 0.0
    %4400 = vmatprep.subr.mxu0 0.0
    %4401 = vmatpush1.msra.mxu0 0.0
    %4402 = vmatprep.subr.mxu0 0.0
    %4403 = vmatpush1.msra.mxu0 0.0
    %4404 = vmatprep.subr.mxu0 0.0
    %4405 = vmatpush1.msra.mxu0 0.0
    %4406 = vmatprep.subr.mxu0 0.0
    %4407 = vmatpush1.msra.mxu0 0.0
    %4408 = vmatprep.subr.mxu0 0.0
    %4409 = vmatpush1.msra.mxu0 0.0
    %4410 = vmatprep.subr.mxu0 0.0
    %4411 = vmatpush1.msra.mxu0 0.0
    %4412 = vmatprep.subr.mxu0 0.0
    %4413 = vmatpush1.msra.mxu0 0.0
    %4414 = vmatprep.subr.mxu0 0.0
    %4415 = vmatpush1.msra.mxu0 0.0
    %4416 = vmatprep.subr.mxu0 0.0
    %4417 = vmatpush1.msra.mxu0 0.0
    %4418 = vmatprep.subr.mxu0 0.0
    %4419 = vmatpush1.msra.mxu0 0.0
    %4420 = vmatprep.mubr.f32.mxu0 0.0
    %4421 = vmatmul.mubr.f32.gmra.mrb[0].mxu0 %v4351
    %v4422 = vpop.f32.mrb[0].mxu0
    %v4423 = vadd.f32 0.0, %v4422
    %v4424 = vpop.f32.mrb[0].mxu0
    %4425 = vdwg.mxu0
    %v4426 = vadd.f32 %v4348, %v4423
    %v4427 = vld [vmem:[%s11 + $0x3c] sm:$0xf]
    %v4428 = vrot.slane %v3255, 6
    %v4429 = vsel %vm3262, %v4428, 0
    %v4432 = vsel %vm2801, %v4427, 0
    %4434 = vmatprep.subr.mxu0 0.0
    %4435 = vmatpush1.msra.mxu0 %v4432
    %4436 = vmatprep.subr.mxu0 0.0
    %4437 = vmatpush1.msra.mxu0 0.0
    %4438 = vmatprep.subr.mxu0 0.0
    %4439 = vmatpush1.msra.mxu0 0.0
    %4440 = vmatprep.subr.mxu0 0.0
    %4441 = vmatpush1.msra.mxu0 0.0
    %4442 = vmatprep.subr.mxu0 0.0
    %4443 = vmatpush1.msra.mxu0 0.0
    %4444 = vmatprep.subr.mxu0 0.0
    %4445 = vmatpush1.msra.mxu0 0.0
    %4446 = vmatprep.subr.mxu0 0.0
    %4447 = vmatpush1.msra.mxu0 0.0
    %4448 = vmatprep.subr.mxu0 0.0
    %4449 = vmatpush1.msra.mxu0 0.0
    %4450 = vmatprep.subr.mxu0 0.0
    %4451 = vmatpush1.msra.mxu0 0.0
    %4452 = vmatprep.subr.mxu0 0.0
    %4453 = vmatpush1.msra.mxu0 0.0
    %4454 = vmatprep.subr.mxu0 0.0
    %4455 = vmatpush1.msra.mxu0 0.0
    %4456 = vmatprep.subr.mxu0 0.0
    %4457 = vmatpush1.msra.mxu0 0.0
    %4458 = vmatprep.subr.mxu0 0.0
    %4459 = vmatpush1.msra.mxu0 0.0
    %4460 = vmatprep.subr.mxu0 0.0
    %4461 = vmatpush1.msra.mxu0 0.0
    %4462 = vmatprep.subr.mxu0 0.0
    %4463 = vmatpush1.msra.mxu0 0.0
    %4464 = vmatprep.subr.mxu0 0.0
    %4465 = vmatpush1.msra.mxu0 0.0
    %4466 = vmatprep.subr.mxu0 0.0
    %4467 = vmatpush1.msra.mxu0 0.0
    %4468 = vmatprep.subr.mxu0 0.0
    %4469 = vmatpush1.msra.mxu0 0.0
    %4470 = vmatprep.subr.mxu0 0.0
    %4471 = vmatpush1.msra.mxu0 0.0
    %4472 = vmatprep.subr.mxu0 0.0
    %4473 = vmatpush1.msra.mxu0 0.0
    %4474 = vmatprep.subr.mxu0 0.0
    %4475 = vmatpush1.msra.mxu0 0.0
    %4476 = vmatprep.subr.mxu0 0.0
    %4477 = vmatpush1.msra.mxu0 0.0
    %4478 = vmatprep.subr.mxu0 0.0
    %4479 = vmatpush1.msra.mxu0 0.0
    %4480 = vmatprep.subr.mxu0 0.0
    %4481 = vmatpush1.msra.mxu0 0.0
    %4482 = vmatprep.subr.mxu0 0.0
    %4483 = vmatpush1.msra.mxu0 0.0
    %4484 = vmatprep.subr.mxu0 0.0
    %4485 = vmatpush1.msra.mxu0 0.0
    %4486 = vmatprep.subr.mxu0 0.0
    %4487 = vmatpush1.msra.mxu0 0.0
    %4488 = vmatprep.subr.mxu0 0.0
    %4489 = vmatpush1.msra.mxu0 0.0
    %4490 = vmatprep.subr.mxu0 0.0
    %4491 = vmatpush1.msra.mxu0 0.0
    %4492 = vmatprep.subr.mxu0 0.0
    %4493 = vmatpush1.msra.mxu0 0.0
    %4494 = vmatprep.subr.mxu0 0.0
    %4495 = vmatpush1.msra.mxu0 0.0
    %4496 = vmatprep.subr.mxu0 0.0
    %4497 = vmatpush1.msra.mxu0 0.0
    %4498 = vmatprep.mubr.f32.mxu0 0.0
    %4499 = vmatmul.mubr.f32.gmra.mrb[0].mxu0 %v4429
    %v4500 = vpop.f32.mrb[0].mxu0
    %v4501 = vadd.f32 0.0, %v4500
    %v4502 = vpop.f32.mrb[0].mxu0
    %4503 = vdwg.mxu0
    %v4504 = vadd.f32 %v4426, %v4501
    %v4505 = vld [vmem:[%s11 + $0x40] sm:$0xf]
    %v4507 = vsel %vm3262, %v3256, 0
    %v4510 = vsel %vm2801, %v4505, 0
    %4512 = vmatprep.subr.mxu0 0.0
    %4513 = vmatpush1.msra.mxu0 %v4510
    %4514 = vmatprep.subr.mxu0 0.0
    %4515 = vmatpush1.msra.mxu0 0.0
    %4516 = vmatprep.subr.mxu0 0.0
    %4517 = vmatpush1.msra.mxu0 0.0
    %4518 = vmatprep.subr.mxu0 0.0
    %4519 = vmatpush1.msra.mxu0 0.0
    %4520 = vmatprep.subr.mxu0 0.0
    %4521 = vmatpush1.msra.mxu0 0.0
    %4522 = vmatprep.subr.mxu0 0.0
    %4523 = vmatpush1.msra.mxu0 0.0
    %4524 = vmatprep.subr.mxu0 0.0
    %4525 = vmatpush1.msra.mxu0 0.0
    %4526 = vmatprep.subr.mxu0 0.0
    %4527 = vmatpush1.msra.mxu0 0.0
    %4528 = vmatprep.subr.mxu0 0.0
    %4529 = vmatpush1.msra.mxu0 0.0
    %4530 = vmatprep.subr.mxu0 0.0
    %4531 = vmatpush1.msra.mxu0 0.0
    %4532 = vmatprep.subr.mxu0 0.0
    %4533 = vmatpush1.msra.mxu0 0.0
    %4534 = vmatprep.subr.mxu0 0.0
    %4535 = vmatpush1.msra.mxu0 0.0
    %4536 = vmatprep.subr.mxu0 0.0
    %4537 = vmatpush1.msra.mxu0 0.0
    %4538 = vmatprep.subr.mxu0 0.0
    %4539 = vmatpush1.msra.mxu0 0.0
    %4540 = vmatprep.subr.mxu0 0.0
    %4541 = vmatpush1.msra.mxu0 0.0
    %4542 = vmatprep.subr.mxu0 0.0
    %4543 = vmatpush1.msra.mxu0 0.0
    %4544 = vmatprep.subr.mxu0 0.0
    %4545 = vmatpush1.msra.mxu0 0.0
    %4546 = vmatprep.subr.mxu0 0.0
    %4547 = vmatpush1.msra.mxu0 0.0
    %4548 = vmatprep.subr.mxu0 0.0
    %4549 = vmatpush1.msra.mxu0 0.0
    %4550 = vmatprep.subr.mxu0 0.0
    %4551 = vmatpush1.msra.mxu0 0.0
    %4552 = vmatprep.subr.mxu0 0.0
    %4553 = vmatpush1.msra.mxu0 0.0
    %4554 = vmatprep.subr.mxu0 0.0
    %4555 = vmatpush1.msra.mxu0 0.0
    %4556 = vmatprep.subr.mxu0 0.0
    %4557 = vmatpush1.msra.mxu0 0.0
    %4558 = vmatprep.subr.mxu0 0.0
    %4559 = vmatpush1.msra.mxu0 0.0
    %4560 = vmatprep.subr.mxu0 0.0
    %4561 = vmatpush1.msra.mxu0 0.0
    %4562 = vmatprep.subr.mxu0 0.0
    %4563 = vmatpush1.msra.mxu0 0.0
    %4564 = vmatprep.subr.mxu0 0.0
    %4565 = vmatpush1.msra.mxu0 0.0
    %4566 = vmatprep.subr.mxu0 0.0
    %4567 = vmatpush1.msra.mxu0 0.0
    %4568 = vmatprep.subr.mxu0 0.0
    %4569 = vmatpush1.msra.mxu0 0.0
    %4570 = vmatprep.subr.mxu0 0.0
    %4571 = vmatpush1.msra.mxu0 0.0
    %4572 = vmatprep.subr.mxu0 0.0
    %4573 = vmatpush1.msra.mxu0 0.0
    %4574 = vmatprep.subr.mxu0 0.0
    %4575 = vmatpush1.msra.mxu0 0.0
    %4576 = vmatprep.mubr.f32.mxu0 0.0
    %4577 = vmatmul.mubr.f32.gmra.mrb[0].mxu0 %v4507
    %v4578 = vpop.f32.mrb[0].mxu0
    %v4579 = vadd.f32 0.0, %v4578
    %v4580 = vpop.f32.mrb[0].mxu0
    %4581 = vdwg.mxu0
    %v4582 = vadd.f32 %v4504, %v4579
    %v4583 = vld [vmem:[%s11 + $0x44] sm:$0xf]
    %v4584 = vrot.slane %v3256, 2
    %v4585 = vsel %vm3262, %v4584, 0
    %v4588 = vsel %vm2801, %v4583, 0
    %4590 = vmatprep.subr.mxu0 0.0
    %4591 = vmatpush1.msra.mxu0 %v4588
    %4592 = vmatprep.subr.mxu0 0.0
    %4593 = vmatpush1.msra.mxu0 0.0
    %4594 = vmatprep.subr.mxu0 0.0
    %4595 = vmatpush1.msra.mxu0 0.0
    %4596 = vmatprep.subr.mxu0 0.0
    %4597 = vmatpush1.msra.mxu0 0.0
    %4598 = vmatprep.subr.mxu0 0.0
    %4599 = vmatpush1.msra.mxu0 0.0
    %4600 = vmatprep.subr.mxu0 0.0
    %4601 = vmatpush1.msra.mxu0 0.0
    %4602 = vmatprep.subr.mxu0 0.0
    %4603 = vmatpush1.msra.mxu0 0.0
    %4604 = vmatprep.subr.mxu0 0.0
    %4605 = vmatpush1.msra.mxu0 0.0
    %4606 = vmatprep.subr.mxu0 0.0
    %4607 = vmatpush1.msra.mxu0 0.0
    %4608 = vmatprep.subr.mxu0 0.0
    %4609 = vmatpush1.msra.mxu0 0.0
    %4610 = vmatprep.subr.mxu0 0.0
    %4611 = vmatpush1.msra.mxu0 0.0
    %4612 = vmatprep.subr.mxu0 0.0
    %4613 = vmatpush1.msra.mxu0 0.0
    %4614 = vmatprep.subr.mxu0 0.0
    %4615 = vmatpush1.msra.mxu0 0.0
    %4616 = vmatprep.subr.mxu0 0.0
    %4617 = vmatpush1.msra.mxu0 0.0
    %4618 = vmatprep.subr.mxu0 0.0
    %4619 = vmatpush1.msra.mxu0 0.0
    %4620 = vmatprep.subr.mxu0 0.0
    %4621 = vmatpush1.msra.mxu0 0.0
    %4622 = vmatprep.subr.mxu0 0.0
    %4623 = vmatpush1.msra.mxu0 0.0
    %4624 = vmatprep.subr.mxu0 0.0
    %4625 = vmatpush1.msra.mxu0 0.0
    %4626 = vmatprep.subr.mxu0 0.0
    %4627 = vmatpush1.msra.mxu0 0.0
    %4628 = vmatprep.subr.mxu0 0.0
    %4629 = vmatpush1.msra.mxu0 0.0
    %4630 = vmatprep.subr.mxu0 0.0
    %4631 = vmatpush1.msra.mxu0 0.0
    %4632 = vmatprep.subr.mxu0 0.0
    %4633 = vmatpush1.msra.mxu0 0.0
    %4634 = vmatprep.subr.mxu0 0.0
    %4635 = vmatpush1.msra.mxu0 0.0
    %4636 = vmatprep.subr.mxu0 0.0
    %4637 = vmatpush1.msra.mxu0 0.0
    %4638 = vmatprep.subr.mxu0 0.0
    %4639 = vmatpush1.msra.mxu0 0.0
    %4640 = vmatprep.subr.mxu0 0.0
    %4641 = vmatpush1.msra.mxu0 0.0
    %4642 = vmatprep.subr.mxu0 0.0
    %4643 = vmatpush1.msra.mxu0 0.0
    %4644 = vmatprep.subr.mxu0 0.0
    %4645 = vmatpush1.msra.mxu0 0.0
    %4646 = vmatprep.subr.mxu0 0.0
    %4647 = vmatpush1.msra.mxu0 0.0
    %4648 = vmatprep.subr.mxu0 0.0
    %4649 = vmatpush1.msra.mxu0 0.0
    %4650 = vmatprep.subr.mxu0 0.0
    %4651 = vmatpush1.msra.mxu0 0.0
    %4652 = vmatprep.subr.mxu0 0.0
    %4653 = vmatpush1.msra.mxu0 0.0
    %4654 = vmatprep.mubr.f32.mxu0 0.0
    %4655 = vmatmul.mubr.f32.gmra.mrb[0].mxu0 %v4585
    %v4656 = vpop.f32.mrb[0].mxu0
    %v4657 = vadd.f32 0.0, %v4656
    %v4658 = vpop.f32.mrb[0].mxu0
    %4659 = vdwg.mxu0
    %v4660 = vadd.f32 %v4582, %v4657
    %v4661 = vld [vmem:[%s11 + $0x48] sm:$0xf]
    %v4662 = vrot.slane %v3256, 4
    %v4663 = vsel %vm3262, %v4662, 0
    %v4666 = vsel %vm2801, %v4661, 0
    %4668 = vmatprep.subr.mxu0 0.0
    %4669 = vmatpush1.msra.mxu0 %v4666
    %4670 = vmatprep.subr.mxu0 0.0
    %4671 = vmatpush1.msra.mxu0 0.0
    %4672 = vmatprep.subr.mxu0 0.0
    %4673 = vmatpush1.msra.mxu0 0.0
    %4674 = vmatprep.subr.mxu0 0.0
    %4675 = vmatpush1.msra.mxu0 0.0
    %4676 = vmatprep.subr.mxu0 0.0
    %4677 = vmatpush1.msra.mxu0 0.0
    %4678 = vmatprep.subr.mxu0 0.0
    %4679 = vmatpush1.msra.mxu0 0.0
    %4680 = vmatprep.subr.mxu0 0.0
    %4681 = vmatpush1.msra.mxu0 0.0
    %4682 = vmatprep.subr.mxu0 0.0
    %4683 = vmatpush1.msra.mxu0 0.0
    %4684 = vmatprep.subr.mxu0 0.0
    %4685 = vmatpush1.msra.mxu0 0.0
    %4686 = vmatprep.subr.mxu0 0.0
    %4687 = vmatpush1.msra.mxu0 0.0
    %4688 = vmatprep.subr.mxu0 0.0
    %4689 = vmatpush1.msra.mxu0 0.0
    %4690 = vmatprep.subr.mxu0 0.0
    %4691 = vmatpush1.msra.mxu0 0.0
    %4692 = vmatprep.subr.mxu0 0.0
    %4693 = vmatpush1.msra.mxu0 0.0
    %4694 = vmatprep.subr.mxu0 0.0
    %4695 = vmatpush1.msra.mxu0 0.0
    %4696 = vmatprep.subr.mxu0 0.0
    %4697 = vmatpush1.msra.mxu0 0.0
    %4698 = vmatprep.subr.mxu0 0.0
    %4699 = vmatpush1.msra.mxu0 0.0
    %4700 = vmatprep.subr.mxu0 0.0
    %4701 = vmatpush1.msra.mxu0 0.0
    %4702 = vmatprep.subr.mxu0 0.0
    %4703 = vmatpush1.msra.mxu0 0.0
    %4704 = vmatprep.subr.mxu0 0.0
    %4705 = vmatpush1.msra.mxu0 0.0
    %4706 = vmatprep.subr.mxu0 0.0
    %4707 = vmatpush1.msra.mxu0 0.0
    %4708 = vmatprep.subr.mxu0 0.0
    %4709 = vmatpush1.msra.mxu0 0.0
    %4710 = vmatprep.subr.mxu0 0.0
    %4711 = vmatpush1.msra.mxu0 0.0
    %4712 = vmatprep.subr.mxu0 0.0
    %4713 = vmatpush1.msra.mxu0 0.0
    %4714 = vmatprep.subr.mxu0 0.0
    %4715 = vmatpush1.msra.mxu0 0.0
    %4716 = vmatprep.subr.mxu0 0.0
    %4717 = vmatpush1.msra.mxu0 0.0
    %4718 = vmatprep.subr.mxu0 0.0
    %4719 = vmatpush1.msra.mxu0 0.0
    %4720 = vmatprep.subr.mxu0 0.0
    %4721 = vmatpush1.msra.mxu0 0.0
    %4722 = vmatprep.subr.mxu0 0.0
    %4723 = vmatpush1.msra.mxu0 0.0
    %4724 = vmatprep.subr.mxu0 0.0
    %4725 = vmatpush1.msra.mxu0 0.0
    %4726 = vmatprep.subr.mxu0 0.0
    %4727 = vmatpush1.msra.mxu0 0.0
    %4728 = vmatprep.subr.mxu0 0.0
    %4729 = vmatpush1.msra.mxu0 0.0
    %4730 = vmatprep.subr.mxu0 0.0
    %4731 = vmatpush1.msra.mxu0 0.0
    %4732 = vmatprep.mubr.f32.mxu0 0.0
    %4733 = vmatmul.mubr.f32.gmra.mrb[0].mxu0 %v4663
    %v4734 = vpop.f32.mrb[0].mxu0
    %v4735 = vadd.f32 0.0, %v4734
    %v4736 = vpop.f32.mrb[0].mxu0
    %4737 = vdwg.mxu0
    %v4738 = vadd.f32 %v4660, %v4735
    %v4739 = vld [vmem:[%s11 + $0x4c] sm:$0xf]
    %v4740 = vrot.slane %v3256, 6
    %v4741 = vsel %vm3262, %v4740, 0
    %v4744 = vsel %vm2801, %v4739, 0
    %4746 = vmatprep.subr.mxu0 0.0
    %4747 = vmatpush1.msra.mxu0 %v4744
    %4748 = vmatprep.subr.mxu0 0.0
    %4749 = vmatpush1.msra.mxu0 0.0
    %4750 = vmatprep.subr.mxu0 0.0
    %4751 = vmatpush1.msra.mxu0 0.0
    %4752 = vmatprep.subr.mxu0 0.0
    %4753 = vmatpush1.msra.mxu0 0.0
    %4754 = vmatprep.subr.mxu0 0.0
    %4755 = vmatpush1.msra.mxu0 0.0
    %4756 = vmatprep.subr.mxu0 0.0
    %4757 = vmatpush1.msra.mxu0 0.0
    %4758 = vmatprep.subr.mxu0 0.0
    %4759 = vmatpush1.msra.mxu0 0.0
    %4760 = vmatprep.subr.mxu0 0.0
    %4761 = vmatpush1.msra.mxu0 0.0
    %4762 = vmatprep.subr.mxu0 0.0
    %4763 = vmatpush1.msra.mxu0 0.0
    %4764 = vmatprep.subr.mxu0 0.0
    %4765 = vmatpush1.msra.mxu0 0.0
    %4766 = vmatprep.subr.mxu0 0.0
    %4767 = vmatpush1.msra.mxu0 0.0
    %4768 = vmatprep.subr.mxu0 0.0
    %4769 = vmatpush1.msra.mxu0 0.0
    %4770 = vmatprep.subr.mxu0 0.0
    %4771 = vmatpush1.msra.mxu0 0.0
    %4772 = vmatprep.subr.mxu0 0.0
    %4773 = vmatpush1.msra.mxu0 0.0
    %4774 = vmatprep.subr.mxu0 0.0
    %4775 = vmatpush1.msra.mxu0 0.0
    %4776 = vmatprep.subr.mxu0 0.0
    %4777 = vmatpush1.msra.mxu0 0.0
    %4778 = vmatprep.subr.mxu0 0.0
    %4779 = vmatpush1.msra.mxu0 0.0
    %4780 = vmatprep.subr.mxu0 0.0
    %4781 = vmatpush1.msra.mxu0 0.0
    %4782 = vmatprep.subr.mxu0 0.0
    %4783 = vmatpush1.msra.mxu0 0.0
    %4784 = vmatprep.subr.mxu0 0.0
    %4785 = vmatpush1.msra.mxu0 0.0
    %4786 = vmatprep.subr.mxu0 0.0
    %4787 = vmatpush1.msra.mxu0 0.0
    %4788 = vmatprep.subr.mxu0 0.0
    %4789 = vmatpush1.msra.mxu0 0.0
    %4790 = vmatprep.subr.mxu0 0.0
    %4791 = vmatpush1.msra.mxu0 0.0
    %4792 = vmatprep.subr.mxu0 0.0
    %4793 = vmatpush1.msra.mxu0 0.0
    %4794 = vmatprep.subr.mxu0 0.0
    %4795 = vmatpush1.msra.mxu0 0.0
    %4796 = vmatprep.subr.mxu0 0.0
    %4797 = vmatpush1.msra.mxu0 0.0
    %4798 = vmatprep.subr.mxu0 0.0
    %4799 = vmatpush1.msra.mxu0 0.0
    %4800 = vmatprep.subr.mxu0 0.0
    %4801 = vmatpush1.msra.mxu0 0.0
    %4802 = vmatprep.subr.mxu0 0.0
    %4803 = vmatpush1.msra.mxu0 0.0
    %4804 = vmatprep.subr.mxu0 0.0
    %4805 = vmatpush1.msra.mxu0 0.0
    %4806 = vmatprep.subr.mxu0 0.0
    %4807 = vmatpush1.msra.mxu0 0.0
    %4808 = vmatprep.subr.mxu0 0.0
    %4809 = vmatpush1.msra.mxu0 0.0
    %4810 = vmatprep.mubr.f32.mxu0 0.0
    %4811 = vmatmul.mubr.f32.gmra.mrb[0].mxu0 %v4741
    %v4812 = vpop.f32.mrb[0].mxu0
    %v4813 = vadd.f32 0.0, %v4812
    %v4814 = vpop.f32.mrb[0].mxu0
    %4815 = vdwg.mxu0
    %v4816 = vadd.f32 %v4738, %v4813
    %v4817 = vld [vmem:[%s11 + $0x50] sm:$0xf]
    %v4819 = vsel %vm3262, %v3257, 0
    %v4822 = vsel %vm2801, %v4817, 0
    %4824 = vmatprep.subr.mxu0 0.0
    %4825 = vmatpush1.msra.mxu0 %v4822
    %4826 = vmatprep.subr.mxu0 0.0
    %4827 = vmatpush1.msra.mxu0 0.0
    %4828 = vmatprep.subr.mxu0 0.0
    %4829 = vmatpush1.msra.mxu0 0.0
    %4830 = vmatprep.subr.mxu0 0.0
    %4831 = vmatpush1.msra.mxu0 0.0
    %4832 = vmatprep.subr.mxu0 0.0
    %4833 = vmatpush1.msra.mxu0 0.0
    %4834 = vmatprep.subr.mxu0 0.0
    %4835 = vmatpush1.msra.mxu0 0.0
    %4836 = vmatprep.subr.mxu0 0.0
    %4837 = vmatpush1.msra.mxu0 0.0
    %4838 = vmatprep.subr.mxu0 0.0
    %4839 = vmatpush1.msra.mxu0 0.0
    %4840 = vmatprep.subr.mxu0 0.0
    %4841 = vmatpush1.msra.mxu0 0.0
    %4842 = vmatprep.subr.mxu0 0.0
    %4843 = vmatpush1.msra.mxu0 0.0
    %4844 = vmatprep.subr.mxu0 0.0
    %4845 = vmatpush1.msra.mxu0 0.0
    %4846 = vmatprep.subr.mxu0 0.0
    %4847 = vmatpush1.msra.mxu0 0.0
    %4848 = vmatprep.subr.mxu0 0.0
    %4849 = vmatpush1.msra.mxu0 0.0
    %4850 = vmatprep.subr.mxu0 0.0
    %4851 = vmatpush1.msra.mxu0 0.0
    %4852 = vmatprep.subr.mxu0 0.0
    %4853 = vmatpush1.msra.mxu0 0.0
    %4854 = vmatprep.subr.mxu0 0.0
    %4855 = vmatpush1.msra.mxu0 0.0
    %4856 = vmatprep.subr.mxu0 0.0
    %4857 = vmatpush1.msra.mxu0 0.0
    %4858 = vmatprep.subr.mxu0 0.0
    %4859 = vmatpush1.msra.mxu0 0.0
    %4860 = vmatprep.subr.mxu0 0.0
    %4861 = vmatpush1.msra.mxu0 0.0
    %4862 = vmatprep.subr.mxu0 0.0
    %4863 = vmatpush1.msra.mxu0 0.0
    %4864 = vmatprep.subr.mxu0 0.0
    %4865 = vmatpush1.msra.mxu0 0.0
    %4866 = vmatprep.subr.mxu0 0.0
    %4867 = vmatpush1.msra.mxu0 0.0
    %4868 = vmatprep.subr.mxu0 0.0
    %4869 = vmatpush1.msra.mxu0 0.0
    %4870 = vmatprep.subr.mxu0 0.0
    %4871 = vmatpush1.msra.mxu0 0.0
    %4872 = vmatprep.subr.mxu0 0.0
    %4873 = vmatpush1.msra.mxu0 0.0
    %4874 = vmatprep.subr.mxu0 0.0
    %4875 = vmatpush1.msra.mxu0 0.0
    %4876 = vmatprep.subr.mxu0 0.0
    %4877 = vmatpush1.msra.mxu0 0.0
    %4878 = vmatprep.subr.mxu0 0.0
    %4879 = vmatpush1.msra.mxu0 0.0
    %4880 = vmatprep.subr.mxu0 0.0
    %4881 = vmatpush1.msra.mxu0 0.0
    %4882 = vmatprep.subr.mxu0 0.0
    %4883 = vmatpush1.msra.mxu0 0.0
    %4884 = vmatprep.subr.mxu0 0.0
    %4885 = vmatpush1.msra.mxu0 0.0
    %4886 = vmatprep.subr.mxu0 0.0
    %4887 = vmatpush1.msra.mxu0 0.0
    %4888 = vmatprep.mubr.f32.mxu0 0.0
    %4889 = vmatmul.mubr.f32.gmra.mrb[0].mxu0 %v4819
    %v4890 = vpop.f32.mrb[0].mxu0
    %v4891 = vadd.f32 0.0, %v4890
    %v4892 = vpop.f32.mrb[0].mxu0
    %4893 = vdwg.mxu0
    %v4894 = vadd.f32 %v4816, %v4891
    %v4895 = vld [vmem:[%s11 + $0x54] sm:$0xf]
    %v4896 = vrot.slane %v3257, 2
    %v4897 = vsel %vm3262, %v4896, 0
    %v4900 = vsel %vm2801, %v4895, 0
    %4902 = vmatprep.subr.mxu0 0.0
    %4903 = vmatpush1.msra.mxu0 %v4900
    %4904 = vmatprep.subr.mxu0 0.0
    %4905 = vmatpush1.msra.mxu0 0.0
    %4906 = vmatprep.subr.mxu0 0.0
    %4907 = vmatpush1.msra.mxu0 0.0
    %4908 = vmatprep.subr.mxu0 0.0
    %4909 = vmatpush1.msra.mxu0 0.0
    %4910 = vmatprep.subr.mxu0 0.0
    %4911 = vmatpush1.msra.mxu0 0.0
    %4912 = vmatprep.subr.mxu0 0.0
    %4913 = vmatpush1.msra.mxu0 0.0
    %4914 = vmatprep.subr.mxu0 0.0
    %4915 = vmatpush1.msra.mxu0 0.0
    %4916 = vmatprep.subr.mxu0 0.0
    %4917 = vmatpush1.msra.mxu0 0.0
    %4918 = vmatprep.subr.mxu0 0.0
    %4919 = vmatpush1.msra.mxu0 0.0
    %4920 = vmatprep.subr.mxu0 0.0
    %4921 = vmatpush1.msra.mxu0 0.0
    %4922 = vmatprep.subr.mxu0 0.0
    %4923 = vmatpush1.msra.mxu0 0.0
    %4924 = vmatprep.subr.mxu0 0.0
    %4925 = vmatpush1.msra.mxu0 0.0
    %4926 = vmatprep.subr.mxu0 0.0
    %4927 = vmatpush1.msra.mxu0 0.0
    %4928 = vmatprep.subr.mxu0 0.0
    %4929 = vmatpush1.msra.mxu0 0.0
    %4930 = vmatprep.subr.mxu0 0.0
    %4931 = vmatpush1.msra.mxu0 0.0
    %4932 = vmatprep.subr.mxu0 0.0
    %4933 = vmatpush1.msra.mxu0 0.0
    %4934 = vmatprep.subr.mxu0 0.0
    %4935 = vmatpush1.msra.mxu0 0.0
    %4936 = vmatprep.subr.mxu0 0.0
    %4937 = vmatpush1.msra.mxu0 0.0
    %4938 = vmatprep.subr.mxu0 0.0
    %4939 = vmatpush1.msra.mxu0 0.0
    %4940 = vmatprep.subr.mxu0 0.0
    %4941 = vmatpush1.msra.mxu0 0.0
    %4942 = vmatprep.subr.mxu0 0.0
    %4943 = vmatpush1.msra.mxu0 0.0
    %4944 = vmatprep.subr.mxu0 0.0
    %4945 = vmatpush1.msra.mxu0 0.0
    %4946 = vmatprep.subr.mxu0 0.0
    %4947 = vmatpush1.msra.mxu0 0.0
    %4948 = vmatprep.subr.mxu0 0.0
    %4949 = vmatpush1.msra.mxu0 0.0
    %4950 = vmatprep.subr.mxu0 0.0
    %4951 = vmatpush1.msra.mxu0 0.0
    %4952 = vmatprep.subr.mxu0 0.0
    %4953 = vmatpush1.msra.mxu0 0.0
    %4954 = vmatprep.subr.mxu0 0.0
    %4955 = vmatpush1.msra.mxu0 0.0
    %4956 = vmatprep.subr.mxu0 0.0
    %4957 = vmatpush1.msra.mxu0 0.0
    %4958 = vmatprep.subr.mxu0 0.0
    %4959 = vmatpush1.msra.mxu0 0.0
    %4960 = vmatprep.subr.mxu0 0.0
    %4961 = vmatpush1.msra.mxu0 0.0
    %4962 = vmatprep.subr.mxu0 0.0
    %4963 = vmatpush1.msra.mxu0 0.0
    %4964 = vmatprep.subr.mxu0 0.0
    %4965 = vmatpush1.msra.mxu0 0.0
    %4966 = vmatprep.mubr.f32.mxu0 0.0
    %4967 = vmatmul.mubr.f32.gmra.mrb[0].mxu0 %v4897
    %v4968 = vpop.f32.mrb[0].mxu0
    %v4969 = vadd.f32 0.0, %v4968
    %v4970 = vpop.f32.mrb[0].mxu0
    %4971 = vdwg.mxu0
    %v4972 = vadd.f32 %v4894, %v4969
    %v4973 = vld [vmem:[%s11 + $0x58] sm:$0xf]
    %v4974 = vrot.slane %v3257, 4
    %v4975 = vsel %vm3262, %v4974, 0
    %v4978 = vsel %vm2801, %v4973, 0
    %4980 = vmatprep.subr.mxu0 0.0
    %4981 = vmatpush1.msra.mxu0 %v4978
    %4982 = vmatprep.subr.mxu0 0.0
    %4983 = vmatpush1.msra.mxu0 0.0
    %4984 = vmatprep.subr.mxu0 0.0
    %4985 = vmatpush1.msra.mxu0 0.0
    %4986 = vmatprep.subr.mxu0 0.0
    %4987 = vmatpush1.msra.mxu0 0.0
    %4988 = vmatprep.subr.mxu0 0.0
    %4989 = vmatpush1.msra.mxu0 0.0
    %4990 = vmatprep.subr.mxu0 0.0
    %4991 = vmatpush1.msra.mxu0 0.0
    %4992 = vmatprep.subr.mxu0 0.0
    %4993 = vmatpush1.msra.mxu0 0.0
    %4994 = vmatprep.subr.mxu0 0.0
    %4995 = vmatpush1.msra.mxu0 0.0
    %4996 = vmatprep.subr.mxu0 0.0
    %4997 = vmatpush1.msra.mxu0 0.0
    %4998 = vmatprep.subr.mxu0 0.0
    %4999 = vmatpush1.msra.mxu0 0.0
    %5000 = vmatprep.subr.mxu0 0.0
    %5001 = vmatpush1.msra.mxu0 0.0
    %5002 = vmatprep.subr.mxu0 0.0
    %5003 = vmatpush1.msra.mxu0 0.0
    %5004 = vmatprep.subr.mxu0 0.0
    %5005 = vmatpush1.msra.mxu0 0.0
    %5006 = vmatprep.subr.mxu0 0.0
    %5007 = vmatpush1.msra.mxu0 0.0
    %5008 = vmatprep.subr.mxu0 0.0
    %5009 = vmatpush1.msra.mxu0 0.0
    %5010 = vmatprep.subr.mxu0 0.0
    %5011 = vmatpush1.msra.mxu0 0.0
    %5012 = vmatprep.subr.mxu0 0.0
    %5013 = vmatpush1.msra.mxu0 0.0
    %5014 = vmatprep.subr.mxu0 0.0
    %5015 = vmatpush1.msra.mxu0 0.0
    %5016 = vmatprep.subr.mxu0 0.0
    %5017 = vmatpush1.msra.mxu0 0.0
    %5018 = vmatprep.subr.mxu0 0.0
    %5019 = vmatpush1.msra.mxu0 0.0
    %5020 = vmatprep.subr.mxu0 0.0
    %5021 = vmatpush1.msra.mxu0 0.0
    %5022 = vmatprep.subr.mxu0 0.0
    %5023 = vmatpush1.msra.mxu0 0.0
    %5024 = vmatprep.subr.mxu0 0.0
    %5025 = vmatpush1.msra.mxu0 0.0
    %5026 = vmatprep.subr.mxu0 0.0
    %5027 = vmatpush1.msra.mxu0 0.0
    %5028 = vmatprep.subr.mxu0 0.0
    %5029 = vmatpush1.msra.mxu0 0.0
    %5030 = vmatprep.subr.mxu0 0.0
    %5031 = vmatpush1.msra.mxu0 0.0
    %5032 = vmatprep.subr.mxu0 0.0
    %5033 = vmatpush1.msra.mxu0 0.0
    %5034 = vmatprep.subr.mxu0 0.0
    %5035 = vmatpush1.msra.mxu0 0.0
    %5036 = vmatprep.subr.mxu0 0.0
    %5037 = vmatpush1.msra.mxu0 0.0
    %5038 = vmatprep.subr.mxu0 0.0
    %5039 = vmatpush1.msra.mxu0 0.0
    %5040 = vmatprep.subr.mxu0 0.0
    %5041 = vmatpush1.msra.mxu0 0.0
    %5042 = vmatprep.subr.mxu0 0.0
    %5043 = vmatpush1.msra.mxu0 0.0
    %5044 = vmatprep.mubr.f32.mxu0 0.0
    %5045 = vmatmul.mubr.f32.gmra.mrb[0].mxu0 %v4975
    %v5046 = vpop.f32.mrb[0].mxu0
    %v5047 = vadd.f32 0.0, %v5046
    %v5048 = vpop.f32.mrb[0].mxu0
    %5049 = vdwg.mxu0
    %v5050 = vadd.f32 %v4972, %v5047
    %v5051 = vld [vmem:[%s11 + $0x5c] sm:$0xf]
    %v5052 = vrot.slane %v3257, 6
    %v5053 = vsel %vm3262, %v5052, 0
    %v5056 = vsel %vm2801, %v5051, 0
    %5058 = vmatprep.subr.mxu0 0.0
    %5059 = vmatpush1.msra.mxu0 %v5056
    %5060 = vmatprep.subr.mxu0 0.0
    %5061 = vmatpush1.msra.mxu0 0.0
    %5062 = vmatprep.subr.mxu0 0.0
    %5063 = vmatpush1.msra.mxu0 0.0
    %5064 = vmatprep.subr.mxu0 0.0
    %5065 = vmatpush1.msra.mxu0 0.0
    %5066 = vmatprep.subr.mxu0 0.0
    %5067 = vmatpush1.msra.mxu0 0.0
    %5068 = vmatprep.subr.mxu0 0.0
    %5069 = vmatpush1.msra.mxu0 0.0
    %5070 = vmatprep.subr.mxu0 0.0
    %5071 = vmatpush1.msra.mxu0 0.0
    %5072 = vmatprep.subr.mxu0 0.0
    %5073 = vmatpush1.msra.mxu0 0.0
    %5074 = vmatprep.subr.mxu0 0.0
    %5075 = vmatpush1.msra.mxu0 0.0
    %5076 = vmatprep.subr.mxu0 0.0
    %5077 = vmatpush1.msra.mxu0 0.0
    %5078 = vmatprep.subr.mxu0 0.0
    %5079 = vmatpush1.msra.mxu0 0.0
    %5080 = vmatprep.subr.mxu0 0.0
    %5081 = vmatpush1.msra.mxu0 0.0
    %5082 = vmatprep.subr.mxu0 0.0
    %5083 = vmatpush1.msra.mxu0 0.0
    %5084 = vmatprep.subr.mxu0 0.0
    %5085 = vmatpush1.msra.mxu0 0.0
    %5086 = vmatprep.subr.mxu0 0.0
    %5087 = vmatpush1.msra.mxu0 0.0
    %5088 = vmatprep.subr.mxu0 0.0
    %5089 = vmatpush1.msra.mxu0 0.0
    %5090 = vmatprep.subr.mxu0 0.0
    %5091 = vmatpush1.msra.mxu0 0.0
    %5092 = vmatprep.subr.mxu0 0.0
    %5093 = vmatpush1.msra.mxu0 0.0
    %5094 = vmatprep.subr.mxu0 0.0
    %5095 = vmatpush1.msra.mxu0 0.0
    %5096 = vmatprep.subr.mxu0 0.0
    %5097 = vmatpush1.msra.mxu0 0.0
    %5098 = vmatprep.subr.mxu0 0.0
    %5099 = vmatpush1.msra.mxu0 0.0
    %5100 = vmatprep.subr.mxu0 0.0
    %5101 = vmatpush1.msra.mxu0 0.0
    %5102 = vmatprep.subr.mxu0 0.0
    %5103 = vmatpush1.msra.mxu0 0.0
    %5104 = vmatprep.subr.mxu0 0.0
    %5105 = vmatpush1.msra.mxu0 0.0
    %5106 = vmatprep.subr.mxu0 0.0
    %5107 = vmatpush1.msra.mxu0 0.0
    %5108 = vmatprep.subr.mxu0 0.0
    %5109 = vmatpush1.msra.mxu0 0.0
    %5110 = vmatprep.subr.mxu0 0.0
    %5111 = vmatpush1.msra.mxu0 0.0
    %5112 = vmatprep.subr.mxu0 0.0
    %5113 = vmatpush1.msra.mxu0 0.0
    %5114 = vmatprep.subr.mxu0 0.0
    %5115 = vmatpush1.msra.mxu0 0.0
    %5116 = vmatprep.subr.mxu0 0.0
    %5117 = vmatpush1.msra.mxu0 0.0
    %5118 = vmatprep.subr.mxu0 0.0
    %5119 = vmatpush1.msra.mxu0 0.0
    %5120 = vmatprep.subr.mxu0 0.0
    %5121 = vmatpush1.msra.mxu0 0.0
    %5122 = vmatprep.mubr.f32.mxu0 0.0
    %5123 = vmatmul.mubr.f32.gmra.mrb[0].mxu0 %v5053
    %v5124 = vpop.f32.mrb[0].mxu0
    %v5125 = vadd.f32 0.0, %v5124
    %v5126 = vpop.f32.mrb[0].mxu0
    %5127 = vdwg.mxu0
    %v5128 = vadd.f32 %v5050, %v5125
    %v5129 = vld [vmem:[%s12] sm:$0x1]
    %v5131 = vlaneseq
    %v5132 = vshrl.u32 %v5131, 7
    %v5133 = vsub.s32 0, %v5132
    %v5134 = vrot.slane %v5129, %v5133
    %v5136 = vadd.f32 %v5128, %v5134
    %v5137 = vmax.f32 %v5136, 0.0
    %v5138 = vld [vmem:[%s13] sm:$0xff]
    %v5139 = vld [vmem:[%s13 + $0x8] sm:$0xff]
    %v5140 = vld [vmem:[%s13 + $0x10] sm:$0xff]
    %v5141 = vld [vmem:[%s13 + $0x18] sm:$0xff]
    %v5142 = vld [vmem:[%s14] sm:$0xff]
    %v5143 = vld [vmem:[%s14 + $0x8] sm:$0xff]
    %vm5144 = vcmask 130048
    %v5146 = vsel %vm5144, %v5137, 0
    %5148 = vmatprep.subr.mxu0 0.0
    %5149 = vmatpush1.msra.mxu0 %v5142
    %5150 = vmatprep.subr.mxu0 0.0
    %5151 = vmatpush1.msra.mxu0 %v5143
    %5152 = vmatprep.subr.mxu0 0.0
    %5153 = vmatpush1.msra.mxu0 0.0
    %5154 = vmatprep.subr.mxu0 0.0
    %5155 = vmatpush1.msra.mxu0 0.0
    %5156 = vmatprep.subr.mxu0 0.0
    %5157 = vmatpush1.msra.mxu0 0.0
    %5158 = vmatprep.subr.mxu0 0.0
    %5159 = vmatpush1.msra.mxu0 0.0
    %5160 = vmatprep.subr.mxu0 0.0
    %5161 = vmatpush1.msra.mxu0 0.0
    %5162 = vmatprep.subr.mxu0 0.0
    %5163 = vmatpush1.msra.mxu0 0.0
    %5164 = vmatprep.subr.mxu0 0.0
    %5165 = vmatpush1.msra.mxu0 0.0
    %5166 = vmatprep.subr.mxu0 0.0
    %5167 = vmatpush1.msra.mxu0 0.0
    %5168 = vmatprep.subr.mxu0 0.0
    %5169 = vmatpush1.msra.mxu0 0.0
    %5170 = vmatprep.subr.mxu0 0.0
    %5171 = vmatpush1.msra.mxu0 0.0
    %5172 = vmatprep.subr.mxu0 0.0
    %5173 = vmatpush1.msra.mxu0 0.0
    %5174 = vmatprep.subr.mxu0 0.0
    %5175 = vmatpush1.msra.mxu0 0.0
    %5176 = vmatprep.subr.mxu0 0.0
    %5177 = vmatpush1.msra.mxu0 0.0
    %5178 = vmatprep.subr.mxu0 0.0
    %5179 = vmatpush1.msra.mxu0 0.0
    %5180 = vmatprep.subr.mxu0 0.0
    %5181 = vmatpush1.msra.mxu0 0.0
    %5182 = vmatprep.subr.mxu0 0.0
    %5183 = vmatpush1.msra.mxu0 0.0
    %5184 = vmatprep.subr.mxu0 0.0
    %5185 = vmatpush1.msra.mxu0 0.0
    %5186 = vmatprep.subr.mxu0 0.0
    %5187 = vmatpush1.msra.mxu0 0.0
    %5188 = vmatprep.subr.mxu0 0.0
    %5189 = vmatpush1.msra.mxu0 0.0
    %5190 = vmatprep.subr.mxu0 0.0
    %5191 = vmatpush1.msra.mxu0 0.0
    %5192 = vmatprep.subr.mxu0 0.0
    %5193 = vmatpush1.msra.mxu0 0.0
    %5194 = vmatprep.subr.mxu0 0.0
    %5195 = vmatpush1.msra.mxu0 0.0
    %5196 = vmatprep.subr.mxu0 0.0
    %5197 = vmatpush1.msra.mxu0 0.0
    %5198 = vmatprep.subr.mxu0 0.0
    %5199 = vmatpush1.msra.mxu0 0.0
    %5200 = vmatprep.subr.mxu0 0.0
    %5201 = vmatpush1.msra.mxu0 0.0
    %5202 = vmatprep.subr.mxu0 0.0
    %5203 = vmatpush1.msra.mxu0 0.0
    %5204 = vmatprep.subr.mxu0 0.0
    %5205 = vmatpush1.msra.mxu0 0.0
    %5206 = vmatprep.subr.mxu0 0.0
    %5207 = vmatpush1.msra.mxu0 0.0
    %5208 = vmatprep.subr.mxu0 0.0
    %5209 = vmatpush1.msra.mxu0 0.0
    %5210 = vmatprep.subr.mxu0 0.0
    %5211 = vmatpush1.msra.mxu0 0.0
    %5212 = vmatprep.mubr.f32.mxu0 0.0
    %5213 = vmatmul.mubr.f32.gmra.mrb[0].mxu0 %v5146
    %v5214 = vpop.f32.mrb[0].mxu0
    %v5215 = vadd.f32 0.0, %v5214
    %v5216 = vpop.f32.mrb[0].mxu0
    %5217 = vdwg.mxu0
    %vm5218 = vcmask 261120
    %v5220 = vsel %vm5218, %v3116, 0
    %5222 = vmatprep.subr.mxu0 0.0
    %5223 = vmatpush1.msra.mxu0 %v5138
    %5224 = vmatprep.subr.mxu0 0.0
    %5225 = vmatpush1.msra.mxu0 %v5139
    %5226 = vmatprep.subr.mxu0 0.0
    %5227 = vmatpush1.msra.mxu0 %v5140
    %5228 = vmatprep.subr.mxu0 0.0
    %5229 = vmatpush1.msra.mxu0 %v5141
    %5230 = vmatprep.subr.mxu0 0.0
    %5231 = vmatpush1.msra.mxu0 0.0
    %5232 = vmatprep.subr.mxu0 0.0
    %5233 = vmatpush1.msra.mxu0 0.0
    %5234 = vmatprep.subr.mxu0 0.0
    %5235 = vmatpush1.msra.mxu0 0.0
    %5236 = vmatprep.subr.mxu0 0.0
    %5237 = vmatpush1.msra.mxu0 0.0
    %5238 = vmatprep.subr.mxu0 0.0
    %5239 = vmatpush1.msra.mxu0 0.0
    %5240 = vmatprep.subr.mxu0 0.0
    %5241 = vmatpush1.msra.mxu0 0.0
    %5242 = vmatprep.subr.mxu0 0.0
    %5243 = vmatpush1.msra.mxu0 0.0
    %5244 = vmatprep.subr.mxu0 0.0
    %5245 = vmatpush1.msra.mxu0 0.0
    %5246 = vmatprep.subr.mxu0 0.0
    %5247 = vmatpush1.msra.mxu0 0.0
    %5248 = vmatprep.subr.mxu0 0.0
    %5249 = vmatpush1.msra.mxu0 0.0
    %5250 = vmatprep.subr.mxu0 0.0
    %5251 = vmatpush1.msra.mxu0 0.0
    %5252 = vmatprep.subr.mxu0 0.0
    %5253 = vmatpush1.msra.mxu0 0.0
    %5254 = vmatprep.subr.mxu0 0.0
    %5255 = vmatpush1.msra.mxu0 0.0
    %5256 = vmatprep.subr.mxu0 0.0
    %5257 = vmatpush1.msra.mxu0 0.0
    %5258 = vmatprep.subr.mxu0 0.0
    %5259 = vmatpush1.msra.mxu0 0.0
    %5260 = vmatprep.subr.mxu0 0.0
    %5261 = vmatpush1.msra.mxu0 0.0
    %5262 = vmatprep.subr.mxu0 0.0
    %5263 = vmatpush1.msra.mxu0 0.0
    %5264 = vmatprep.subr.mxu0 0.0
    %5265 = vmatpush1.msra.mxu0 0.0
    %5266 = vmatprep.subr.mxu0 0.0
    %5267 = vmatpush1.msra.mxu0 0.0
    %5268 = vmatprep.subr.mxu0 0.0
    %5269 = vmatpush1.msra.mxu0 0.0
    %5270 = vmatprep.subr.mxu0 0.0
    %5271 = vmatpush1.msra.mxu0 0.0
    %5272 = vmatprep.subr.mxu0 0.0
    %5273 = vmatpush1.msra.mxu0 0.0
    %5274 = vmatprep.subr.mxu0 0.0
    %5275 = vmatpush1.msra.mxu0 0.0
    %5276 = vmatprep.subr.mxu0 0.0
    %5277 = vmatpush1.msra.mxu0 0.0
    %5278 = vmatprep.subr.mxu0 0.0
    %5279 = vmatpush1.msra.mxu0 0.0
    %5280 = vmatprep.subr.mxu0 0.0
    %5281 = vmatpush1.msra.mxu0 0.0
    %5282 = vmatprep.subr.mxu0 0.0
    %5283 = vmatpush1.msra.mxu0 0.0
    %5284 = vmatprep.subr.mxu0 0.0
    %5285 = vmatpush1.msra.mxu0 0.0
    %5286 = vmatprep.mubr.f32.mxu0 0.0
    %5287 = vmatmul.mubr.f32.gmra.mrb[0].mxu0 %v5220
    %v5288 = vpop.f32.mrb[0].mxu0
    %v5289 = vadd.f32 %v5215, %v5288
    %v5290 = vpop.f32.mrb[0].mxu0
    %5291 = vdwg.mxu0
    %v5292 = vld [vmem:[%s15] sm:$0x1]
    %v5294 = vlaneseq
    %v5295 = vshrl.u32 %v5294, 7
    %v5296 = vsub.s32 0, %v5295
    %v5297 = vrot.slane %v5292, %v5296
    %v5299 = vadd.f32 %v5289, %v5297
    %v5300 = vmax.f32 %v5299, 0.0
    %v5301 = vld [vmem:[%s16] sm:$0xff]
    %v5302 = vld [vmem:[%s16 + $0x8] sm:$0xff]
    %v5303 = vld [vmem:[%s16 + $0x10] sm:$0xff]
    %v5304 = vld [vmem:[%s16 + $0x18] sm:$0xff]
    %v5305 = vld [vmem:[%s17] sm:$0x1]
    %v5307 = vlaneseq
    %v5308 = vshrl.u32 %v5307, 7
    %v5309 = vsub.s32 0, %v5308
    %v5310 = vrot.slane %v5305, %v5309
    %v5313 = vsel %vm5218, %v5300, 0
    %5315 = vmatprep.subr.mxu0 0.0
    %5316 = vmatpush1.msra.mxu0 %v5301
    %5317 = vmatprep.subr.mxu0 0.0
    %5318 = vmatpush1.msra.mxu0 %v5302
    %5319 = vmatprep.subr.mxu0 0.0
    %5320 = vmatpush1.msra.mxu0 %v5303
    %5321 = vmatprep.subr.mxu0 0.0
    %5322 = vmatpush1.msra.mxu0 %v5304
    %5323 = vmatprep.subr.mxu0 0.0
    %5324 = vmatpush1.msra.mxu0 0.0
    %5325 = vmatprep.subr.mxu0 0.0
    %5326 = vmatpush1.msra.mxu0 0.0
    %5327 = vmatprep.subr.mxu0 0.0
    %5328 = vmatpush1.msra.mxu0 0.0
    %5329 = vmatprep.subr.mxu0 0.0
    %5330 = vmatpush1.msra.mxu0 0.0
    %5331 = vmatprep.subr.mxu0 0.0
    %5332 = vmatpush1.msra.mxu0 0.0
    %5333 = vmatprep.subr.mxu0 0.0
    %5334 = vmatpush1.msra.mxu0 0.0
    %5335 = vmatprep.subr.mxu0 0.0
    %5336 = vmatpush1.msra.mxu0 0.0
    %5337 = vmatprep.subr.mxu0 0.0
    %5338 = vmatpush1.msra.mxu0 0.0
    %5339 = vmatprep.subr.mxu0 0.0
    %5340 = vmatpush1.msra.mxu0 0.0
    %5341 = vmatprep.subr.mxu0 0.0
    %5342 = vmatpush1.msra.mxu0 0.0
    %5343 = vmatprep.subr.mxu0 0.0
    %5344 = vmatpush1.msra.mxu0 0.0
    %5345 = vmatprep.subr.mxu0 0.0
    %5346 = vmatpush1.msra.mxu0 0.0
    %5347 = vmatprep.subr.mxu0 0.0
    %5348 = vmatpush1.msra.mxu0 0.0
    %5349 = vmatprep.subr.mxu0 0.0
    %5350 = vmatpush1.msra.mxu0 0.0
    %5351 = vmatprep.subr.mxu0 0.0
    %5352 = vmatpush1.msra.mxu0 0.0
    %5353 = vmatprep.subr.mxu0 0.0
    %5354 = vmatpush1.msra.mxu0 0.0
    %5355 = vmatprep.subr.mxu0 0.0
    %5356 = vmatpush1.msra.mxu0 0.0
    %5357 = vmatprep.subr.mxu0 0.0
    %5358 = vmatpush1.msra.mxu0 0.0
    %5359 = vmatprep.subr.mxu0 0.0
    %5360 = vmatpush1.msra.mxu0 0.0
    %5361 = vmatprep.subr.mxu0 0.0
    %5362 = vmatpush1.msra.mxu0 0.0
    %5363 = vmatprep.subr.mxu0 0.0
    %5364 = vmatpush1.msra.mxu0 0.0
    %5365 = vmatprep.subr.mxu0 0.0
    %5366 = vmatpush1.msra.mxu0 0.0
    %5367 = vmatprep.subr.mxu0 0.0
    %5368 = vmatpush1.msra.mxu0 0.0
    %5369 = vmatprep.subr.mxu0 0.0
    %5370 = vmatpush1.msra.mxu0 0.0
    %5371 = vmatprep.subr.mxu0 0.0
    %5372 = vmatpush1.msra.mxu0 0.0
    %5373 = vmatprep.subr.mxu0 0.0
    %5374 = vmatpush1.msra.mxu0 0.0
    %5375 = vmatprep.subr.mxu0 0.0
    %5376 = vmatpush1.msra.mxu0 0.0
    %5377 = vmatprep.subr.mxu0 0.0
    %5378 = vmatpush1.msra.mxu0 0.0
    %5379 = vmatprep.mubr.f32.mxu0 0.0
    %5380 = vmatmul.mubr.f32.gmra.mrb[0].mxu0 %v5313
    %v5381 = vpop.f32.mrb[0].mxu0
    %v5382 = vadd.f32 %v5310, %v5381
    %v5383 = vpop.f32.mrb[0].mxu0
    %5384 = vdwg.mxu0
    %vm5385 = vcmask 9216
    %5386 = vst.msk [vmem:[#allocation2] sm:$0x3] %vm5385, %v5382
    // Predicated region
    $region74: #{c3d_forward.1} parent=1 // pred_check
      _
    $region75: #{c3d_forward.1} parent=1 // pred_check_branch
      %5388 = sbr.rel (0) target = $region77
    $region76: #{c3d_forward.1} parent=1 // pred_region
      %s5390 = ssub.s32 32, 32
      %5391 = vsyncadd [#allocation3], %s5390
      %s5393 = sshll.u32 [#allocation2], 4
      %s5394 = int_to_ptr.vmem [resolvable:$true] %s5393
      %5396 = dma.vmem_to_hbm [thread:$0]  %s5394, 32, %s18, [#allocation3]
    $region77: #{c3d_forward.1} parent=1 // pred_fallthru
      _
    // Predicated region
    $region78: #{c3d_forward.1} parent=1 // pred_check
      _
    $region79: #{c3d_forward.1} parent=1 // pred_check_branch
      %5398 = sbr.rel (0) target = $region81
    $region80: #{c3d_forward.1} parent=1 // pred_region
      %5399 = dma.done [#allocation3], 32
    $region81: #{c3d_forward.1} parent=1 // pred_fallthru
      _
    %5400 = vsyncpa [#allocation3], 1

</llo_original>
